<compile_context>
chip_gen: v7x
topology: tpu7x:2x2x1
jax: 0.10.0
libtpu: 0.0.40
codegen_flags: <defaults>
</compile_context>

<pallas_src>
import functools

import numpy as np
import jax
import jax.numpy as jnp
from jax.experimental import pallas as pl
from jax.experimental.pallas import tpu as pltpu


# --------------------------------------------------------------------------
# Generation-aware VMEM budgets
# --------------------------------------------------------------------------

def _tpu_vmem_capacity():
    try:
        info = pltpu.get_tpu_info()
        cap = getattr(info, 'vmem_capacity_bytes', None)
        if cap:
            return int(cap)
    except Exception:
        pass
    return 64 * 1024 * 1024          # conservative default (v7x per-TC VMEM)


_VMEM_CAP = _tpu_vmem_capacity()
_VMEM_LIMIT = min(int(_VMEM_CAP * 0.85), 112 * 1024 * 1024)
_TILE_BUDGET = min(int(_VMEM_CAP * 0.55), 72 * 1024 * 1024)


# --------------------------------------------------------------------------
# Small helpers
# --------------------------------------------------------------------------

def _round_up(v, m):
    return (v + m - 1) // m * m


def _cp(dims):
    return pltpu.CompilerParams(dimension_semantics=dims,
                                vmem_limit_bytes=_VMEM_LIMIT)


def _row_tile(h, in_row_bytes, out_row_bytes, budget):
    # Largest row block TH dividing h such that
    #   2 * (TH+2)*in_row (input double buffer, halo)
    # + TH * out_row      (output double buffer + f32 acc value + residual)
    # fits the per-step VMEM budget.
    for th in range(h, 0, -1):
        if h % th:
            continue
        if 2 * (th + 2) * in_row_bytes + th * out_row_bytes <= budget:
            return th
    return 1


def _overlap_rows(xp, th):
    # xp: (B, H+2, Wp, C) spatially padded image.
    # Returns (B*nblk, (TH+2)*Wp + 2, C): overlapping row blocks with a 2-row
    # halo, flattened row-major so the kernels only need sublane-offset row
    # slices (no in-kernel reshapes).  Two extra zero rows keep the (ky=2,kx>0)
    # shifted slices in bounds (wide-output trick).
    b, hp, wp, c = xp.shape
    h = hp - 2
    nblk = h // th
    if nblk == 1:
        flat = xp.reshape(b, hp * wp, c)
    else:
        parts = [xp[:, i * th:i * th + th + 2] for i in range(nblk)]
        flat = jnp.stack(parts, axis=1).reshape(b * nblk, (th + 2) * wp, c)
    flat = jnp.pad(flat, ((0, 0), (0, 2), (0, 0)))
    return flat, nblk


# --------------------------------------------------------------------------
# Tiled bf16 matmul (all dense 1x1 convs) with fused bias/residual/activation
# --------------------------------------------------------------------------

def _mm_kernel_single(*refs, act, has_res):
    # Single K step: no scratch, no RMW passes - dot -> epilogue -> one store.
    if has_res:
        x_ref, w_ref, b_ref, r_ref, o_ref = refs
    else:
        x_ref, w_ref, b_ref, o_ref = refs
        r_ref = None
    y = jnp.dot(x_ref[...], w_ref[...],
                preferred_element_type=jnp.float32) + b_ref[...]
    if has_res:
        y = y + r_ref[...].astype(jnp.float32)
    if act == 'relu':
        y = jnp.maximum(y, 0.0)
    elif act == 'lrelu':
        y = jnp.where(y >= 0.0, y, 0.2 * y)
    o_ref[...] = y.astype(o_ref.dtype)


def _mm_kernel_multi(*refs, act, has_res):
    # Multi K step: f32 VMEM accumulator with pl.when init/finalize.
    if has_res:
        x_ref, w_ref, b_ref, r_ref, o_ref, acc_ref = refs
    else:
        x_ref, w_ref, b_ref, o_ref, acc_ref = refs
        r_ref = None

    @pl.when(pl.program_id(2) == 0)
    def _init():
        acc_ref[...] = jnp.zeros_like(acc_ref)

    acc_ref[...] += jnp.dot(x_ref[...], w_ref[...],
                            preferred_element_type=jnp.float32)

    @pl.when(pl.program_id(2) == pl.num_programs(2) - 1)
    def _fin():
        y = acc_ref[...] + b_ref[...]
        if has_res:
            y = y + r_ref[...].astype(jnp.float32)
        if act == 'relu':
            y = jnp.maximum(y, 0.0)
        elif act == 'lrelu':
            y = jnp.where(y >= 0.0, y, 0.2 * y)
        o_ref[...] = y.astype(o_ref.dtype)


def _matmul(x, w, b, residual, act, out_dtype):
    # x: (M, K), w: (K, N) -> (M, N).  bf16 operands, f32 accumulation.
    M, K = x.shape
    N = w.shape[1]
    Kp = _round_up(K, 128)
    Np = _round_up(N, 128)                       # lane-dense output tiles
    tn = 256 if (Np >= 256 and Np % 256 == 0) else 128
    tm = min(256, _round_up(M, 16))              # >=2 parallel steps when M>256
    Mp = _round_up(M, tm)
    if Kp <= 512:
        tk = Kp
    elif Kp % 512 == 0:
        tk = 512
    elif Kp % 256 == 0:
        tk = 256
    else:
        tk = 128
    nk = Kp // tk

    xb = jnp.pad(x.astype(jnp.bfloat16), ((0, Mp - M), (0, Kp - K)))
    wb = jnp.pad(w.astype(jnp.bfloat16), ((0, Kp - K), (0, Np - N)))
    bb = b if b is not None else jnp.zeros((N,), jnp.float32)
    bb = jnp.pad(bb.astype(jnp.float32), (0, Np - N)).reshape(1, Np)

    has_res = residual is not None
    inputs = [xb, wb, bb]
    if has_res:
        rb = jnp.pad(residual, ((0, Mp - M), (0, Np - N)))

    if nk == 1:
        in_specs = [pl.BlockSpec((tm, tk), lambda i, j: (i, 0)),
                    pl.BlockSpec((tk, tn), lambda i, j: (0, j)),
                    pl.BlockSpec((1, tn), lambda i, j: (0, j))]
        if has_res:
            inputs.append(rb)
            in_specs.append(pl.BlockSpec((tm, tn), lambda i, j: (i, j)))
        out = pl.pallas_call(
            functools.partial(_mm_kernel_single, act=act, has_res=has_res),
            grid=(Mp // tm, Np // tn),
            in_specs=in_specs,
            out_specs=pl.BlockSpec((tm, tn), lambda i, j: (i, j)),
            out_shape=jax.ShapeDtypeStruct((Mp, Np), out_dtype),
            compiler_params=_cp(("parallel", "parallel")),
        )(*inputs)
    else:
        in_specs = [pl.BlockSpec((tm, tk), lambda i, j, k: (i, k)),
                    pl.BlockSpec((tk, tn), lambda i, j, k: (k, j)),
                    pl.BlockSpec((1, tn), lambda i, j, k: (0, j))]
        if has_res:
            inputs.append(rb)
            in_specs.append(pl.BlockSpec((tm, tn), lambda i, j, k: (i, j)))
        out = pl.pallas_call(
            functools.partial(_mm_kernel_multi, act=act, has_res=has_res),
            grid=(Mp // tm, Np // tn, nk),
            in_specs=in_specs,
            out_specs=pl.BlockSpec((tm, tn), lambda i, j, k: (i, j)),
            out_shape=jax.ShapeDtypeStruct((Mp, Np), out_dtype),
            scratch_shapes=[pltpu.VMEM((tm, tn), jnp.float32)],
            compiler_params=_cp(("parallel", "parallel", "arbitrary")),
        )(*inputs)
    return out[:M, :N]


@functools.partial(jax.jit, static_argnames=('act', 'out_dtype'))
def _conv1x1_call(x, w, b, residual, act, out_dtype):
    B, H, W, Cin = x.shape
    Cout = w.shape[0]
    wm = w.reshape(Cout, Cin).T
    x2 = x.reshape(B * H * W, Cin)
    r2 = residual.reshape(B * H * W, Cout) if residual is not None else None
    y = _matmul(x2, wm, b, r2, act, out_dtype)
    return y.reshape(B, H, W, Cout)


def conv1x1(x, p, residual=None, act=None, out_dtype=jnp.bfloat16):
    return _conv1x1_call(x, p['w'], p.get('b'), residual,
                         act=act, out_dtype=out_dtype)


# --------------------------------------------------------------------------
# Dense 3x3 conv: shifted-matmul Pallas kernel (no im2col, no VMEM scratch)
# --------------------------------------------------------------------------

def _conv3x3_kernel(*refs, wp, m0, act, has_res):
    if has_res:
        x_ref, w_ref, b_ref, r_ref, o_ref = refs
    else:
        x_ref, w_ref, b_ref, o_ref = refs
        r_ref = None
    acc = None
    for ky in range(3):
        for kx in range(3):
            off = ky * wp + kx
            patch = x_ref[0, off:off + m0, :]                # (m0, Cin) bf16
            d = jnp.dot(patch, w_ref[ky * 3 + kx],
                        preferred_element_type=jnp.float32)
            acc = d if acc is None else acc + d              # value accumulation
    y = acc + b_ref[...]
    if has_res:
        y = y + r_ref[0].astype(jnp.float32)
    if act == 'relu':
        y = jnp.maximum(y, 0.0)
    elif act == 'lrelu':
        y = jnp.where(y >= 0.0, y, 0.2 * y)
    o_ref[0] = y.astype(o_ref.dtype)


@functools.partial(jax.jit, static_argnames=('act', 'out_dtype'))
def _conv3x3_call(x, w, b, residual, act, out_dtype):
    # dense 3x3, stride 1, pad 1.  Wide-output trick: each output row keeps its
    # two padded junk columns (sliced off afterwards) so every tap is a single
    # contiguous row slice of the flattened halo tile.
    B, H, W, Cin = x.shape
    Cout = w.shape[0]
    Wp = W + 2
    Coutp = _round_up(Cout, 128)                             # lane-dense stores
    tn = 256 if (Coutp >= 256 and Coutp % 256 == 0) else 128

    wt = jnp.transpose(w, (2, 3, 1, 0)).reshape(9, Cin, Cout)
    wt = jnp.pad(wt, ((0, 0), (0, 0), (0, Coutp - Cout))).astype(jnp.bfloat16)
    bb = b if b is not None else jnp.zeros((Cout,), jnp.float32)
    bb = jnp.pad(bb.astype(jnp.float32), (0, Coutp - Cout)).reshape(1, Coutp)

    has_res = residual is not None
    out_bytes = jnp.dtype(out_dtype).itemsize
    res_bytes = residual.dtype.itemsize if has_res else 0
    in_row = Wp * Cin * 2                                    # bf16 input bytes
    out_row = Wp * tn * (2 * out_bytes + 4 + 2 * res_bytes)  # out dbuf+acc+res
    TH = _row_tile(H, in_row, out_row, _TILE_BUDGET)

    xp = jnp.pad(x.astype(jnp.bfloat16), ((0, 0), (1, 1), (1, 1), (0, 0)))
    xb, nblk = _overlap_rows(xp, TH)
    m0 = TH * Wp

    inputs = [xb, wt, bb]
    in_specs = [pl.BlockSpec((1, xb.shape[1], Cin), lambda m, n: (m, 0, 0)),
                pl.BlockSpec((9, Cin, tn), lambda m, n: (0, 0, n)),
                pl.BlockSpec((1, tn), lambda m, n: (0, n))]
    if has_res:
        rb = jnp.pad(residual, ((0, 0), (0, 0), (0, 2), (0, Coutp - Cout)))
        rb = rb.reshape(B * nblk, m0, Coutp)
        inputs.append(rb)
        in_specs.append(pl.BlockSpec((1, m0, tn), lambda m, n: (m, 0, n)))

    out = pl.pallas_call(
        functools.partial(_conv3x3_kernel, wp=Wp, m0=m0, act=act,
                          has_res=has_res),
        grid=(B * nblk, Coutp // tn),
        in_specs=in_specs,
        out_specs=pl.BlockSpec((1, m0, tn), lambda m, n: (m, 0, n)),
        out_shape=jax.ShapeDtypeStruct((B * nblk, m0, Coutp), out_dtype),
        compiler_params=_cp(("parallel", "parallel")),
    )(*inputs)
    return out.reshape(B, H, Wp, Coutp)[:, :, :W, :Cout]


def conv3x3(x, p, residual=None, act=None, out_dtype=jnp.bfloat16):
    return _conv3x3_call(x, p['w'], p.get('b'), residual,
                         act=act, out_dtype=out_dtype)


# --------------------------------------------------------------------------
# Depthwise 3x3 conv (bf16 loads, f32 math, bf16 stores), row-tiled
# --------------------------------------------------------------------------

def _dw3x3_kernel(x_ref, w_ref, b_ref, o_ref, *, wp, m0):
    # TODO(synk): a pltpu.roll (XLU-slot) formulation for the +/-1 column
    # shifts would free load/VALU slots further (micro-opt).
    acc = None
    for ky in range(3):
        for kx in range(3):
            off = ky * wp + kx
            t = x_ref[0, off:off + m0, :].astype(jnp.float32) * w_ref[ky * 3 + kx]
            acc = t if acc is None else acc + t
    o_ref[0] = (acc + b_ref[...]).astype(o_ref.dtype)


@jax.jit
def _dwconv_call(x, w, b):
    B, H, W, C = x.shape
    Wp = W + 2
    in_row = Wp * C * 2                          # bf16 input
    out_row = Wp * C * (2 * 2 + 4)               # bf16 out dbuf + f32 acc value
    TH = _row_tile(H, in_row, out_row, _TILE_BUDGET)
    xp = jnp.pad(x.astype(jnp.bfloat16), ((0, 0), (1, 1), (1, 1), (0, 0)))
    xb, nblk = _overlap_rows(xp, TH)
    m0 = TH * Wp
    wt = jnp.transpose(w[:, 0], (1, 2, 0)).reshape(9, 1, C).astype(jnp.float32)
    bb = b if b is not None else jnp.zeros((C,), jnp.float32)
    bb = bb.astype(jnp.float32).reshape(1, C)
    out = pl.pallas_call(
        functools.partial(_dw3x3_kernel, wp=Wp, m0=m0),
        grid=(B * nblk,),
        in_specs=[pl.BlockSpec((1, xb.shape[1], C), lambda i: (i, 0, 0)),
                  pl.BlockSpec((9, 1, C), lambda i: (0, 0, 0)),
                  pl.BlockSpec((1, C), lambda i: (0, 0))],
        out_specs=pl.BlockSpec((1, m0, C), lambda i: (i, 0, 0)),
        out_shape=jax.ShapeDtypeStruct((B * nblk, m0, C), jnp.bfloat16),
        compiler_params=_cp(("parallel",)),
    )(xb, wt, bb)
    return out.reshape(B, H, Wp, C)[:, :, :W, :]


def dwconv3x3(x, p):
    return _dwconv_call(x, p['w'], p.get('b'))


# --------------------------------------------------------------------------
# Restormer "WithBias" LayerNorm (row-tiled, parallel grid, bf16 out)
# --------------------------------------------------------------------------

def _ln_kernel(x_ref, w_ref, b_ref, o_ref):
    x = x_ref[...].astype(jnp.float32)
    mu = jnp.mean(x, axis=-1, keepdims=True)
    var = jnp.mean(jnp.square(x - mu), axis=-1, keepdims=True)  # unbiased=False
    y = (x - mu) * jax.lax.rsqrt(var + 1e-5) * w_ref[...] + b_ref[...]
    o_ref[...] = y.astype(o_ref.dtype)


@jax.jit
def layernorm(x, w, b):
    B, H, W, C = x.shape
    M = B * H * W
    tm = min(256, _round_up(M, 16))
    Mp = _round_up(M, tm)
    x2 = jnp.pad(x.reshape(M, C), ((0, Mp - M), (0, 0)))
    out = pl.pallas_call(
        _ln_kernel,
        grid=(Mp // tm,),
        in_specs=[pl.BlockSpec((tm, C), lambda i: (i, 0)),
                  pl.BlockSpec((1, C), lambda i: (0, 0)),
                  pl.BlockSpec((1, C), lambda i: (0, 0))],
        out_specs=pl.BlockSpec((tm, C), lambda i: (i, 0)),
        out_shape=jax.ShapeDtypeStruct((Mp, C), jnp.bfloat16),
        compiler_params=_cp(("parallel",)),
    )(x2, w.reshape(1, C).astype(jnp.float32),
      b.reshape(1, C).astype(jnp.float32))
    return out[:M].reshape(B, H, W, C)


# --------------------------------------------------------------------------
# MDTA channel attention: HW-tiled, all heads fused into one CxC gram
# --------------------------------------------------------------------------

def _mdta_gram_kernel(qkv_ref, g_ref, sq_ref, sk_ref, *, c):
    @pl.when(pl.program_id(1) == 0)
    def _init():
        g_ref[...] = jnp.zeros_like(g_ref)
        sq_ref[...] = jnp.zeros_like(sq_ref)
        sk_ref[...] = jnp.zeros_like(sk_ref)

    q = qkv_ref[0, :, 0:c]                       # (TN, C) bf16
    k = qkv_ref[0, :, c:2 * c]
    # unnormalized gram over this HW tile (bf16 MXU dot, f32 accumulate)
    g_ref[0] += jax.lax.dot_general(q, k, (((0,), (0,)), ((), ())),
                                    preferred_element_type=jnp.float32)
    qf = q.astype(jnp.float32)
    kf = k.astype(jnp.float32)
    sq_ref[0] += jnp.sum(qf * qf, axis=0, keepdims=True)
    sk_ref[0] += jnp.sum(kf * kf, axis=0, keepdims=True)


def _mdta_apply_kernel(qkv_ref, p_ref, o_ref, *, c):
    v = qkv_ref[0, :, 2 * c:3 * c]               # (TN, C) bf16
    out = jax.lax.dot_general(v, p_ref[0], (((1,), (1,)), ((), ())),
                              preferred_element_type=jnp.float32)
    o_ref[0] = out.astype(o_ref.dtype)


def _pick_n_tile(n, c):
    # per-step VMEM: double-buffered (TN,3C) bf16 qkv block + (TN,C) bf16 out.
    per_row = 3 * c * 2 * 2 + c * 2 * 2
    cap = max(8, _TILE_BUDGET // max(per_row, 1))
    if cap >= n:
        return n
    t = (cap // 8) * 8
    while t >= 8:
        if n % t == 0:
            return t
        t -= 8
    return n


@functools.partial(jax.jit, static_argnames=('num_heads',))
def pallas_mdta(qkv, temperature, num_heads):
    B, H, W, C3 = qkv.shape
    C = C3 // 3
    N = H * W
    qkv = qkv.reshape(B, N, C3).astype(jnp.bfloat16)

    TN = _pick_n_tile(N, C)
    NT = N // TN
    qkv_spec = pl.BlockSpec((1, TN, C3), lambda b, n: (b, n, 0))

    # pass 1: accumulate CxC gram + per-channel sum-of-squares over HW tiles
    g, sq, sk = pl.pallas_call(
        functools.partial(_mdta_gram_kernel, c=C),
        grid=(B, NT),
        in_specs=[qkv_spec],
        out_specs=(pl.BlockSpec((1, C, C), lambda b, n: (b, 0, 0)),
                   pl.BlockSpec((1, 1, C), lambda b, n: (b, 0, 0)),
                   pl.BlockSpec((1, 1, C), lambda b, n: (b, 0, 0))),
        out_shape=(jax.ShapeDtypeStruct((B, C, C), jnp.float32),
                   jax.ShapeDtypeStruct((B, 1, C), jnp.float32),
                   jax.ShapeDtypeStruct((B, 1, C), jnp.float32)),
        compiler_params=_cp(("parallel", "arbitrary")),
    )(qkv)

    # tiny (B, C, C) softmax with block-diagonal head mask: plain JAX.
    ch = C // num_heads
    head_id = jnp.arange(C) // ch
    mask = jnp.where(head_id[:, None] == head_id[None, :],
                     0.0, -1e9).astype(jnp.float32)
    tvec = jnp.repeat(temperature.reshape(num_heads), ch).astype(jnp.float32)
    invq = jax.lax.rsqrt(jnp.maximum(sq, 1e-24))           # (B,1,C)
    invk = jax.lax.rsqrt(jnp.maximum(sk, 1e-24))           # (B,1,C)
    attn = g * jnp.swapaxes(invq, 1, 2) * invk * tvec[None, :, None]
    attn = attn + mask[None]
    attn = attn - jnp.max(attn, axis=-1, keepdims=True)
    p = jnp.exp(attn)
    p = (p / jnp.sum(p, axis=-1, keepdims=True)).astype(jnp.bfloat16)

    # pass 2: out[n_tile] = V[n_tile] . P^T, tile-by-tile
    out = pl.pallas_call(
        functools.partial(_mdta_apply_kernel, c=C),
        grid=(B, NT),
        in_specs=[qkv_spec,
                  pl.BlockSpec((1, C, C), lambda b, n: (b, 0, 0))],
        out_specs=pl.BlockSpec((1, TN, C), lambda b, n: (b, n, 0)),
        out_shape=jax.ShapeDtypeStruct((B, N, C), jnp.bfloat16),
        compiler_params=_cp(("parallel", "parallel")),
    )(qkv, p)
    return out                                             # (B, N, C)


# --------------------------------------------------------------------------
# SPADE: one-read BN stats (sum / sumsq) + fused modulation + LeakyReLU
# --------------------------------------------------------------------------

def _spade_mod_kernel(x_ref, g_ref, b_ref, mu_ref, iv_ref, o_ref):
    x = x_ref[...].astype(jnp.float32)
    g = g_ref[...].astype(jnp.float32)
    b = b_ref[...].astype(jnp.float32)
    y = (x - mu_ref[...]) * iv_ref[...] * (1.0 + g) + b
    # fused LeakyReLU(0.2) from SPADEResnetBlock.actvn
    o_ref[...] = jnp.where(y >= 0.0, y, 0.2 * y).astype(o_ref.dtype)


@jax.jit
def spade_modulate_lrelu(x, gamma, beta):
    # TODO(synk): SyncBatchNorm running-statistics tracking not reproduced; we
    # use single-device batch statistics (training-mode), affine=False.
    B, H, W, C = x.shape
    M = B * H * W
    xf = x.reshape(M, C)
    x32 = xf.astype(jnp.float32)
    mu = jnp.mean(x32, axis=0, keepdims=True)
    var = jnp.mean(jnp.square(x32), axis=0, keepdims=True) - jnp.square(mu)
    inv = jax.lax.rsqrt(jnp.maximum(var, 0.0) + 1e-5)
    tm = min(256, _round_up(M, 16))
    Mp = _round_up(M, tm)
    pad = ((0, Mp - M), (0, 0))
    out = pl.pallas_call(
        _spade_mod_kernel,
        grid=(Mp // tm,),
        in_specs=[pl.BlockSpec((tm, C), lambda i: (i, 0)),
                  pl.BlockSpec((tm, C), lambda i: (i, 0)),
                  pl.BlockSpec((tm, C), lambda i: (i, 0)),
                  pl.BlockSpec((1, C), lambda i: (0, 0)),
                  pl.BlockSpec((1, C), lambda i: (0, 0))],
        out_specs=pl.BlockSpec((tm, C), lambda i: (i, 0)),
        out_shape=jax.ShapeDtypeStruct((Mp, C), jnp.bfloat16),
        compiler_params=_cp(("parallel",)),
    )(jnp.pad(xf, pad), jnp.pad(gamma.reshape(M, C), pad),
      jnp.pad(beta.reshape(M, C), pad), mu, inv)
    return out[:M].reshape(B, H, W, C)


# --------------------------------------------------------------------------
# Plain JAX glue
# --------------------------------------------------------------------------

def pixel_unshuffle(x, r=2):
    B, H, W, C = x.shape
    x = x.reshape(B, H // r, r, W // r, r, C)
    x = jnp.transpose(x, (0, 1, 3, 5, 2, 4))
    return x.reshape(B, H // r, W // r, C * r * r)


def pixel_shuffle(x, r=2):
    B, H, W, C = x.shape
    c = C // (r * r)
    x = x.reshape(B, H, W, c, r, r)
    x = jnp.transpose(x, (0, 1, 4, 2, 5, 3))
    return x.reshape(B, H * r, W * r, c)


def gelu_exact(x):
    return 0.5 * x * (1.0 + jax.lax.erf(x / np.float32(np.sqrt(2.0))))


def nearest_resize(x, H, W):
    B, h, w, C = x.shape
    if (h, w) == (H, W):
        return x
    iy = (jnp.arange(H) * h) // H
    ix = (jnp.arange(W) * w) // W
    return x[:, iy][:, :, ix]


# --------------------------------------------------------------------------
# Module building blocks
# --------------------------------------------------------------------------

def mdta_attention(x, p, num_heads):
    B, H, W, C = x.shape
    xl = layernorm(x, p['n1_w'], p['n1_b'])
    qkv = conv1x1(xl, p['qkv'])
    qkv = dwconv3x3(qkv, p['qkv_dw'])
    o = pallas_mdta(qkv, p['temperature'], num_heads).reshape(B, H, W, C)
    return conv1x1(o, p['proj_out'], residual=x)      # fused residual add


def gdfn(x, p):
    xl = layernorm(x, p['n2_w'], p['n2_b'])
    y = conv1x1(xl, p['ffn_in'])
    y = dwconv3x3(y, p['ffn_dw'])
    h = y.shape[-1] // 2
    # TODO(synk): fuse the exact-erf GELU gate into the dwconv epilogue once
    # lax.erf lowering inside Mosaic is guaranteed; kept as JAX glue for now.
    g = gelu_exact(y[..., :h].astype(jnp.float32)) * y[..., h:].astype(jnp.float32)
    return conv1x1(g, p['ffn_out'], residual=x)       # fused residual add


def transformer_block(x, p):
    x = mdta_attention(x, p, p['num_heads'])   # x + Attn(LN1(x))
    x = gdfn(x, p)                             # x + FFN(LN2(x))
    return x


def run_blocks(blocks, x):
    for p in blocks:
        x = transformer_block(x, p)
    return x


def spade_lrelu(x, seg, p):
    B, H, W, C = x.shape
    seg = nearest_resize(seg, H, W)
    actv = conv3x3(seg, p['shared'], act='relu')      # fused ReLU
    gamma = conv3x3(actv, p['gamma'])
    beta = conv3x3(actv, p['beta'])
    return spade_modulate_lrelu(x, gamma, beta)       # fused LeakyReLU(0.2)


def spade_resblock(x, seg, p):
    # fin == fout -> identity shortcut.
    # TODO(synk): spectral_norm weight reparametrization skipped; conv weights
    # are used directly (deterministic scalar rescale of the weight).
    dx = conv3x3(spade_lrelu(x, seg, p['norm0']), p['conv0'])
    return conv3x3(spade_lrelu(dx, seg, p['norm1']), p['conv1'], residual=x)


# --------------------------------------------------------------------------
# Parameter construction (deterministic, in-script)
# --------------------------------------------------------------------------

class KeyGen:
    def __init__(self, seed):
        self.key = jax.random.PRNGKey(seed)

    def __call__(self):
        self.key, sub = jax.random.split(self.key)
        return sub


def conv_params(kg, cin, cout, k, bias):
    fan = cin * k * k
    p = {'w': (jax.random.normal(kg(), (cout, cin, k, k)) / np.sqrt(fan)
               ).astype(jnp.float32)}
    if bias:
        p['b'] = (0.01 * jax.random.normal(kg(), (cout,))).astype(jnp.float32)
    return p


def dwconv_params(kg, ch, bias):
    p = {'w': (jax.random.normal(kg(), (ch, 1, 3, 3)) / 3.0).astype(jnp.float32)}
    if bias:
        p['b'] = (0.01 * jax.random.normal(kg(), (ch,))).astype(jnp.float32)
    return p


def tblock_params(kg, dim, num_heads, ffn_factor, bias):
    hidden = int(dim * ffn_factor)
    return {
        'num_heads': num_heads,
        'n1_w': jnp.ones((dim,), jnp.float32), 'n1_b': jnp.zeros((dim,), jnp.float32),
        'temperature': jnp.ones((num_heads, 1, 1), jnp.float32),
        'qkv': conv_params(kg, dim, dim * 3, 1, bias),
        'qkv_dw': dwconv_params(kg, dim * 3, bias),
        'proj_out': conv_params(kg, dim, dim, 1, bias),
        'n2_w': jnp.ones((dim,), jnp.float32), 'n2_b': jnp.zeros((dim,), jnp.float32),
        'ffn_in': conv_params(kg, dim, hidden * 2, 1, bias),
        'ffn_dw': dwconv_params(kg, hidden * 2, bias),
        'ffn_out': conv_params(kg, hidden, dim, 1, bias),
    }


def spade_params(kg, norm_nc, label_nc, nhidden=128):
    return {'shared': conv_params(kg, label_nc, nhidden, 3, True),
            'gamma': conv_params(kg, nhidden, norm_nc, 3, True),
            'beta': conv_params(kg, nhidden, norm_nc, 3, True)}


def spade_block_params(kg, f):
    return {'conv0': conv_params(kg, f, f, 3, True),
            'conv1': conv_params(kg, f, f, 3, True),
            'norm0': spade_params(kg, f, f),
            'norm1': spade_params(kg, f, f)}


def build_params(kg, inp_ch=3, out_ch=3, dim=16, num_blocks=(1, 1, 1, 1),
                 num_ref=1, heads=(1, 2, 4, 8), ffn=2.66, bias=False):
    P = {}
    P['patch_embed'] = conv_params(kg, inp_ch, dim, 3, bias)
    P['enc1'] = [tblock_params(kg, dim, heads[0], ffn, bias) for _ in range(num_blocks[0])]
    P['down1_2'] = conv_params(kg, dim, dim // 2, 3, False)
    P['enc2'] = [tblock_params(kg, dim * 2, heads[1], ffn, bias) for _ in range(num_blocks[1])]
    P['down2_3'] = conv_params(kg, dim * 2, dim, 3, False)
    P['enc3'] = [tblock_params(kg, dim * 4, heads[2], ffn, bias) for _ in range(num_blocks[2])]
    P['down3_4'] = conv_params(kg, dim * 4, dim * 2, 3, False)
    P['latent'] = [tblock_params(kg, dim * 8, heads[3], ffn, bias) for _ in range(num_blocks[3])]
    P['up4_3'] = conv_params(kg, dim * 8, dim * 16, 3, False)
    P['reduce3'] = conv_params(kg, dim * 8, dim * 4, 1, bias)
    P['dec3'] = [tblock_params(kg, dim * 4, heads[2], ffn, bias) for _ in range(num_blocks[2])]
    P['up3_2'] = conv_params(kg, dim * 4, dim * 8, 3, False)
    P['reduce2'] = conv_params(kg, dim * 4, dim * 2, 1, bias)
    P['dec2'] = [tblock_params(kg, dim * 2, heads[1], ffn, bias) for _ in range(num_blocks[1])]
    P['up2_1'] = conv_params(kg, dim * 2, dim * 4, 3, False)
    P['dec1'] = [tblock_params(kg, dim * 2, heads[0], ffn, bias) for _ in range(num_blocks[0])]
    P['refine'] = [tblock_params(kg, dim * 2, heads[0], ffn, bias) for _ in range(num_ref)]
    P['output'] = conv_params(kg, dim * 2, out_ch, 3, bias)
    P['ad'] = [spade_block_params(kg, dim),
               spade_block_params(kg, dim * 2),
               spade_block_params(kg, dim * 4)]
    return P


# --------------------------------------------------------------------------
# RestormerK forward (dual_pixel_task=False path)
# --------------------------------------------------------------------------

def restormer_forward(params, inp_img, latent_list):
    # inp_img: NCHW (B,3,H,W); latent_list NCHW at full/half/quarter resolution
    x = jnp.transpose(inp_img, (0, 2, 3, 1)).astype(jnp.float32)
    lat = [jnp.transpose(l, (0, 2, 3, 1)).astype(jnp.float32) for l in latent_list]

    inp_enc1 = conv3x3(x, params['patch_embed'])
    out_enc1 = run_blocks(params['enc1'], inp_enc1)
    inp_enc2 = pixel_unshuffle(conv3x3(out_enc1, params['down1_2']))
    out_enc2 = run_blocks(params['enc2'], inp_enc2)
    inp_enc3 = pixel_unshuffle(conv3x3(out_enc2, params['down2_3']))
    out_enc3 = run_blocks(params['enc3'], inp_enc3)
    inp_enc4 = pixel_unshuffle(conv3x3(out_enc3, params['down3_4']))
    latent = run_blocks(params['latent'], inp_enc4)

    inp_dec3 = pixel_shuffle(conv3x3(latent, params['up4_3']))
    out_enc3_new = spade_resblock(lat[2], out_enc3, params['ad'][2])
    inp_dec3 = jnp.concatenate([inp_dec3, out_enc3_new], axis=-1)
    inp_dec3 = conv1x1(inp_dec3, params['reduce3'])
    out_dec3 = run_blocks(params['dec3'], inp_dec3)

    inp_dec2 = pixel_shuffle(conv3x3(out_dec3, params['up3_2']))
    out_enc2_new = spade_resblock(lat[1], out_enc2, params['ad'][1])
    inp_dec2 = jnp.concatenate([inp_dec2, out_enc2_new], axis=-1)
    inp_dec2 = conv1x1(inp_dec2, params['reduce2'])
    out_dec2 = run_blocks(params['dec2'], inp_dec2)

    inp_dec1 = pixel_shuffle(conv3x3(out_dec2, params['up2_1']))
    out_enc1_new = spade_resblock(lat[0], out_enc1, params['ad'][0])
    inp_dec1 = jnp.concatenate([inp_dec1, out_enc1_new], axis=-1)
    out_dec1 = run_blocks(params['dec1'], inp_dec1)
    out_dec1 = run_blocks(params['refine'], out_dec1)

    # final conv3x3 with fused "+ inp_img" residual, f32 output
    out = conv3x3(out_dec1, params['output'], residual=x, out_dtype=jnp.float32)
    return jnp.transpose(out, (0, 3, 1, 2))


# --------------------------------------------------------------------------
# Main
# --------------------------------------------------------------------------

if __name__ == "__main__":
    B, H, W = 2, 16, 16
    dim, heads = 16, (1, 2, 4, 8)

    kg = KeyGen(0)
    params = build_params(kg, inp_ch=3, out_ch=3, dim=dim,
                          num_blocks=(1, 1, 1, 1), num_ref=1,
                          heads=heads, ffn=2.66, bias=False)

    k1, k2, k3, k4 = jax.random.split(jax.random.PRNGKey(0), 4)
    inp_img = jax.random.normal(k1, (B, 3, H, W), jnp.float32)
    latent_list = [
        jax.random.normal(k2, (B, dim, H, W), jnp.float32),
        jax.random.normal(k3, (B, dim * 2, H // 2, W // 2), jnp.float32),
        jax.random.normal(k4, (B, dim * 4, H // 4, W // 4), jnp.float32),
    ]

    out = restormer_forward(params, inp_img, latent_list)
    out = jax.block_until_ready(out)
    assert out.shape == (B, 3, H, W)
    assert bool(jnp.all(jnp.isfinite(out)))
    print("KERNEL_OK")
</pallas_src>

<mosaic_0001>
module attributes {stable_mosaic.version = 11 : i64} {
  func.func @_conv3x3_kernel(%arg0: i32, %arg1: i32, %arg2: memref<1x326x3xbf16, #tpu.memory_space<vmem>>, %arg3: memref<9x3x128xbf16, #tpu.memory_space<vmem>>, %arg4: memref<1x128xf32, #tpu.memory_space<vmem>>, %arg5: memref<1x288x128xbf16, #tpu.memory_space<vmem>>) attributes {dimension_semantics = [#tpu.dimension_semantics<parallel>, #tpu.dimension_semantics<parallel>], iteration_bounds = array<i64: 2, 1>, scalar_prefetch = 0 : i64, scratch_operands = 0 : i64, tpu.core_type = #tpu.core_type<tc>, window_params = [{transform_indices = @transform_0, window_bounds = array<i64: 1, 326, 3>}, {transform_indices = @transform_1, window_bounds = array<i64: 9, 3, 128>}, {transform_indices = @transform_2, window_bounds = array<i64: 1, 128>}, {transform_indices = @transform_3, window_bounds = array<i64: 1, 288, 128>}]} {
    %c0 = arith.constant 0 : index
    %c0_0 = arith.constant 0 : index
    %c0_1 = arith.constant 0 : index
    %0 = vector.load %arg2[%c0, %c0_0, %c0_1] : memref<1x326x3xbf16, #tpu.memory_space<vmem>>, vector<1x288x3xbf16>
    %1 = vector.shape_cast %0 : vector<1x288x3xbf16> to vector<288x3xbf16>
    %c0_2 = arith.constant 0 : index
    %c0_3 = arith.constant 0 : index
    %c0_4 = arith.constant 0 : index
    %2 = vector.load %arg3[%c0_2, %c0_3, %c0_4] : memref<9x3x128xbf16, #tpu.memory_space<vmem>>, vector<1x3x128xbf16>
    %3 = vector.shape_cast %2 : vector<1x3x128xbf16> to vector<3x128xbf16>
    %cst = arith.constant dense<0.000000e+00> : vector<288x128xf32>
    %4 = tpu.matmul %1, %3, %cst {dimension_numbers = #tpu.dot_dimension_numbers<[1], [0], [0], [1], [0, 0, 1, 1], [], []>} : vector<288x3xbf16>, vector<3x128xbf16>, vector<288x128xf32> -> vector<288x128xf32>
    %c0_5 = arith.constant 0 : index
    %c1 = arith.constant 1 : index
    %c0_6 = arith.constant 0 : index
    %5 = vector.load %arg2[%c0_5, %c1, %c0_6] : memref<1x326x3xbf16, #tpu.memory_space<vmem>>, vector<1x288x3xbf16>
    %6 = vector.shape_cast %5 : vector<1x288x3xbf16> to vector<288x3xbf16>
    %c1_7 = arith.constant 1 : index
    %c0_8 = arith.constant 0 : index
    %c0_9 = arith.constant 0 : index
    %7 = vector.load %arg3[%c1_7, %c0_8, %c0_9] : memref<9x3x128xbf16, #tpu.memory_space<vmem>>, vector<1x3x128xbf16>
    %8 = vector.shape_cast %7 : vector<1x3x128xbf16> to vector<3x128xbf16>
    %cst_10 = arith.constant dense<0.000000e+00> : vector<288x128xf32>
    %9 = tpu.matmul %6, %8, %cst_10 {dimension_numbers = #tpu.dot_dimension_numbers<[1], [0], [0], [1], [0, 0, 1, 1], [], []>} : vector<288x3xbf16>, vector<3x128xbf16>, vector<288x128xf32> -> vector<288x128xf32>
    %10 = arith.addf %4, %9 : vector<288x128xf32>
    %c0_11 = arith.constant 0 : index
    %c2 = arith.constant 2 : index
    %c0_12 = arith.constant 0 : index
    %11 = vector.load %arg2[%c0_11, %c2, %c0_12] : memref<1x326x3xbf16, #tpu.memory_space<vmem>>, vector<1x288x3xbf16>
    %12 = vector.shape_cast %11 : vector<1x288x3xbf16> to vector<288x3xbf16>
    %c2_13 = arith.constant 2 : index
    %c0_14 = arith.constant 0 : index
    %c0_15 = arith.constant 0 : index
    %13 = vector.load %arg3[%c2_13, %c0_14, %c0_15] : memref<9x3x128xbf16, #tpu.memory_space<vmem>>, vector<1x3x128xbf16>
    %14 = vector.shape_cast %13 : vector<1x3x128xbf16> to vector<3x128xbf16>
    %cst_16 = arith.constant dense<0.000000e+00> : vector<288x128xf32>
    %15 = tpu.matmul %12, %14, %cst_16 {dimension_numbers = #tpu.dot_dimension_numbers<[1], [0], [0], [1], [0, 0, 1, 1], [], []>} : vector<288x3xbf16>, vector<3x128xbf16>, vector<288x128xf32> -> vector<288x128xf32>
    %16 = arith.addf %10, %15 : vector<288x128xf32>
    %c0_17 = arith.constant 0 : index
    %c18 = arith.constant 18 : index
    %c0_18 = arith.constant 0 : index
    %17 = vector.load %arg2[%c0_17, %c18, %c0_18] : memref<1x326x3xbf16, #tpu.memory_space<vmem>>, vector<1x288x3xbf16>
    %18 = vector.shape_cast %17 : vector<1x288x3xbf16> to vector<288x3xbf16>
    %c3 = arith.constant 3 : index
    %c0_19 = arith.constant 0 : index
    %c0_20 = arith.constant 0 : index
    %19 = vector.load %arg3[%c3, %c0_19, %c0_20] : memref<9x3x128xbf16, #tpu.memory_space<vmem>>, vector<1x3x128xbf16>
    %20 = vector.shape_cast %19 : vector<1x3x128xbf16> to vector<3x128xbf16>
    %cst_21 = arith.constant dense<0.000000e+00> : vector<288x128xf32>
    %21 = tpu.matmul %18, %20, %cst_21 {dimension_numbers = #tpu.dot_dimension_numbers<[1], [0], [0], [1], [0, 0, 1, 1], [], []>} : vector<288x3xbf16>, vector<3x128xbf16>, vector<288x128xf32> -> vector<288x128xf32>
    %22 = arith.addf %16, %21 : vector<288x128xf32>
    %c0_22 = arith.constant 0 : index
    %c19 = arith.constant 19 : index
    %c0_23 = arith.constant 0 : index
    %23 = vector.load %arg2[%c0_22, %c19, %c0_23] : memref<1x326x3xbf16, #tpu.memory_space<vmem>>, vector<1x288x3xbf16>
    %24 = vector.shape_cast %23 : vector<1x288x3xbf16> to vector<288x3xbf16>
    %c4 = arith.constant 4 : index
    %c0_24 = arith.constant 0 : index
    %c0_25 = arith.constant 0 : index
    %25 = vector.load %arg3[%c4, %c0_24, %c0_25] : memref<9x3x128xbf16, #tpu.memory_space<vmem>>, vector<1x3x128xbf16>
    %26 = vector.shape_cast %25 : vector<1x3x128xbf16> to vector<3x128xbf16>
    %cst_26 = arith.constant dense<0.000000e+00> : vector<288x128xf32>
    %27 = tpu.matmul %24, %26, %cst_26 {dimension_numbers = #tpu.dot_dimension_numbers<[1], [0], [0], [1], [0, 0, 1, 1], [], []>} : vector<288x3xbf16>, vector<3x128xbf16>, vector<288x128xf32> -> vector<288x128xf32>
    %28 = arith.addf %22, %27 : vector<288x128xf32>
    %c0_27 = arith.constant 0 : index
    %c20 = arith.constant 20 : index
    %c0_28 = arith.constant 0 : index
    %29 = vector.load %arg2[%c0_27, %c20, %c0_28] : memref<1x326x3xbf16, #tpu.memory_space<vmem>>, vector<1x288x3xbf16>
    %30 = vector.shape_cast %29 : vector<1x288x3xbf16> to vector<288x3xbf16>
    %c5 = arith.constant 5 : index
    %c0_29 = arith.constant 0 : index
    %c0_30 = arith.constant 0 : index
    %31 = vector.load %arg3[%c5, %c0_29, %c0_30] : memref<9x3x128xbf16, #tpu.memory_space<vmem>>, vector<1x3x128xbf16>
    %32 = vector.shape_cast %31 : vector<1x3x128xbf16> to vector<3x128xbf16>
    %cst_31 = arith.constant dense<0.000000e+00> : vector<288x128xf32>
    %33 = tpu.matmul %30, %32, %cst_31 {dimension_numbers = #tpu.dot_dimension_numbers<[1], [0], [0], [1], [0, 0, 1, 1], [], []>} : vector<288x3xbf16>, vector<3x128xbf16>, vector<288x128xf32> -> vector<288x128xf32>
    %34 = arith.addf %28, %33 : vector<288x128xf32>
    %c0_32 = arith.constant 0 : index
    %c36 = arith.constant 36 : index
    %c0_33 = arith.constant 0 : index
    %35 = vector.load %arg2[%c0_32, %c36, %c0_33] : memref<1x326x3xbf16, #tpu.memory_space<vmem>>, vector<1x288x3xbf16>
    %36 = vector.shape_cast %35 : vector<1x288x3xbf16> to vector<288x3xbf16>
    %c6 = arith.constant 6 : index
    %c0_34 = arith.constant 0 : index
    %c0_35 = arith.constant 0 : index
    %37 = vector.load %arg3[%c6, %c0_34, %c0_35] : memref<9x3x128xbf16, #tpu.memory_space<vmem>>, vector<1x3x128xbf16>
    %38 = vector.shape_cast %37 : vector<1x3x128xbf16> to vector<3x128xbf16>
    %cst_36 = arith.constant dense<0.000000e+00> : vector<288x128xf32>
    %39 = tpu.matmul %36, %38, %cst_36 {dimension_numbers = #tpu.dot_dimension_numbers<[1], [0], [0], [1], [0, 0, 1, 1], [], []>} : vector<288x3xbf16>, vector<3x128xbf16>, vector<288x128xf32> -> vector<288x128xf32>
    %40 = arith.addf %34, %39 : vector<288x128xf32>
    %c0_37 = arith.constant 0 : index
    %c37 = arith.constant 37 : index
    %c0_38 = arith.constant 0 : index
    %41 = vector.load %arg2[%c0_37, %c37, %c0_38] : memref<1x326x3xbf16, #tpu.memory_space<vmem>>, vector<1x288x3xbf16>
    %42 = vector.shape_cast %41 : vector<1x288x3xbf16> to vector<288x3xbf16>
    %c7 = arith.constant 7 : index
    %c0_39 = arith.constant 0 : index
    %c0_40 = arith.constant 0 : index
    %43 = vector.load %arg3[%c7, %c0_39, %c0_40] : memref<9x3x128xbf16, #tpu.memory_space<vmem>>, vector<1x3x128xbf16>
    %44 = vector.shape_cast %43 : vector<1x3x128xbf16> to vector<3x128xbf16>
    %cst_41 = arith.constant dense<0.000000e+00> : vector<288x128xf32>
    %45 = tpu.matmul %42, %44, %cst_41 {dimension_numbers = #tpu.dot_dimension_numbers<[1], [0], [0], [1], [0, 0, 1, 1], [], []>} : vector<288x3xbf16>, vector<3x128xbf16>, vector<288x128xf32> -> vector<288x128xf32>
    %46 = arith.addf %40, %45 : vector<288x128xf32>
    %c0_42 = arith.constant 0 : index
    %c38 = arith.constant 38 : index
    %c0_43 = arith.constant 0 : index
    %47 = vector.load %arg2[%c0_42, %c38, %c0_43] : memref<1x326x3xbf16, #tpu.memory_space<vmem>>, vector<1x288x3xbf16>
    %48 = vector.shape_cast %47 : vector<1x288x3xbf16> to vector<288x3xbf16>
    %c8 = arith.constant 8 : index
    %c0_44 = arith.constant 0 : index
    %c0_45 = arith.constant 0 : index
    %49 = vector.load %arg3[%c8, %c0_44, %c0_45] : memref<9x3x128xbf16, #tpu.memory_space<vmem>>, vector<1x3x128xbf16>
    %50 = vector.shape_cast %49 : vector<1x3x128xbf16> to vector<3x128xbf16>
    %cst_46 = arith.constant dense<0.000000e+00> : vector<288x128xf32>
    %51 = tpu.matmul %48, %50, %cst_46 {dimension_numbers = #tpu.dot_dimension_numbers<[1], [0], [0], [1], [0, 0, 1, 1], [], []>} : vector<288x3xbf16>, vector<3x128xbf16>, vector<288x128xf32> -> vector<288x128xf32>
    %52 = arith.addf %46, %51 : vector<288x128xf32>
    %c0_47 = arith.constant 0 : index
    %c0_48 = arith.constant 0 : index
    %53 = vector.load %arg4[%c0_47, %c0_48] : memref<1x128xf32, #tpu.memory_space<vmem>>, vector<1x128xf32>
    %54 = vector.broadcast %53 : vector<1x128xf32> to vector<288x128xf32>
    %55 = arith.addf %52, %54 : vector<288x128xf32>
    %56 = arith.truncf %55 : vector<288x128xf32> to vector<288x128xbf16>
    %c0_49 = arith.constant 0 : index
    %c0_50 = arith.constant 0 : index
    %c0_51 = arith.constant 0 : index
    %57 = vector.load %arg5[%c0_49, %c0_50, %c0_51] : memref<1x288x128xbf16, #tpu.memory_space<vmem>>, vector<1x288x128xbf16>
    %58 = vector.shape_cast %57 : vector<1x288x128xbf16> to vector<288x128xbf16>
    %59 = vector.shape_cast %56 : vector<288x128xbf16> to vector<1x288x128xbf16>
    tpu.vector_store %arg5[%c0_49, %c0_50, %c0_51], %59 {strides = array<i32>} : memref<1x288x128xbf16, #tpu.memory_space<vmem>>, vector<1x288x128xbf16>,
    return
  }
  func.func @transform_0(%arg0: i32, %arg1: i32) -> (i32, i32, i32) {
    %c0_i32 = arith.constant 0 : i32
    %c0_i32_0 = arith.constant 0 : i32
    %c0_i32_1 = arith.constant 0 : i32
    return %arg0, %c0_i32, %c0_i32_0 : i32, i32, i32
  }
  func.func @transform_1(%arg0: i32, %arg1: i32) -> (i32, i32, i32) {
    %c0_i32 = arith.constant 0 : i32
    %c0_i32_0 = arith.constant 0 : i32
    %c0_i32_1 = arith.constant 0 : i32
    return %c0_i32, %c0_i32_0, %arg1 : i32, i32, i32
  }
  func.func @transform_2(%arg0: i32, %arg1: i32) -> (i32, i32) {
    %c0_i32 = arith.constant 0 : i32
    %c0_i32_0 = arith.constant 0 : i32
    return %c0_i32, %arg1 : i32, i32
  }
  func.func @transform_3(%arg0: i32, %arg1: i32) -> (i32, i32, i32) {
    %c0_i32 = arith.constant 0 : i32
    %c0_i32_0 = arith.constant 0 : i32
    return %arg0, %c0_i32, %arg1 : i32, i32, i32
  }
}

</mosaic_0001>

<llo_original>
// kernel: _conv3x3_call.1
$region0: #{_conv3x3_call.1}
  #allocation0 [shape = 'u32[]', space=smem, size = 0x4, offset = 0x4, fixed_abs, tag = 'smem constant byte address 0x4 - core index']
  #allocation1 [shape = 'u32[144,128]{1,0:T(1,128)}', space=vmem, size = 0x12000, scoped, tag = 'internal scratch']
  %s0 = inlined_call_operand.vmem [shape: bf16[2,326,3], index: 0, kind: input, shape index: {}]
  %s1 = inlined_call_operand.vmem [shape: bf16[9,3,128], index: 1, kind: input, shape index: {}]
  %s2 = inlined_call_operand.vmem [shape: f32[1,128], index: 2, kind: input, shape index: {}]
  %s3 = inlined_call_operand.vmem [shape: bf16[2,288,128], index: 3, kind: output, shape index: {}]
  %s4 = sld [smem:[#allocation0]]
  $region45: #{_conv3x3_call.1} parent=0
    _
  %s6 = ssub.s32 1, %s4
  %s7 = scalar_select 0, %s6, %s4
  loop: start=0, step=1, limit=4
  $region2: #{_conv3x3_call.1} parent=0 // loop_pre_header
    _
  $region3: #{_conv3x3_call.1} parent=0 // loop_header
    %s9 = sphi 0, %s13
    %p10 = scmp.ge.s32.totalorder %s9, 4
    %s16 = sphi 0, %s28
    %s17 = sphi 0, %s24
    %s18 = sphi 0, %s16
    %s19 = sphi 0, %s17
    %s20 = sphi 0, %s18
    %s21 = sphi 0, %s19
    %s31 = sphi 0, %s33
    %s34 = sphi 0, %s31
    %s35 = sphi 0, %s34
    %s51 = sphi 0, %s35
    %s57 = sphi 0, %s59
    %s60 = sphi 0, %s57
    %s61 = sphi 0, %s60
    %s77 = sphi 0, %s61
    %s83 = sphi 0, %s85
    %s86 = sphi 0, %s83
    %s87 = sphi 0, %s86
    %s103 = sphi 0, %s87
    %s111 = sphi 0, %s113
    %s114 = sphi 0, %s111
    %s115 = sphi 0, %s114
    %s131 = sphi 0, %s115
  $region4: #{_conv3x3_call.1} parent=0 // loop_header_branch
    %12 = sbr.rel (%p10) target = $region8
  $region5: #{_conv3x3_call.1} parent=0 // loop_body
    %s14 = ssub.s32 %s9, 1
    %s15 = ssub.s32 %s9, 2
    %s22 = sadd.s32 1, %s17
    %p23 = scmp.ge.s32.totalorder %s22, 1
    %s24 = scalar_select %p23, 0, %s22
    %s25 = sadd.s32 1, %s16
    %s26 = scalar_select %p23, %s25, %s16
    %p27 = scmp.ge.s32.totalorder %s26, 2
    %s28 = scalar_select %p27, 0, %s26
    %s29 = ssub.s32 %s16, %s28
    %p30 = scmp.eq.s32.totalorder %s29, 0
    %s32 = sadd.s32 %s31, 1
    %s33 = scalar_select %p30, %s31, %s32
    %p36 = pneg %p30
    %p37 = scmp.eq.s32.totalorder %s9, 1
    %p38 = por %p36, %p37
    %p39 = scmp.ne.s32.totalorder %s31, %s34
    %p40 = scmp.eq.s32.totalorder %s9, 0
    %p41 = por %p39, %p40
    %p42 = scmp.ne.s32.totalorder %s31, %s34
    %p43 = scmp.eq.s32.totalorder %s14, 1
    %p44 = por %p42, %p43
    %p45 = scmp.ne.s32.totalorder %s34, %s35
    %p46 = scmp.eq.s32.totalorder %s14, 0
    %p47 = por %p45, %p46
    %p48 = scmp.ne.s32.totalorder %s34, %s35
    %p49 = scmp.eq.s32.totalorder %s15, 1
    %p50 = por %p48, %p49
    %p52 = scmp.ne.s32.totalorder %s35, %s51
    %p53 = scmp.eq.s32.totalorder %s15, 0
    %p54 = por %p52, %p53
    %s55 = ssub.s32 %s17, %s24
    %p56 = scmp.eq.s32.totalorder %s55, 0
    %s58 = sadd.s32 %s57, 1
    %s59 = scalar_select %p56, %s57, %s58
    %p62 = pneg %p56
    %p63 = scmp.eq.s32.totalorder %s9, 1
    %p64 = por %p62, %p63
    %p65 = scmp.ne.s32.totalorder %s57, %s60
    %p66 = scmp.eq.s32.totalorder %s9, 0
    %p67 = por %p65, %p66
    %p68 = scmp.ne.s32.totalorder %s57, %s60
    %p69 = scmp.eq.s32.totalorder %s14, 1
    %p70 = por %p68, %p69
    %p71 = scmp.ne.s32.totalorder %s60, %s61
    %p72 = scmp.eq.s32.totalorder %s14, 0
    %p73 = por %p71, %p72
    %p74 = scmp.ne.s32.totalorder %s60, %s61
    %p75 = scmp.eq.s32.totalorder %s15, 1
    %p76 = por %p74, %p75
    %p78 = scmp.ne.s32.totalorder %s61, %s77
    %p79 = scmp.eq.s32.totalorder %s15, 0
    %p80 = por %p78, %p79
    %s81 = ssub.s32 %s17, %s24
    %p82 = scmp.eq.s32.totalorder %s81, 0
    %s84 = sadd.s32 %s83, 1
    %s85 = scalar_select %p82, %s83, %s84
    %p88 = pneg %p82
    %p89 = scmp.eq.s32.totalorder %s9, 1
    %p90 = por %p88, %p89
    %p91 = scmp.ne.s32.totalorder %s83, %s86
    %p92 = scmp.eq.s32.totalorder %s9, 0
    %p93 = por %p91, %p92
    %p94 = scmp.ne.s32.totalorder %s83, %s86
    %p95 = scmp.eq.s32.totalorder %s14, 1
    %p96 = por %p94, %p95
    %p97 = scmp.ne.s32.totalorder %s86, %s87
    %p98 = scmp.eq.s32.totalorder %s14, 0
    %p99 = por %p97, %p98
    %p100 = scmp.ne.s32.totalorder %s86, %s87
    %p101 = scmp.eq.s32.totalorder %s15, 1
    %p102 = por %p100, %p101
    %p104 = scmp.ne.s32.totalorder %s87, %s103
    %p105 = scmp.eq.s32.totalorder %s15, 0
    %p106 = por %p104, %p105
    %s107 = ssub.s32 %s16, %s28
    %s108 = ssub.s32 %s17, %s24
    %s109 = sor.u32 %s107, %s108
    %p110 = scmp.eq.s32.totalorder %s109, 0
    %s112 = sadd.s32 %s111, 1
    %s113 = scalar_select %p110, %s111, %s112
    %p116 = pneg %p110
    %p117 = scmp.eq.s32.totalorder %s9, 1
    %p118 = por %p116, %p117
    %p119 = scmp.ne.s32.totalorder %s111, %s114
    %p120 = scmp.eq.s32.totalorder %s9, 0
    %p121 = por %p119, %p120
    %p122 = scmp.ne.s32.totalorder %s111, %s114
    %p123 = scmp.eq.s32.totalorder %s14, 1
    %p124 = por %p122, %p123
    %p125 = scmp.ne.s32.totalorder %s114, %s115
    %p126 = scmp.eq.s32.totalorder %s14, 0
    %p127 = por %p125, %p126
    %p128 = scmp.ne.s32.totalorder %s114, %s115
    %p129 = scmp.eq.s32.totalorder %s15, 1
    %p130 = por %p128, %p129
    %p132 = scmp.ne.s32.totalorder %s115, %s131
    %p133 = scmp.eq.s32.totalorder %s15, 0
    %p134 = por %p132, %p133
    %p135 = scmp.le.s32.totalorder 1, %s9
    %p136 = scmp.lt.s32.totalorder %s9, 3
    %p137 = pnand %p135, %p136
    %p138 = pneg %p137
    // Predicated region
    $region9: #{_conv3x3_call.1} parent=5 // pred_check
      _
    $region10: #{_conv3x3_call.1} parent=5 // pred_check_branch
      %140 = sbr.rel (%p137) target = $region12
    $region11: #{_conv3x3_call.1} parent=5 // pred_region
      %s141 = ssub.s32 %s9, 1
      // Predicated region
      $region13: #{_conv3x3_call.1} parent=11 // pred_check
        %p142 = pneg %p73
      $region14: #{_conv3x3_call.1} parent=11 // pred_check_branch
        %144 = sbr.rel (%p142) target = $region16
      $region15: #{_conv3x3_call.1} parent=11 // pred_region
        %p145 = scmp.lt.s32.totalorder %s19, 0
        %s146 = scalar_select %p145, %s19, 0
        %s147 = smul.addr %s146, 2
        %s148 = scalar_lea.vmem %s1, %s147
      $region16: #{_conv3x3_call.1} parent=11 // pred_fallthru
        _
      // Predicated region
      $region17: #{_conv3x3_call.1} parent=11 // pred_check
        %p149 = pneg %p99
      $region18: #{_conv3x3_call.1} parent=11 // pred_check_branch
        %151 = sbr.rel (%p149) target = $region20
      $region19: #{_conv3x3_call.1} parent=11 // pred_region
        %p152 = scmp.lt.s32.totalorder %s19, 0
        %s153 = scalar_select %p152, %s19, 0
        %s154 = scalar_lea.vmem %s2, %s153
      $region20: #{_conv3x3_call.1} parent=11 // pred_fallthru
        _
    $region12: #{_conv3x3_call.1} parent=5 // pred_fallthru
      _
    %p155 = scmp.lt.s32.totalorder %s9, 2
    // Predicated region
    $region21: #{_conv3x3_call.1} parent=5 // pred_check
      %p156 = pneg %p155
    $region22: #{_conv3x3_call.1} parent=5 // pred_check_branch
      %158 = sbr.rel (%p156) target = $region24
    $region23: #{_conv3x3_call.1} parent=5 // pred_region
      // Predicated region
      $region25: #{_conv3x3_call.1} parent=23 // pred_check
        %p159 = pneg %p41
      $region26: #{_conv3x3_call.1} parent=23 // pred_check_branch
        %161 = sbr.rel (%p159) target = $region28
      $region27: #{_conv3x3_call.1} parent=23 // pred_region
        %p162 = scmp.lt.s32.totalorder %s16, 1
        %s163 = scalar_select %p162, %s16, 1
        %s164 = smul.addr %s163, 41
        %s165 = smul.addr %s164, 4
        %s166 = scalar_lea.vmem %s0, %s165
      $region28: #{_conv3x3_call.1} parent=23 // pred_fallthru
        _
    $region24: #{_conv3x3_call.1} parent=5 // pred_fallthru
      _
    %p167 = scmp.le.s32.totalorder 1, %s9
    %p168 = scmp.lt.s32.totalorder %s9, 3
    %p169 = pnand %p167, %p168
    %p170 = pneg %p169
    // Predicated region
    $region29: #{_conv3x3_call.1} parent=5 // pred_check
      _
    $region30: #{_conv3x3_call.1} parent=5 // pred_check_branch
      %172 = sbr.rel (%p169) target = $region32
    $region31: #{_conv3x3_call.1} parent=5 // pred_region
      %s173 = ssub.s32 %s9, 1
      %p174 = scmp.lt.s32.totalorder %s18, 1
      %s175 = scalar_select %p174, %s18, 1
      %s176 = smul.addr %s175, 41
      %s177 = smul.addr %s176, 4
      %s178 = scalar_lea.vmem %s0, %s177
      %p179 = pneg %p47
      %p180 = pneg %p44
      %p181 = scmp.lt.s32.totalorder %s19, 0
      %s182 = scalar_select %p181, %s19, 0
      %s183 = smul.addr %s182, 2
      %s184 = scalar_lea.vmem %s1, %s183
      %p185 = pneg %p73
      %p186 = pneg %p70
      %p187 = scmp.lt.s32.totalorder %s19, 0
      %s188 = scalar_select %p187, %s19, 0
      %s189 = scalar_lea.vmem %s2, %s188
      %p190 = pneg %p99
      %p191 = pneg %p96
      %p192 = pneg %p127
      %p193 = pneg %p124
      %p194 = scmp.lt.s32.totalorder %s18, 1
      %s195 = scalar_select %p194, %s18, 1
      %p196 = scmp.lt.s32.totalorder %s19, 0
      %s197 = scalar_select %p196, %s19, 0
      %s198 = smul.addr %s195, 36
      %s199 = sadd.s32 %s197, %s198
      %s200 = smul.addr %s199, 4
      %s201 = scalar_lea.vmem %s3, %s200
      %p202 = scmp.lt.s32.totalorder %s18, 1
      %s203 = scalar_select %p202, %s18, 1
      %s204 = smul.addr %s203, 41
      %s205 = smul.addr %s204, 4
      %s206 = scalar_lea.vmem %s0, %s205
      %p207 = scmp.lt.s32.totalorder %s19, 0
      %s208 = scalar_select %p207, %s19, 0
      %s209 = smul.addr %s208, 2
      %s210 = scalar_lea.vmem %s1, %s209
      %p211 = scmp.lt.s32.totalorder %s19, 0
      %s212 = scalar_select %p211, %s19, 0
      %s213 = scalar_lea.vmem %s2, %s212
      %p214 = scmp.lt.s32.totalorder %s18, 1
      %s215 = scalar_select %p214, %s18, 1
      %p216 = scmp.lt.s32.totalorder %s19, 0
      %s217 = scalar_select %p216, %s19, 0
      %s218 = smul.addr %s215, 36
      %s219 = sadd.s32 %s217, %s218
      %s220 = smul.addr %s219, 4
      %s221 = scalar_lea.vmem %s3, %s220
      %v223 = vld [vmem:[%s206] sm:$0xf]
      %v224 = vld [vmem:[%s206 + $0x4] sm:$0xf]
      %v225 = vld [vmem:[%s206 + $0x8] sm:$0xf]
      %v226 = vld [vmem:[%s206 + $0xc] sm:$0xf]
      %v227 = vld [vmem:[%s206 + $0x10] sm:$0xf]
      %v228 = vld [vmem:[%s206 + $0x14] sm:$0xf]
      %v229 = vld [vmem:[%s206 + $0x18] sm:$0xf]
      %v230 = vld [vmem:[%s206 + $0x1c] sm:$0xf]
      %v231 = vld [vmem:[%s206 + $0x20] sm:$0xf]
      %v232 = vld [vmem:[%s206 + $0x24] sm:$0xf]
      %v233 = vld [vmem:[%s206 + $0x28] sm:$0xf]
      %v234 = vld [vmem:[%s206 + $0x2c] sm:$0xf]
      %v235 = vld [vmem:[%s206 + $0x30] sm:$0xf]
      %v236 = vld [vmem:[%s206 + $0x34] sm:$0xf]
      %v237 = vld [vmem:[%s206 + $0x38] sm:$0xf]
      %v238 = vld [vmem:[%s206 + $0x3c] sm:$0xf]
      %v239 = vld [vmem:[%s206 + $0x40] sm:$0xf]
      %v240 = vld [vmem:[%s206 + $0x44] sm:$0xf]
      %v241 = vld [vmem:[%s206 + $0x48] sm:$0xf]
      %v242 = vld [vmem:[%s206 + $0x4c] sm:$0xf]
      %v243 = vld [vmem:[%s206 + $0x50] sm:$0xf]
      %v244 = vld [vmem:[%s206 + $0x54] sm:$0xf]
      %v245 = vld [vmem:[%s206 + $0x58] sm:$0xf]
      %v246 = vld [vmem:[%s206 + $0x5c] sm:$0xf]
      %v247 = vld [vmem:[%s206 + $0x60] sm:$0xf]
      %v248 = vld [vmem:[%s206 + $0x64] sm:$0xf]
      %v249 = vld [vmem:[%s206 + $0x68] sm:$0xf]
      %v250 = vld [vmem:[%s206 + $0x6c] sm:$0xf]
      %v251 = vld [vmem:[%s206 + $0x70] sm:$0xf]
      %v252 = vld [vmem:[%s206 + $0x74] sm:$0xf]
      %v253 = vld [vmem:[%s206 + $0x78] sm:$0xf]
      %v254 = vld [vmem:[%s206 + $0x7c] sm:$0xf]
      %v255 = vld [vmem:[%s206 + $0x80] sm:$0xf]
      %v256 = vld [vmem:[%s206 + $0x84] sm:$0xf]
      %v257 = vld [vmem:[%s206 + $0x88] sm:$0xf]
      %v258 = vld [vmem:[%s206 + $0x8c] sm:$0xf]
      %v259 = vld [vmem:[%s210] sm:$0x3]
      %v260 = vld [vmem:[%s206 + $0x90] sm:$0x1]
      %s261 = scalar_lea.vmem %s210, 2
      %v262 = vld [vmem:[%s261] sm:$0x3]
      %v300 = vunpack.c.l.b16 %v223
      %v301 = vunpack.c.l.b16 %v224
      %v302 = vunpack.c.l.b16 %v225
      %v303 = vunpack.c.l.b16 %v226
      %v304 = vunpack.c.l.b16 %v227
      %v305 = vunpack.c.l.b16 %v228
      %v306 = vunpack.c.l.b16 %v229
      %v307 = vunpack.c.l.b16 %v230
      %v308 = vunpack.c.l.b16 %v231
      %v309 = vunpack.c.l.b16 %v232
      %v310 = vunpack.c.l.b16 %v233
      %v311 = vunpack.c.l.b16 %v234
      %v312 = vunpack.c.l.b16 %v235
      %v313 = vunpack.c.l.b16 %v236
      %v314 = vunpack.c.l.b16 %v237
      %v315 = vunpack.c.l.b16 %v238
      %v316 = vunpack.c.l.b16 %v239
      %v317 = vunpack.c.l.b16 %v240
      %v318 = vunpack.c.l.b16 %v241
      %v319 = vunpack.c.l.b16 %v242
      %v320 = vunpack.c.l.b16 %v243
      %v321 = vunpack.c.l.b16 %v244
      %v322 = vunpack.c.l.b16 %v245
      %v323 = vunpack.c.l.b16 %v246
      %v324 = vunpack.c.l.b16 %v247
      %v325 = vunpack.c.l.b16 %v248
      %v326 = vunpack.c.l.b16 %v249
      %v327 = vunpack.c.l.b16 %v250
      %v328 = vunpack.c.l.b16 %v251
      %v329 = vunpack.c.l.b16 %v252
      %v330 = vunpack.c.l.b16 %v253
      %v331 = vunpack.c.l.b16 %v254
      %v332 = vunpack.c.l.b16 %v255
      %v333 = vunpack.c.l.b16 %v256
      %v334 = vunpack.c.l.b16 %v257
      %v335 = vunpack.c.l.b16 %v258
      %v336 = vunpack.c.l.b16 %v260
      %v337 = vpack.c.b16 %v301, %v300
      %v338 = vpack.c.b16 %v303, %v302
      %v339 = vpack.c.b16 %v305, %v304
      %v340 = vpack.c.b16 %v307, %v306
      %v341 = vpack.c.b16 %v309, %v308
      %v342 = vpack.c.b16 %v311, %v310
      %v343 = vpack.c.b16 %v313, %v312
      %v344 = vpack.c.b16 %v315, %v314
      %v345 = vpack.c.b16 %v317, %v316
      %v346 = vpack.c.b16 %v319, %v318
      %v347 = vpack.c.b16 %v321, %v320
      %v348 = vpack.c.b16 %v323, %v322
      %v349 = vpack.c.b16 %v325, %v324
      %v350 = vpack.c.b16 %v327, %v326
      %v351 = vpack.c.b16 %v329, %v328
      %v352 = vpack.c.b16 %v331, %v330
      %v353 = vpack.c.b16 %v333, %v332
      %v354 = vpack.c.b16 %v335, %v334
      %v355 = vpack.c.b16 %v336, %v336
      %vm356 = vsmask.f32 7424
      %v358 = vshrl.u32 %v337, 16
      %v360 = vshll.u32 %v337, 16
      %v362 = vrot.slane %v360, 1
      %v363 = vor.u32 %v358, %v362
      %v365 = vshll.u32 %v338, 16
      %v367 = vrot.slane %v365, 1
      %v368 = vsel %vm356, %v363, %v367
      %v369 = vshrl.u32 %v338, 16
      %v371 = vor.u32 %v369, %v367
      %v373 = vshll.u32 %v339, 16
      %v375 = vrot.slane %v373, 1
      %v376 = vsel %vm356, %v371, %v375
      %v377 = vshrl.u32 %v339, 16
      %v379 = vor.u32 %v377, %v375
      %v381 = vshll.u32 %v340, 16
      %v383 = vrot.slane %v381, 1
      %v384 = vsel %vm356, %v379, %v383
      %v385 = vshrl.u32 %v340, 16
      %v387 = vor.u32 %v385, %v383
      %v389 = vshll.u32 %v341, 16
      %v391 = vrot.slane %v389, 1
      %v392 = vsel %vm356, %v387, %v391
      %v393 = vshrl.u32 %v341, 16
      %v395 = vor.u32 %v393, %v391
      %v397 = vshll.u32 %v342, 16
      %v399 = vrot.slane %v397, 1
      %v400 = vsel %vm356, %v395, %v399
      %v401 = vshrl.u32 %v342, 16
      %v403 = vor.u32 %v401, %v399
      %v405 = vshll.u32 %v343, 16
      %v407 = vrot.slane %v405, 1
      %v408 = vsel %vm356, %v403, %v407
      %v409 = vshrl.u32 %v343, 16
      %v411 = vor.u32 %v409, %v407
      %v413 = vshll.u32 %v344, 16
      %v415 = vrot.slane %v413, 1
      %v416 = vsel %vm356, %v411, %v415
      %v417 = vshrl.u32 %v344, 16
      %v419 = vor.u32 %v417, %v415
      %v421 = vshll.u32 %v345, 16
      %v423 = vrot.slane %v421, 1
      %v424 = vsel %vm356, %v419, %v423
      %v425 = vshrl.u32 %v345, 16
      %v427 = vor.u32 %v425, %v423
      %v429 = vshll.u32 %v346, 16
      %v431 = vrot.slane %v429, 1
      %v432 = vsel %vm356, %v427, %v431
      %v433 = vshrl.u32 %v346, 16
      %v435 = vor.u32 %v433, %v431
      %v437 = vshll.u32 %v347, 16
      %v439 = vrot.slane %v437, 1
      %v440 = vsel %vm356, %v435, %v439
      %v441 = vshrl.u32 %v347, 16
      %v443 = vor.u32 %v441, %v439
      %v445 = vshll.u32 %v348, 16
      %v447 = vrot.slane %v445, 1
      %v448 = vsel %vm356, %v443, %v447
      %v449 = vshrl.u32 %v348, 16
      %v451 = vor.u32 %v449, %v447
      %v453 = vshll.u32 %v349, 16
      %v455 = vrot.slane %v453, 1
      %v456 = vsel %vm356, %v451, %v455
      %v457 = vshrl.u32 %v349, 16
      %v459 = vor.u32 %v457, %v455
      %v461 = vshll.u32 %v350, 16
      %v463 = vrot.slane %v461, 1
      %v464 = vsel %vm356, %v459, %v463
      %v465 = vshrl.u32 %v350, 16
      %v467 = vor.u32 %v465, %v463
      %v469 = vshll.u32 %v351, 16
      %v471 = vrot.slane %v469, 1
      %v472 = vsel %vm356, %v467, %v471
      %v473 = vshrl.u32 %v351, 16
      %v475 = vor.u32 %v473, %v471
      %v477 = vshll.u32 %v352, 16
      %v479 = vrot.slane %v477, 1
      %v480 = vsel %vm356, %v475, %v479
      %v481 = vshrl.u32 %v352, 16
      %v483 = vor.u32 %v481, %v479
      %v485 = vshll.u32 %v353, 16
      %v487 = vrot.slane %v485, 1
      %v488 = vsel %vm356, %v483, %v487
      %v489 = vshrl.u32 %v353, 16
      %v491 = vor.u32 %v489, %v487
      %v493 = vshll.u32 %v354, 16
      %v495 = vrot.slane %v493, 1
      %v496 = vsel %vm356, %v491, %v495
      %v497 = vshrl.u32 %v354, 16
      %v499 = vor.u32 %v497, %v495
      %v501 = vshll.u32 %v355, 16
      %v503 = vrot.slane %v501, 1
      %v504 = vsel %vm356, %v499, %v503
      %vm505 = vcmask 23552
      %v507 = vsel %vm505, %v368, 0
      %v510 = vsel %vm505, %v376, 0
      %v513 = vsel %vm505, %v384, 0
      %v516 = vsel %vm505, %v392, 0
      %v519 = vsel %vm505, %v400, 0
      %v522 = vsel %vm505, %v408, 0
      %v525 = vsel %vm505, %v416, 0
      %v528 = vsel %vm505, %v424, 0
      %v531 = vsel %vm505, %v432, 0
      %v534 = vsel %vm505, %v440, 0
      %v537 = vsel %vm505, %v448, 0
      %v540 = vsel %vm505, %v456, 0
      %v543 = vsel %vm505, %v464, 0
      %v546 = vsel %vm505, %v472, 0
      %v549 = vsel %vm505, %v480, 0
      %v552 = vsel %vm505, %v488, 0
      %v555 = vsel %vm505, %v496, 0
      %v558 = vsel %vm505, %v504, 0
      %vm560 = vcmask 1040384
      %vm561 = vcmask 1041408
      %v562 = vsel %vm560, 4294967295, 65535
      %v563 = vsel %vm561, %v562, 0
      %v565 = vand.u32 %v262, %v563
      %567 = vmatprep.subr.bf16.mxu0 0
      %568 = vmatpush1.bf16.msra.mxu0 %v565
      %569 = vmatprep.subr.bf16.mxu0 0
      %570 = vmatpush1.bf16.msra.mxu0 0
      %571 = vmatprep.subr.bf16.mxu0 0
      %572 = vmatpush1.bf16.msra.mxu0 0
      %573 = vmatprep.subr.bf16.mxu0 0
      %574 = vmatpush1.bf16.msra.mxu0 0
      %575 = vmatprep.subr.bf16.mxu0 0
      %576 = vmatpush1.bf16.msra.mxu0 0
      %577 = vmatprep.subr.bf16.mxu0 0
      %578 = vmatpush1.bf16.msra.mxu0 0
      %579 = vmatprep.subr.bf16.mxu0 0
      %580 = vmatpush1.bf16.msra.mxu0 0
      %581 = vmatprep.subr.bf16.mxu0 0
      %582 = vmatpush1.bf16.msra.mxu0 0
      %583 = vmatprep.subr.bf16.mxu0 0
      %584 = vmatpush1.bf16.msra.mxu0 0
      %585 = vmatprep.subr.bf16.mxu0 0
      %586 = vmatpush1.bf16.msra.mxu0 0
      %587 = vmatprep.subr.bf16.mxu0 0
      %588 = vmatpush1.bf16.msra.mxu0 0
      %589 = vmatprep.subr.bf16.mxu0 0
      %590 = vmatpush1.bf16.msra.mxu0 0
      %591 = vmatprep.subr.bf16.mxu0 0
      %592 = vmatpush1.bf16.msra.mxu0 0
      %593 = vmatprep.subr.bf16.mxu0 0
      %594 = vmatpush1.bf16.msra.mxu0 0
      %595 = vmatprep.subr.bf16.mxu0 0
      %596 = vmatpush1.bf16.msra.mxu0 0
      %597 = vmatprep.subr.bf16.mxu0 0
      %598 = vmatpush1.bf16.msra.mxu0 0
      %599 = vmatprep.mubr.bf16.mxu0 0
      %600 = vmatmul.mubr.bf16.gmra.mrb[0].mxu0 %v507
      %v601 = vpop.f32.mrb[0].mxu0
      %v602 = vadd.f32 0.0, %v601
      %v603 = vpop.f32.mrb[0].mxu0
      %v604 = vpop.f32.mrb[0].mxu0
      %v605 = vadd.f32 0.0, %v604
      %v606 = vpop.f32.mrb[0].mxu0
      %607 = vmatprep.mubr.bf16.mxu0 0
      %608 = vmatmul.mubr.bf16.gmra.mrb[0].mxu0 %v510
      %v609 = vpop.f32.mrb[0].mxu0
      %v610 = vadd.f32 0.0, %v609
      %v611 = vpop.f32.mrb[0].mxu0
      %v612 = vpop.f32.mrb[0].mxu0
      %v613 = vadd.f32 0.0, %v612
      %v614 = vpop.f32.mrb[0].mxu0
      %615 = vmatprep.mubr.bf16.mxu0 0
      %616 = vmatmul.mubr.bf16.gmra.mrb[0].mxu0 %v513
      %v617 = vpop.f32.mrb[0].mxu0
      %v618 = vadd.f32 0.0, %v617
      %v619 = vpop.f32.mrb[0].mxu0
      %v620 = vpop.f32.mrb[0].mxu0
      %v621 = vadd.f32 0.0, %v620
      %v622 = vpop.f32.mrb[0].mxu0
      %623 = vmatprep.mubr.bf16.mxu0 0
      %624 = vmatmul.mubr.bf16.gmra.mrb[0].mxu0 %v516
      %v625 = vpop.f32.mrb[0].mxu0
      %v626 = vadd.f32 0.0, %v625
      %v627 = vpop.f32.mrb[0].mxu0
      %v628 = vpop.f32.mrb[0].mxu0
      %v629 = vadd.f32 0.0, %v628
      %v630 = vpop.f32.mrb[0].mxu0
      %631 = vmatprep.mubr.bf16.mxu0 0
      %632 = vmatmul.mubr.bf16.gmra.mrb[0].mxu0 %v519
      %v633 = vpop.f32.mrb[0].mxu0
      %v634 = vadd.f32 0.0, %v633
      %v635 = vpop.f32.mrb[0].mxu0
      %v636 = vpop.f32.mrb[0].mxu0
      %v637 = vadd.f32 0.0, %v636
      %v638 = vpop.f32.mrb[0].mxu0
      %639 = vmatprep.mubr.bf16.mxu0 0
      %640 = vmatmul.mubr.bf16.gmra.mrb[0].mxu0 %v522
      %v641 = vpop.f32.mrb[0].mxu0
      %v642 = vadd.f32 0.0, %v641
      %v643 = vpop.f32.mrb[0].mxu0
      %v644 = vpop.f32.mrb[0].mxu0
      %v645 = vadd.f32 0.0, %v644
      %v646 = vpop.f32.mrb[0].mxu0
      %647 = vmatprep.mubr.bf16.mxu0 0
      %648 = vmatmul.mubr.bf16.gmra.mrb[0].mxu0 %v525
      %v649 = vpop.f32.mrb[0].mxu0
      %v650 = vadd.f32 0.0, %v649
      %v651 = vpop.f32.mrb[0].mxu0
      %v652 = vpop.f32.mrb[0].mxu0
      %v653 = vadd.f32 0.0, %v652
      %v654 = vpop.f32.mrb[0].mxu0
      %655 = vmatprep.mubr.bf16.mxu0 0
      %656 = vmatmul.mubr.bf16.gmra.mrb[0].mxu0 %v528
      %v657 = vpop.f32.mrb[0].mxu0
      %v658 = vadd.f32 0.0, %v657
      %v659 = vpop.f32.mrb[0].mxu0
      %v660 = vpop.f32.mrb[0].mxu0
      %v661 = vadd.f32 0.0, %v660
      %v662 = vpop.f32.mrb[0].mxu0
      %663 = vmatprep.mubr.bf16.mxu0 0
      %664 = vmatmul.mubr.bf16.gmra.mrb[0].mxu0 %v531
      %v665 = vpop.f32.mrb[0].mxu0
      %v666 = vadd.f32 0.0, %v665
      %v667 = vpop.f32.mrb[0].mxu0
      %v668 = vpop.f32.mrb[0].mxu0
      %v669 = vadd.f32 0.0, %v668
      %v670 = vpop.f32.mrb[0].mxu0
      %671 = vmatprep.mubr.bf16.mxu0 0
      %672 = vmatmul.mubr.bf16.gmra.mrb[0].mxu0 %v534
      %v673 = vpop.f32.mrb[0].mxu0
      %v674 = vadd.f32 0.0, %v673
      %v675 = vpop.f32.mrb[0].mxu0
      %v676 = vpop.f32.mrb[0].mxu0
      %v677 = vadd.f32 0.0, %v676
      %v678 = vpop.f32.mrb[0].mxu0
      %679 = vmatprep.mubr.bf16.mxu0 0
      %680 = vmatmul.mubr.bf16.gmra.mrb[0].mxu0 %v537
      %v681 = vpop.f32.mrb[0].mxu0
      %v682 = vadd.f32 0.0, %v681
      %v683 = vpop.f32.mrb[0].mxu0
      %v684 = vpop.f32.mrb[0].mxu0
      %v685 = vadd.f32 0.0, %v684
      %v686 = vpop.f32.mrb[0].mxu0
      %687 = vmatprep.mubr.bf16.mxu0 0
      %688 = vmatmul.mubr.bf16.gmra.mrb[0].mxu0 %v540
      %v689 = vpop.f32.mrb[0].mxu0
      %v690 = vadd.f32 0.0, %v689
      %v691 = vpop.f32.mrb[0].mxu0
      %v692 = vpop.f32.mrb[0].mxu0
      %v693 = vadd.f32 0.0, %v692
      %v694 = vpop.f32.mrb[0].mxu0
      %695 = vmatprep.mubr.bf16.mxu0 0
      %696 = vmatmul.mubr.bf16.gmra.mrb[0].mxu0 %v543
      %v697 = vpop.f32.mrb[0].mxu0
      %v698 = vadd.f32 0.0, %v697
      %v699 = vpop.f32.mrb[0].mxu0
      %v700 = vpop.f32.mrb[0].mxu0
      %v701 = vadd.f32 0.0, %v700
      %v702 = vpop.f32.mrb[0].mxu0
      %703 = vmatprep.mubr.bf16.mxu0 0
      %704 = vmatmul.mubr.bf16.gmra.mrb[0].mxu0 %v546
      %v705 = vpop.f32.mrb[0].mxu0
      %v706 = vadd.f32 0.0, %v705
      %v707 = vpop.f32.mrb[0].mxu0
      %v708 = vpop.f32.mrb[0].mxu0
      %v709 = vadd.f32 0.0, %v708
      %v710 = vpop.f32.mrb[0].mxu0
      %711 = vmatprep.mubr.bf16.mxu0 0
      %712 = vmatmul.mubr.bf16.gmra.mrb[0].mxu0 %v549
      %v713 = vpop.f32.mrb[0].mxu0
      %v714 = vadd.f32 0.0, %v713
      %v715 = vpop.f32.mrb[0].mxu0
      %v716 = vpop.f32.mrb[0].mxu0
      %v717 = vadd.f32 0.0, %v716
      %v718 = vpop.f32.mrb[0].mxu0
      %719 = vmatprep.mubr.bf16.mxu0 0
      %720 = vmatmul.mubr.bf16.gmra.mrb[0].mxu0 %v552
      %v721 = vpop.f32.mrb[0].mxu0
      %v722 = vadd.f32 0.0, %v721
      %v723 = vpop.f32.mrb[0].mxu0
      %v724 = vpop.f32.mrb[0].mxu0
      %v725 = vadd.f32 0.0, %v724
      %v726 = vpop.f32.mrb[0].mxu0
      %727 = vmatprep.mubr.bf16.mxu0 0
      %728 = vmatmul.mubr.bf16.gmra.mrb[0].mxu0 %v555
      %v729 = vpop.f32.mrb[0].mxu0
      %v730 = vadd.f32 0.0, %v729
      %v731 = vpop.f32.mrb[0].mxu0
      %v732 = vpop.f32.mrb[0].mxu0
      %v733 = vadd.f32 0.0, %v732
      %v734 = vpop.f32.mrb[0].mxu0
      %735 = vmatprep.mubr.bf16.mxu0 0
      %736 = vmatmul.mubr.bf16.gmra.mrb[0].mxu0 %v558
      %v737 = vpop.f32.mrb[0].mxu0
      %v738 = vadd.f32 0.0, %v737
      %v739 = vpop.f32.mrb[0].mxu0
      %v740 = vpop.f32.mrb[0].mxu0
      %v741 = vadd.f32 0.0, %v740
      %v742 = vpop.f32.mrb[0].mxu0
      %743 = vdwg.mxu0
      %v744 = vsel %vm505, %v337, 0
      %v746 = vsel %vm505, %v338, 0
      %v748 = vsel %vm505, %v339, 0
      %v750 = vsel %vm505, %v340, 0
      %v752 = vsel %vm505, %v341, 0
      %v754 = vsel %vm505, %v342, 0
      %v756 = vsel %vm505, %v343, 0
      %v758 = vsel %vm505, %v344, 0
      %v760 = vsel %vm505, %v345, 0
      %v762 = vsel %vm505, %v346, 0
      %v764 = vsel %vm505, %v347, 0
      %v766 = vsel %vm505, %v348, 0
      %v768 = vsel %vm505, %v349, 0
      %v770 = vsel %vm505, %v350, 0
      %v772 = vsel %vm505, %v351, 0
      %v774 = vsel %vm505, %v352, 0
      %v776 = vsel %vm505, %v353, 0
      %v778 = vsel %vm505, %v354, 0
      %v781 = vand.u32 %v259, %v563
      %783 = vmatprep.subr.bf16.mxu0 0
      %784 = vmatpush1.bf16.msra.mxu0 %v781
      %785 = vmatprep.subr.bf16.mxu0 0
      %786 = vmatpush1.bf16.msra.mxu0 0
      %787 = vmatprep.subr.bf16.mxu0 0
      %788 = vmatpush1.bf16.msra.mxu0 0
      %789 = vmatprep.subr.bf16.mxu0 0
      %790 = vmatpush1.bf16.msra.mxu0 0
      %791 = vmatprep.subr.bf16.mxu0 0
      %792 = vmatpush1.bf16.msra.mxu0 0
      %793 = vmatprep.subr.bf16.mxu0 0
      %794 = vmatpush1.bf16.msra.mxu0 0
      %795 = vmatprep.subr.bf16.mxu0 0
      %796 = vmatpush1.bf16.msra.mxu0 0
      %797 = vmatprep.subr.bf16.mxu0 0
      %798 = vmatpush1.bf16.msra.mxu0 0
      %799 = vmatprep.subr.bf16.mxu0 0
      %800 = vmatpush1.bf16.msra.mxu0 0
      %801 = vmatprep.subr.bf16.mxu0 0
      %802 = vmatpush1.bf16.msra.mxu0 0
      %803 = vmatprep.subr.bf16.mxu0 0
      %804 = vmatpush1.bf16.msra.mxu0 0
      %805 = vmatprep.subr.bf16.mxu0 0
      %806 = vmatpush1.bf16.msra.mxu0 0
      %807 = vmatprep.subr.bf16.mxu0 0
      %808 = vmatpush1.bf16.msra.mxu0 0
      %809 = vmatprep.subr.bf16.mxu0 0
      %810 = vmatpush1.bf16.msra.mxu0 0
      %811 = vmatprep.subr.bf16.mxu0 0
      %812 = vmatpush1.bf16.msra.mxu0 0
      %813 = vmatprep.subr.bf16.mxu0 0
      %814 = vmatpush1.bf16.msra.mxu0 0
      %815 = vmatprep.mubr.bf16.mxu0 0
      %816 = vmatmul.mubr.bf16.gmra.mrb[0].mxu0 %v744
      %v817 = vpop.f32.mrb[0].mxu0
      %v818 = vadd.f32 %v602, %v817
      %v819 = vpop.f32.mrb[0].mxu0
      %v820 = vpop.f32.mrb[0].mxu0
      %v821 = vadd.f32 %v605, %v820
      %v822 = vpop.f32.mrb[0].mxu0
      %823 = vmatprep.mubr.bf16.mxu0 0
      %824 = vmatmul.mubr.bf16.gmra.mrb[0].mxu0 %v746
      %v825 = vpop.f32.mrb[0].mxu0
      %v826 = vadd.f32 %v610, %v825
      %v827 = vpop.f32.mrb[0].mxu0
      %v828 = vpop.f32.mrb[0].mxu0
      %v829 = vadd.f32 %v613, %v828
      %v830 = vpop.f32.mrb[0].mxu0
      %831 = vmatprep.mubr.bf16.mxu0 0
      %832 = vmatmul.mubr.bf16.gmra.mrb[0].mxu0 %v748
      %v833 = vpop.f32.mrb[0].mxu0
      %v834 = vadd.f32 %v618, %v833
      %v835 = vpop.f32.mrb[0].mxu0
      %v836 = vpop.f32.mrb[0].mxu0
      %v837 = vadd.f32 %v621, %v836
      %v838 = vpop.f32.mrb[0].mxu0
      %839 = vmatprep.mubr.bf16.mxu0 0
      %840 = vmatmul.mubr.bf16.gmra.mrb[0].mxu0 %v750
      %v841 = vpop.f32.mrb[0].mxu0
      %v842 = vadd.f32 %v626, %v841
      %v843 = vpop.f32.mrb[0].mxu0
      %v844 = vpop.f32.mrb[0].mxu0
      %v845 = vadd.f32 %v629, %v844
      %v846 = vpop.f32.mrb[0].mxu0
      %847 = vmatprep.mubr.bf16.mxu0 0
      %848 = vmatmul.mubr.bf16.gmra.mrb[0].mxu0 %v752
      %v849 = vpop.f32.mrb[0].mxu0
      %v850 = vadd.f32 %v634, %v849
      %v851 = vpop.f32.mrb[0].mxu0
      %v852 = vpop.f32.mrb[0].mxu0
      %v853 = vadd.f32 %v637, %v852
      %v854 = vpop.f32.mrb[0].mxu0
      %855 = vmatprep.mubr.bf16.mxu0 0
      %856 = vmatmul.mubr.bf16.gmra.mrb[0].mxu0 %v754
      %v857 = vpop.f32.mrb[0].mxu0
      %v858 = vadd.f32 %v642, %v857
      %v859 = vpop.f32.mrb[0].mxu0
      %v860 = vpop.f32.mrb[0].mxu0
      %v861 = vadd.f32 %v645, %v860
      %v862 = vpop.f32.mrb[0].mxu0
      %863 = vmatprep.mubr.bf16.mxu0 0
      %864 = vmatmul.mubr.bf16.gmra.mrb[0].mxu0 %v756
      %v865 = vpop.f32.mrb[0].mxu0
      %v866 = vadd.f32 %v650, %v865
      %v867 = vpop.f32.mrb[0].mxu0
      %v868 = vpop.f32.mrb[0].mxu0
      %v869 = vadd.f32 %v653, %v868
      %v870 = vpop.f32.mrb[0].mxu0
      %871 = vmatprep.mubr.bf16.mxu0 0
      %872 = vmatmul.mubr.bf16.gmra.mrb[0].mxu0 %v758
      %v873 = vpop.f32.mrb[0].mxu0
      %v874 = vadd.f32 %v658, %v873
      %v875 = vpop.f32.mrb[0].mxu0
      %v876 = vpop.f32.mrb[0].mxu0
      %v877 = vadd.f32 %v661, %v876
      %v878 = vpop.f32.mrb[0].mxu0
      %879 = vmatprep.mubr.bf16.mxu0 0
      %880 = vmatmul.mubr.bf16.gmra.mrb[0].mxu0 %v760
      %v881 = vpop.f32.mrb[0].mxu0
      %v882 = vadd.f32 %v666, %v881
      %v883 = vpop.f32.mrb[0].mxu0
      %v884 = vpop.f32.mrb[0].mxu0
      %v885 = vadd.f32 %v669, %v884
      %v886 = vpop.f32.mrb[0].mxu0
      %887 = vmatprep.mubr.bf16.mxu0 0
      %888 = vmatmul.mubr.bf16.gmra.mrb[0].mxu0 %v762
      %v889 = vpop.f32.mrb[0].mxu0
      %v890 = vadd.f32 %v674, %v889
      %v891 = vpop.f32.mrb[0].mxu0
      %v892 = vpop.f32.mrb[0].mxu0
      %v893 = vadd.f32 %v677, %v892
      %v894 = vpop.f32.mrb[0].mxu0
      %895 = vmatprep.mubr.bf16.mxu0 0
      %896 = vmatmul.mubr.bf16.gmra.mrb[0].mxu0 %v764
      %v897 = vpop.f32.mrb[0].mxu0
      %v898 = vadd.f32 %v682, %v897
      %v899 = vpop.f32.mrb[0].mxu0
      %v900 = vpop.f32.mrb[0].mxu0
      %v901 = vadd.f32 %v685, %v900
      %v902 = vpop.f32.mrb[0].mxu0
      %903 = vmatprep.mubr.bf16.mxu0 0
      %904 = vmatmul.mubr.bf16.gmra.mrb[0].mxu0 %v766
      %v905 = vpop.f32.mrb[0].mxu0
      %v906 = vadd.f32 %v690, %v905
      %v907 = vpop.f32.mrb[0].mxu0
      %v908 = vpop.f32.mrb[0].mxu0
      %v909 = vadd.f32 %v693, %v908
      %v910 = vpop.f32.mrb[0].mxu0
      %911 = vmatprep.mubr.bf16.mxu0 0
      %912 = vmatmul.mubr.bf16.gmra.mrb[0].mxu0 %v768
      %v913 = vpop.f32.mrb[0].mxu0
      %v914 = vadd.f32 %v698, %v913
      %v915 = vpop.f32.mrb[0].mxu0
      %v916 = vpop.f32.mrb[0].mxu0
      %v917 = vadd.f32 %v701, %v916
      %v918 = vpop.f32.mrb[0].mxu0
      %919 = vmatprep.mubr.bf16.mxu0 0
      %920 = vmatmul.mubr.bf16.gmra.mrb[0].mxu0 %v770
      %v921 = vpop.f32.mrb[0].mxu0
      %v922 = vadd.f32 %v706, %v921
      %v923 = vpop.f32.mrb[0].mxu0
      %v924 = vpop.f32.mrb[0].mxu0
      %v925 = vadd.f32 %v709, %v924
      %v926 = vpop.f32.mrb[0].mxu0
      %927 = vmatprep.mubr.bf16.mxu0 0
      %928 = vmatmul.mubr.bf16.gmra.mrb[0].mxu0 %v772
      %v929 = vpop.f32.mrb[0].mxu0
      %v930 = vadd.f32 %v714, %v929
      %v931 = vpop.f32.mrb[0].mxu0
      %v932 = vpop.f32.mrb[0].mxu0
      %v933 = vadd.f32 %v717, %v932
      %v934 = vpop.f32.mrb[0].mxu0
      %935 = vmatprep.mubr.bf16.mxu0 0
      %936 = vmatmul.mubr.bf16.gmra.mrb[0].mxu0 %v774
      %v937 = vpop.f32.mrb[0].mxu0
      %v938 = vadd.f32 %v722, %v937
      %v939 = vpop.f32.mrb[0].mxu0
      %v940 = vpop.f32.mrb[0].mxu0
      %v941 = vadd.f32 %v725, %v940
      %v942 = vpop.f32.mrb[0].mxu0
      %943 = vmatprep.mubr.bf16.mxu0 0
      %944 = vmatmul.mubr.bf16.gmra.mrb[0].mxu0 %v776
      %v945 = vpop.f32.mrb[0].mxu0
      %v946 = vadd.f32 %v730, %v945
      %v947 = vpop.f32.mrb[0].mxu0
      %v948 = vpop.f32.mrb[0].mxu0
      %v949 = vadd.f32 %v733, %v948
      %v950 = vpop.f32.mrb[0].mxu0
      %951 = vmatprep.mubr.bf16.mxu0 0
      %952 = vmatmul.mubr.bf16.gmra.mrb[0].mxu0 %v778
      %v953 = vpop.f32.mrb[0].mxu0
      %v954 = vadd.f32 %v738, %v953
      %v955 = vpop.f32.mrb[0].mxu0
      %v956 = vpop.f32.mrb[0].mxu0
      %v957 = vadd.f32 %v741, %v956
      %v958 = vpop.f32.mrb[0].mxu0
      %959 = vdwg.mxu0
      %v960 = vld [vmem:[%s206] sm:$0xe]
      %s961 = scalar_lea.vmem %s210, 4
      %v962 = vld [vmem:[%s961] sm:$0x3]
      %v964 = vunpack.c.l.b16 %v960
      %v965 = vpack.c.b16 %v301, %v964
      %vm966 = vcmask 1046528
      %v967 = vrot.slane %v965, 1
      %v968 = vrot.slane %v338, 1
      %v969 = vsel %vm966, %v967, %v968
      %v970 = vrot.slane %v339, 1
      %v971 = vsel %vm966, %v968, %v970
      %v972 = vrot.slane %v340, 1
      %v973 = vsel %vm966, %v970, %v972
      %v974 = vrot.slane %v341, 1
      %v975 = vsel %vm966, %v972, %v974
      %v976 = vrot.slane %v342, 1
      %v977 = vsel %vm966, %v974, %v976
      %v978 = vrot.slane %v343, 1
      %v979 = vsel %vm966, %v976, %v978
      %v980 = vrot.slane %v344, 1
      %v981 = vsel %vm966, %v978, %v980
      %v982 = vrot.slane %v345, 1
      %v983 = vsel %vm966, %v980, %v982
      %v984 = vrot.slane %v346, 1
      %v985 = vsel %vm966, %v982, %v984
      %v986 = vrot.slane %v347, 1
      %v987 = vsel %vm966, %v984, %v986
      %v988 = vrot.slane %v348, 1
      %v989 = vsel %vm966, %v986, %v988
      %v990 = vrot.slane %v349, 1
      %v991 = vsel %vm966, %v988, %v990
      %v992 = vrot.slane %v350, 1
      %v993 = vsel %vm966, %v990, %v992
      %v994 = vrot.slane %v351, 1
      %v995 = vsel %vm966, %v992, %v994
      %v996 = vrot.slane %v352, 1
      %v997 = vsel %vm966, %v994, %v996
      %v998 = vrot.slane %v353, 1
      %v999 = vsel %vm966, %v996, %v998
      %v1000 = vrot.slane %v354, 1
      %v1001 = vsel %vm966, %v998, %v1000
      %v1002 = vrot.slane %v355, 1
      %v1003 = vsel %vm966, %v1000, %v1002
      %v1005 = vsel %vm505, %v969, 0
      %v1008 = vsel %vm505, %v971, 0
      %v1011 = vsel %vm505, %v973, 0
      %v1014 = vsel %vm505, %v975, 0
      %v1017 = vsel %vm505, %v977, 0
      %v1020 = vsel %vm505, %v979, 0
      %v1023 = vsel %vm505, %v981, 0
      %v1026 = vsel %vm505, %v983, 0
      %v1029 = vsel %vm505, %v985, 0
      %v1032 = vsel %vm505, %v987, 0
      %v1035 = vsel %vm505, %v989, 0
      %v1038 = vsel %vm505, %v991, 0
      %v1041 = vsel %vm505, %v993, 0
      %v1044 = vsel %vm505, %v995, 0
      %v1047 = vsel %vm505, %v997, 0
      %v1050 = vsel %vm505, %v999, 0
      %v1053 = vsel %vm505, %v1001, 0
      %v1056 = vsel %vm505, %v1003, 0
      %v1059 = vand.u32 %v962, %v563
      %1061 = vmatprep.subr.bf16.mxu0 0
      %1062 = vmatpush1.bf16.msra.mxu0 %v1059
      %1063 = vmatprep.subr.bf16.mxu0 0
      %1064 = vmatpush1.bf16.msra.mxu0 0
      %1065 = vmatprep.subr.bf16.mxu0 0
      %1066 = vmatpush1.bf16.msra.mxu0 0
      %1067 = vmatprep.subr.bf16.mxu0 0
      %1068 = vmatpush1.bf16.msra.mxu0 0
      %1069 = vmatprep.subr.bf16.mxu0 0
      %1070 = vmatpush1.bf16.msra.mxu0 0
      %1071 = vmatprep.subr.bf16.mxu0 0
      %1072 = vmatpush1.bf16.msra.mxu0 0
      %1073 = vmatprep.subr.bf16.mxu0 0
      %1074 = vmatpush1.bf16.msra.mxu0 0
      %1075 = vmatprep.subr.bf16.mxu0 0
      %1076 = vmatpush1.bf16.msra.mxu0 0
      %1077 = vmatprep.subr.bf16.mxu0 0
      %1078 = vmatpush1.bf16.msra.mxu0 0
      %1079 = vmatprep.subr.bf16.mxu0 0
      %1080 = vmatpush1.bf16.msra.mxu0 0
      %1081 = vmatprep.subr.bf16.mxu0 0
      %1082 = vmatpush1.bf16.msra.mxu0 0
      %1083 = vmatprep.subr.bf16.mxu0 0
      %1084 = vmatpush1.bf16.msra.mxu0 0
      %1085 = vmatprep.subr.bf16.mxu0 0
      %1086 = vmatpush1.bf16.msra.mxu0 0
      %1087 = vmatprep.subr.bf16.mxu0 0
      %1088 = vmatpush1.bf16.msra.mxu0 0
      %1089 = vmatprep.subr.bf16.mxu0 0
      %1090 = vmatpush1.bf16.msra.mxu0 0
      %1091 = vmatprep.subr.bf16.mxu0 0
      %1092 = vmatpush1.bf16.msra.mxu0 0
      %1093 = vmatprep.mubr.bf16.mxu0 0
      %1094 = vmatmul.mubr.bf16.gmra.mrb[0].mxu0 %v1005
      %v1095 = vpop.f32.mrb[0].mxu0
      %v1096 = vadd.f32 0.0, %v1095
      %v1097 = vpop.f32.mrb[0].mxu0
      %v1098 = vpop.f32.mrb[0].mxu0
      %v1099 = vadd.f32 0.0, %v1098
      %v1100 = vpop.f32.mrb[0].mxu0
      %1101 = vmatprep.mubr.bf16.mxu0 0
      %1102 = vmatmul.mubr.bf16.gmra.mrb[0].mxu0 %v1008
      %v1103 = vpop.f32.mrb[0].mxu0
      %v1104 = vadd.f32 0.0, %v1103
      %v1105 = vpop.f32.mrb[0].mxu0
      %v1106 = vpop.f32.mrb[0].mxu0
      %v1107 = vadd.f32 0.0, %v1106
      %v1108 = vpop.f32.mrb[0].mxu0
      %1109 = vmatprep.mubr.bf16.mxu0 0
      %1110 = vmatmul.mubr.bf16.gmra.mrb[0].mxu0 %v1011
      %v1111 = vpop.f32.mrb[0].mxu0
      %v1112 = vadd.f32 0.0, %v1111
      %v1113 = vpop.f32.mrb[0].mxu0
      %v1114 = vpop.f32.mrb[0].mxu0
      %v1115 = vadd.f32 0.0, %v1114
      %v1116 = vpop.f32.mrb[0].mxu0
      %1117 = vmatprep.mubr.bf16.mxu0 0
      %1118 = vmatmul.mubr.bf16.gmra.mrb[0].mxu0 %v1014
      %v1119 = vpop.f32.mrb[0].mxu0
      %v1120 = vadd.f32 0.0, %v1119
      %v1121 = vpop.f32.mrb[0].mxu0
      %v1122 = vpop.f32.mrb[0].mxu0
      %v1123 = vadd.f32 0.0, %v1122
      %v1124 = vpop.f32.mrb[0].mxu0
      %1125 = vmatprep.mubr.bf16.mxu0 0
      %1126 = vmatmul.mubr.bf16.gmra.mrb[0].mxu0 %v1017
      %v1127 = vpop.f32.mrb[0].mxu0
      %v1128 = vadd.f32 0.0, %v1127
      %v1129 = vpop.f32.mrb[0].mxu0
      %v1130 = vpop.f32.mrb[0].mxu0
      %v1131 = vadd.f32 0.0, %v1130
      %v1132 = vpop.f32.mrb[0].mxu0
      %1133 = vmatprep.mubr.bf16.mxu0 0
      %1134 = vmatmul.mubr.bf16.gmra.mrb[0].mxu0 %v1020
      %v1135 = vpop.f32.mrb[0].mxu0
      %v1136 = vadd.f32 0.0, %v1135
      %v1137 = vpop.f32.mrb[0].mxu0
      %v1138 = vpop.f32.mrb[0].mxu0
      %v1139 = vadd.f32 0.0, %v1138
      %v1140 = vpop.f32.mrb[0].mxu0
      %1141 = vmatprep.mubr.bf16.mxu0 0
      %1142 = vmatmul.mubr.bf16.gmra.mrb[0].mxu0 %v1023
      %v1143 = vpop.f32.mrb[0].mxu0
      %v1144 = vadd.f32 0.0, %v1143
      %v1145 = vpop.f32.mrb[0].mxu0
      %v1146 = vpop.f32.mrb[0].mxu0
      %v1147 = vadd.f32 0.0, %v1146
      %v1148 = vpop.f32.mrb[0].mxu0
      %1149 = vmatprep.mubr.bf16.mxu0 0
      %1150 = vmatmul.mubr.bf16.gmra.mrb[0].mxu0 %v1026
      %v1151 = vpop.f32.mrb[0].mxu0
      %v1152 = vadd.f32 0.0, %v1151
      %v1153 = vpop.f32.mrb[0].mxu0
      %v1154 = vpop.f32.mrb[0].mxu0
      %v1155 = vadd.f32 0.0, %v1154
      %v1156 = vpop.f32.mrb[0].mxu0
      %1157 = vmatprep.mubr.bf16.mxu0 0
      %1158 = vmatmul.mubr.bf16.gmra.mrb[0].mxu0 %v1029
      %v1159 = vpop.f32.mrb[0].mxu0
      %v1160 = vadd.f32 0.0, %v1159
      %v1161 = vpop.f32.mrb[0].mxu0
      %v1162 = vpop.f32.mrb[0].mxu0
      %v1163 = vadd.f32 0.0, %v1162
      %v1164 = vpop.f32.mrb[0].mxu0
      %1165 = vmatprep.mubr.bf16.mxu0 0
      %1166 = vmatmul.mubr.bf16.gmra.mrb[0].mxu0 %v1032
      %v1167 = vpop.f32.mrb[0].mxu0
      %v1168 = vadd.f32 0.0, %v1167
      %v1169 = vpop.f32.mrb[0].mxu0
      %v1170 = vpop.f32.mrb[0].mxu0
      %v1171 = vadd.f32 0.0, %v1170
      %v1172 = vpop.f32.mrb[0].mxu0
      %1173 = vmatprep.mubr.bf16.mxu0 0
      %1174 = vmatmul.mubr.bf16.gmra.mrb[0].mxu0 %v1035
      %v1175 = vpop.f32.mrb[0].mxu0
      %v1176 = vadd.f32 0.0, %v1175
      %v1177 = vpop.f32.mrb[0].mxu0
      %v1178 = vpop.f32.mrb[0].mxu0
      %v1179 = vadd.f32 0.0, %v1178
      %v1180 = vpop.f32.mrb[0].mxu0
      %1181 = vmatprep.mubr.bf16.mxu0 0
      %1182 = vmatmul.mubr.bf16.gmra.mrb[0].mxu0 %v1038
      %v1183 = vpop.f32.mrb[0].mxu0
      %v1184 = vadd.f32 0.0, %v1183
      %v1185 = vpop.f32.mrb[0].mxu0
      %v1186 = vpop.f32.mrb[0].mxu0
      %v1187 = vadd.f32 0.0, %v1186
      %v1188 = vpop.f32.mrb[0].mxu0
      %1189 = vmatprep.mubr.bf16.mxu0 0
      %1190 = vmatmul.mubr.bf16.gmra.mrb[0].mxu0 %v1041
      %v1191 = vpop.f32.mrb[0].mxu0
      %v1192 = vadd.f32 0.0, %v1191
      %v1193 = vpop.f32.mrb[0].mxu0
      %v1194 = vpop.f32.mrb[0].mxu0
      %v1195 = vadd.f32 0.0, %v1194
      %v1196 = vpop.f32.mrb[0].mxu0
      %1197 = vmatprep.mubr.bf16.mxu0 0
      %1198 = vmatmul.mubr.bf16.gmra.mrb[0].mxu0 %v1044
      %v1199 = vpop.f32.mrb[0].mxu0
      %v1200 = vadd.f32 0.0, %v1199
      %v1201 = vpop.f32.mrb[0].mxu0
      %v1202 = vpop.f32.mrb[0].mxu0
      %v1203 = vadd.f32 0.0, %v1202
      %v1204 = vpop.f32.mrb[0].mxu0
      %1205 = vmatprep.mubr.bf16.mxu0 0
      %1206 = vmatmul.mubr.bf16.gmra.mrb[0].mxu0 %v1047
      %v1207 = vpop.f32.mrb[0].mxu0
      %v1208 = vadd.f32 0.0, %v1207
      %v1209 = vpop.f32.mrb[0].mxu0
      %v1210 = vpop.f32.mrb[0].mxu0
      %v1211 = vadd.f32 0.0, %v1210
      %v1212 = vpop.f32.mrb[0].mxu0
      %1213 = vmatprep.mubr.bf16.mxu0 0
      %1214 = vmatmul.mubr.bf16.gmra.mrb[0].mxu0 %v1050
      %v1215 = vpop.f32.mrb[0].mxu0
      %v1216 = vadd.f32 0.0, %v1215
      %v1217 = vpop.f32.mrb[0].mxu0
      %v1218 = vpop.f32.mrb[0].mxu0
      %v1219 = vadd.f32 0.0, %v1218
      %v1220 = vpop.f32.mrb[0].mxu0
      %1221 = vmatprep.mubr.bf16.mxu0 0
      %1222 = vmatmul.mubr.bf16.gmra.mrb[0].mxu0 %v1053
      %v1223 = vpop.f32.mrb[0].mxu0
      %v1224 = vadd.f32 0.0, %v1223
      %v1225 = vpop.f32.mrb[0].mxu0
      %v1226 = vpop.f32.mrb[0].mxu0
      %v1227 = vadd.f32 0.0, %v1226
      %v1228 = vpop.f32.mrb[0].mxu0
      %1229 = vmatprep.mubr.bf16.mxu0 0
      %1230 = vmatmul.mubr.bf16.gmra.mrb[0].mxu0 %v1056
      %v1231 = vpop.f32.mrb[0].mxu0
      %v1232 = vadd.f32 0.0, %v1231
      %v1233 = vpop.f32.mrb[0].mxu0
      %v1234 = vpop.f32.mrb[0].mxu0
      %v1235 = vadd.f32 0.0, %v1234
      %v1236 = vpop.f32.mrb[0].mxu0
      %1237 = vdwg.mxu0
      %v1238 = vadd.f32 %v818, %v1096
      %v1239 = vadd.f32 %v821, %v1099
      %v1240 = vadd.f32 %v826, %v1104
      %v1241 = vadd.f32 %v829, %v1107
      %v1242 = vadd.f32 %v834, %v1112
      %v1243 = vadd.f32 %v837, %v1115
      %v1244 = vadd.f32 %v842, %v1120
      %v1245 = vadd.f32 %v845, %v1123
      %v1246 = vadd.f32 %v850, %v1128
      %v1247 = vadd.f32 %v853, %v1131
      %v1248 = vadd.f32 %v858, %v1136
      %v1249 = vadd.f32 %v861, %v1139
      %v1250 = vadd.f32 %v866, %v1144
      %v1251 = vadd.f32 %v869, %v1147
      %v1252 = vadd.f32 %v874, %v1152
      %v1253 = vadd.f32 %v877, %v1155
      %v1254 = vadd.f32 %v882, %v1160
      %v1255 = vadd.f32 %v885, %v1163
      %v1256 = vadd.f32 %v890, %v1168
      %v1257 = vadd.f32 %v893, %v1171
      %v1258 = vadd.f32 %v898, %v1176
      %v1259 = vadd.f32 %v901, %v1179
      %v1260 = vadd.f32 %v906, %v1184
      %v1261 = vadd.f32 %v909, %v1187
      %v1262 = vadd.f32 %v914, %v1192
      %v1263 = vadd.f32 %v917, %v1195
      %v1264 = vadd.f32 %v922, %v1200
      %v1265 = vadd.f32 %v925, %v1203
      %v1266 = vadd.f32 %v930, %v1208
      %v1267 = vadd.f32 %v933, %v1211
      %v1268 = vadd.f32 %v938, %v1216
      %v1269 = vadd.f32 %v941, %v1219
      %v1270 = vadd.f32 %v946, %v1224
      %v1271 = vadd.f32 %v949, %v1227
      %v1272 = vadd.f32 %v954, %v1232
      %v1273 = vadd.f32 %v957, %v1235
      %v1274 = vld [vmem:[%s206 + $0x8] sm:$0xe]
      %v1275 = vld [vmem:[%s206 + $0xc] sm:$0xf]
      %v1276 = vld [vmem:[%s206 + $0x10] sm:$0xf]
      %v1277 = vld [vmem:[%s206 + $0x14] sm:$0xf]
      %v1278 = vld [vmem:[%s206 + $0x18] sm:$0xf]
      %v1279 = vld [vmem:[%s206 + $0x1c] sm:$0xf]
      %v1280 = vld [vmem:[%s206 + $0x20] sm:$0xf]
      %v1281 = vld [vmem:[%s206 + $0x24] sm:$0xf]
      %v1282 = vld [vmem:[%s206 + $0x28] sm:$0xf]
      %v1283 = vld [vmem:[%s206 + $0x2c] sm:$0xf]
      %v1284 = vld [vmem:[%s206 + $0x30] sm:$0xf]
      %v1285 = vld [vmem:[%s206 + $0x34] sm:$0xf]
      %v1286 = vld [vmem:[%s206 + $0x38] sm:$0xf]
      %v1287 = vld [vmem:[%s206 + $0x3c] sm:$0xf]
      %v1288 = vld [vmem:[%s206 + $0x40] sm:$0xf]
      %v1289 = vld [vmem:[%s206 + $0x44] sm:$0xf]
      %v1290 = vld [vmem:[%s206 + $0x48] sm:$0xf]
      %v1291 = vld [vmem:[%s206 + $0x4c] sm:$0xf]
      %v1292 = vld [vmem:[%s206 + $0x50] sm:$0xf]
      %v1293 = vld [vmem:[%s206 + $0x54] sm:$0xf]
      %v1294 = vld [vmem:[%s206 + $0x58] sm:$0xf]
      %v1295 = vld [vmem:[%s206 + $0x5c] sm:$0xf]
      %v1296 = vld [vmem:[%s206 + $0x60] sm:$0xf]
      %v1297 = vld [vmem:[%s206 + $0x64] sm:$0xf]
      %v1298 = vld [vmem:[%s206 + $0x68] sm:$0xf]
      %v1299 = vld [vmem:[%s206 + $0x6c] sm:$0xf]
      %v1300 = vld [vmem:[%s206 + $0x70] sm:$0xf]
      %v1301 = vld [vmem:[%s206 + $0x74] sm:$0xf]
      %v1302 = vld [vmem:[%s206 + $0x78] sm:$0xf]
      %v1303 = vld [vmem:[%s206 + $0x7c] sm:$0xf]
      %v1304 = vld [vmem:[%s206 + $0x80] sm:$0xf]
      %v1305 = vld [vmem:[%s206 + $0x84] sm:$0xf]
      %v1306 = vld [vmem:[%s206 + $0x88] sm:$0xf]
      %v1307 = vld [vmem:[%s206 + $0x8c] sm:$0xf]
      %v1308 = vld [vmem:[%s206 + $0x90] sm:$0xf]
      %v1309 = vld [vmem:[%s206 + $0x94] sm:$0xf]
      %v1310 = vld [vmem:[%s206 + $0x98] sm:$0x1]
      %s1311 = scalar_lea.vmem %s210, 6
      %v1312 = vld [vmem:[%s1311] sm:$0x3]
      %v1350 = vunpack.c.l.b16 %v1274
      %v1351 = vunpack.c.l.b16 %v1275
      %v1352 = vunpack.c.l.b16 %v1276
      %v1353 = vunpack.c.l.b16 %v1277
      %v1354 = vunpack.c.l.b16 %v1278
      %v1355 = vunpack.c.l.b16 %v1279
      %v1356 = vunpack.c.l.b16 %v1280
      %v1357 = vunpack.c.l.b16 %v1281
      %v1358 = vunpack.c.l.b16 %v1282
      %v1359 = vunpack.c.l.b16 %v1283
      %v1360 = vunpack.c.l.b16 %v1284
      %v1361 = vunpack.c.l.b16 %v1285
      %v1362 = vunpack.c.l.b16 %v1286
      %v1363 = vunpack.c.l.b16 %v1287
      %v1364 = vunpack.c.l.b16 %v1288
      %v1365 = vunpack.c.l.b16 %v1289
      %v1366 = vunpack.c.l.b16 %v1290
      %v1367 = vunpack.c.l.b16 %v1291
      %v1368 = vunpack.c.l.b16 %v1292
      %v1369 = vunpack.c.l.b16 %v1293
      %v1370 = vunpack.c.l.b16 %v1294
      %v1371 = vunpack.c.l.b16 %v1295
      %v1372 = vunpack.c.l.b16 %v1296
      %v1373 = vunpack.c.l.b16 %v1297
      %v1374 = vunpack.c.l.b16 %v1298
      %v1375 = vunpack.c.l.b16 %v1299
      %v1376 = vunpack.c.l.b16 %v1300
      %v1377 = vunpack.c.l.b16 %v1301
      %v1378 = vunpack.c.l.b16 %v1302
      %v1379 = vunpack.c.l.b16 %v1303
      %v1380 = vunpack.c.l.b16 %v1304
      %v1381 = vunpack.c.l.b16 %v1305
      %v1382 = vunpack.c.l.b16 %v1306
      %v1383 = vunpack.c.l.b16 %v1307
      %v1384 = vunpack.c.l.b16 %v1308
      %v1385 = vunpack.c.l.b16 %v1309
      %v1386 = vunpack.c.l.b16 %v1310
      %v1387 = vpack.c.b16 %v1351, %v1350
      %v1388 = vpack.c.b16 %v1353, %v1352
      %v1389 = vpack.c.b16 %v1355, %v1354
      %v1390 = vpack.c.b16 %v1357, %v1356
      %v1391 = vpack.c.b16 %v1359, %v1358
      %v1392 = vpack.c.b16 %v1361, %v1360
      %v1393 = vpack.c.b16 %v1363, %v1362
      %v1394 = vpack.c.b16 %v1365, %v1364
      %v1395 = vpack.c.b16 %v1367, %v1366
      %v1396 = vpack.c.b16 %v1369, %v1368
      %v1397 = vpack.c.b16 %v1371, %v1370
      %v1398 = vpack.c.b16 %v1373, %v1372
      %v1399 = vpack.c.b16 %v1375, %v1374
      %v1400 = vpack.c.b16 %v1377, %v1376
      %v1401 = vpack.c.b16 %v1379, %v1378
      %v1402 = vpack.c.b16 %v1381, %v1380
      %v1403 = vpack.c.b16 %v1383, %v1382
      %v1404 = vpack.c.b16 %v1385, %v1384
      %v1405 = vpack.c.b16 %v1386, %v1386
      %v1406 = vrot.slane %v1387, 1
      %v1407 = vrot.slane %v1388, 1
      %v1408 = vsel %vm966, %v1406, %v1407
      %v1409 = vrot.slane %v1389, 1
      %v1410 = vsel %vm966, %v1407, %v1409
      %v1411 = vrot.slane %v1390, 1
      %v1412 = vsel %vm966, %v1409, %v1411
      %v1413 = vrot.slane %v1391, 1
      %v1414 = vsel %vm966, %v1411, %v1413
      %v1415 = vrot.slane %v1392, 1
      %v1416 = vsel %vm966, %v1413, %v1415
      %v1417 = vrot.slane %v1393, 1
      %v1418 = vsel %vm966, %v1415, %v1417
      %v1419 = vrot.slane %v1394, 1
      %v1420 = vsel %vm966, %v1417, %v1419
      %v1421 = vrot.slane %v1395, 1
      %v1422 = vsel %vm966, %v1419, %v1421
      %v1423 = vrot.slane %v1396, 1
      %v1424 = vsel %vm966, %v1421, %v1423
      %v1425 = vrot.slane %v1397, 1
      %v1426 = vsel %vm966, %v1423, %v1425
      %v1427 = vrot.slane %v1398, 1
      %v1428 = vsel %vm966, %v1425, %v1427
      %v1429 = vrot.slane %v1399, 1
      %v1430 = vsel %vm966, %v1427, %v1429
      %v1431 = vrot.slane %v1400, 1
      %v1432 = vsel %vm966, %v1429, %v1431
      %v1433 = vrot.slane %v1401, 1
      %v1434 = vsel %vm966, %v1431, %v1433
      %v1435 = vrot.slane %v1402, 1
      %v1436 = vsel %vm966, %v1433, %v1435
      %v1437 = vrot.slane %v1403, 1
      %v1438 = vsel %vm966, %v1435, %v1437
      %v1439 = vrot.slane %v1404, 1
      %v1440 = vsel %vm966, %v1437, %v1439
      %v1441 = vrot.slane %v1405, 1
      %v1442 = vsel %vm966, %v1439, %v1441
      %v1444 = vsel %vm505, %v1408, 0
      %v1447 = vsel %vm505, %v1410, 0
      %v1450 = vsel %vm505, %v1412, 0
      %v1453 = vsel %vm505, %v1414, 0
      %v1456 = vsel %vm505, %v1416, 0
      %v1459 = vsel %vm505, %v1418, 0
      %v1462 = vsel %vm505, %v1420, 0
      %v1465 = vsel %vm505, %v1422, 0
      %v1468 = vsel %vm505, %v1424, 0
      %v1471 = vsel %vm505, %v1426, 0
      %v1474 = vsel %vm505, %v1428, 0
      %v1477 = vsel %vm505, %v1430, 0
      %v1480 = vsel %vm505, %v1432, 0
      %v1483 = vsel %vm505, %v1434, 0
      %v1486 = vsel %vm505, %v1436, 0
      %v1489 = vsel %vm505, %v1438, 0
      %v1492 = vsel %vm505, %v1440, 0
      %v1495 = vsel %vm505, %v1442, 0
      %v1498 = vand.u32 %v1312, %v563
      %1500 = vmatprep.subr.bf16.mxu0 0
      %1501 = vmatpush1.bf16.msra.mxu0 %v1498
      %1502 = vmatprep.subr.bf16.mxu0 0
      %1503 = vmatpush1.bf16.msra.mxu0 0
      %1504 = vmatprep.subr.bf16.mxu0 0
      %1505 = vmatpush1.bf16.msra.mxu0 0
      %1506 = vmatprep.subr.bf16.mxu0 0
      %1507 = vmatpush1.bf16.msra.mxu0 0
      %1508 = vmatprep.subr.bf16.mxu0 0
      %1509 = vmatpush1.bf16.msra.mxu0 0
      %1510 = vmatprep.subr.bf16.mxu0 0
      %1511 = vmatpush1.bf16.msra.mxu0 0
      %1512 = vmatprep.subr.bf16.mxu0 0
      %1513 = vmatpush1.bf16.msra.mxu0 0
      %1514 = vmatprep.subr.bf16.mxu0 0
      %1515 = vmatpush1.bf16.msra.mxu0 0
      %1516 = vmatprep.subr.bf16.mxu0 0
      %1517 = vmatpush1.bf16.msra.mxu0 0
      %1518 = vmatprep.subr.bf16.mxu0 0
      %1519 = vmatpush1.bf16.msra.mxu0 0
      %1520 = vmatprep.subr.bf16.mxu0 0
      %1521 = vmatpush1.bf16.msra.mxu0 0
      %1522 = vmatprep.subr.bf16.mxu0 0
      %1523 = vmatpush1.bf16.msra.mxu0 0
      %1524 = vmatprep.subr.bf16.mxu0 0
      %1525 = vmatpush1.bf16.msra.mxu0 0
      %1526 = vmatprep.subr.bf16.mxu0 0
      %1527 = vmatpush1.bf16.msra.mxu0 0
      %1528 = vmatprep.subr.bf16.mxu0 0
      %1529 = vmatpush1.bf16.msra.mxu0 0
      %1530 = vmatprep.subr.bf16.mxu0 0
      %1531 = vmatpush1.bf16.msra.mxu0 0
      %1532 = vmatprep.mubr.bf16.mxu0 0
      %1533 = vmatmul.mubr.bf16.gmra.mrb[0].mxu0 %v1444
      %v1534 = vpop.f32.mrb[0].mxu0
      %v1535 = vadd.f32 0.0, %v1534
      %v1536 = vpop.f32.mrb[0].mxu0
      %v1537 = vpop.f32.mrb[0].mxu0
      %v1538 = vadd.f32 0.0, %v1537
      %v1539 = vpop.f32.mrb[0].mxu0
      %1540 = vmatprep.mubr.bf16.mxu0 0
      %1541 = vmatmul.mubr.bf16.gmra.mrb[0].mxu0 %v1447
      %v1542 = vpop.f32.mrb[0].mxu0
      %v1543 = vadd.f32 0.0, %v1542
      %v1544 = vpop.f32.mrb[0].mxu0
      %v1545 = vpop.f32.mrb[0].mxu0
      %v1546 = vadd.f32 0.0, %v1545
      %v1547 = vpop.f32.mrb[0].mxu0
      %1548 = vmatprep.mubr.bf16.mxu0 0
      %1549 = vmatmul.mubr.bf16.gmra.mrb[0].mxu0 %v1450
      %v1550 = vpop.f32.mrb[0].mxu0
      %v1551 = vadd.f32 0.0, %v1550
      %v1552 = vpop.f32.mrb[0].mxu0
      %v1553 = vpop.f32.mrb[0].mxu0
      %v1554 = vadd.f32 0.0, %v1553
      %v1555 = vpop.f32.mrb[0].mxu0
      %1556 = vmatprep.mubr.bf16.mxu0 0
      %1557 = vmatmul.mubr.bf16.gmra.mrb[0].mxu0 %v1453
      %v1558 = vpop.f32.mrb[0].mxu0
      %v1559 = vadd.f32 0.0, %v1558
      %v1560 = vpop.f32.mrb[0].mxu0
      %v1561 = vpop.f32.mrb[0].mxu0
      %v1562 = vadd.f32 0.0, %v1561
      %v1563 = vpop.f32.mrb[0].mxu0
      %1564 = vmatprep.mubr.bf16.mxu0 0
      %1565 = vmatmul.mubr.bf16.gmra.mrb[0].mxu0 %v1456
      %v1566 = vpop.f32.mrb[0].mxu0
      %v1567 = vadd.f32 0.0, %v1566
      %v1568 = vpop.f32.mrb[0].mxu0
      %v1569 = vpop.f32.mrb[0].mxu0
      %v1570 = vadd.f32 0.0, %v1569
      %v1571 = vpop.f32.mrb[0].mxu0
      %1572 = vmatprep.mubr.bf16.mxu0 0
      %1573 = vmatmul.mubr.bf16.gmra.mrb[0].mxu0 %v1459
      %v1574 = vpop.f32.mrb[0].mxu0
      %v1575 = vadd.f32 0.0, %v1574
      %v1576 = vpop.f32.mrb[0].mxu0
      %v1577 = vpop.f32.mrb[0].mxu0
      %v1578 = vadd.f32 0.0, %v1577
      %v1579 = vpop.f32.mrb[0].mxu0
      %1580 = vmatprep.mubr.bf16.mxu0 0
      %1581 = vmatmul.mubr.bf16.gmra.mrb[0].mxu0 %v1462
      %v1582 = vpop.f32.mrb[0].mxu0
      %v1583 = vadd.f32 0.0, %v1582
      %v1584 = vpop.f32.mrb[0].mxu0
      %v1585 = vpop.f32.mrb[0].mxu0
      %v1586 = vadd.f32 0.0, %v1585
      %v1587 = vpop.f32.mrb[0].mxu0
      %1588 = vmatprep.mubr.bf16.mxu0 0
      %1589 = vmatmul.mubr.bf16.gmra.mrb[0].mxu0 %v1465
      %v1590 = vpop.f32.mrb[0].mxu0
      %v1591 = vadd.f32 0.0, %v1590
      %v1592 = vpop.f32.mrb[0].mxu0
      %v1593 = vpop.f32.mrb[0].mxu0
      %v1594 = vadd.f32 0.0, %v1593
      %v1595 = vpop.f32.mrb[0].mxu0
      %1596 = vmatprep.mubr.bf16.mxu0 0
      %1597 = vmatmul.mubr.bf16.gmra.mrb[0].mxu0 %v1468
      %v1598 = vpop.f32.mrb[0].mxu0
      %v1599 = vadd.f32 0.0, %v1598
      %v1600 = vpop.f32.mrb[0].mxu0
      %v1601 = vpop.f32.mrb[0].mxu0
      %v1602 = vadd.f32 0.0, %v1601
      %v1603 = vpop.f32.mrb[0].mxu0
      %1604 = vmatprep.mubr.bf16.mxu0 0
      %1605 = vmatmul.mubr.bf16.gmra.mrb[0].mxu0 %v1471
      %v1606 = vpop.f32.mrb[0].mxu0
      %v1607 = vadd.f32 0.0, %v1606
      %v1608 = vpop.f32.mrb[0].mxu0
      %v1609 = vpop.f32.mrb[0].mxu0
      %v1610 = vadd.f32 0.0, %v1609
      %v1611 = vpop.f32.mrb[0].mxu0
      %1612 = vmatprep.mubr.bf16.mxu0 0
      %1613 = vmatmul.mubr.bf16.gmra.mrb[0].mxu0 %v1474
      %v1614 = vpop.f32.mrb[0].mxu0
      %v1615 = vadd.f32 0.0, %v1614
      %v1616 = vpop.f32.mrb[0].mxu0
      %v1617 = vpop.f32.mrb[0].mxu0
      %v1618 = vadd.f32 0.0, %v1617
      %v1619 = vpop.f32.mrb[0].mxu0
      %1620 = vmatprep.mubr.bf16.mxu0 0
      %1621 = vmatmul.mubr.bf16.gmra.mrb[0].mxu0 %v1477
      %v1622 = vpop.f32.mrb[0].mxu0
      %v1623 = vadd.f32 0.0, %v1622
      %v1624 = vpop.f32.mrb[0].mxu0
      %v1625 = vpop.f32.mrb[0].mxu0
      %v1626 = vadd.f32 0.0, %v1625
      %v1627 = vpop.f32.mrb[0].mxu0
      %1628 = vmatprep.mubr.bf16.mxu0 0
      %1629 = vmatmul.mubr.bf16.gmra.mrb[0].mxu0 %v1480
      %v1630 = vpop.f32.mrb[0].mxu0
      %v1631 = vadd.f32 0.0, %v1630
      %v1632 = vpop.f32.mrb[0].mxu0
      %v1633 = vpop.f32.mrb[0].mxu0
      %v1634 = vadd.f32 0.0, %v1633
      %v1635 = vpop.f32.mrb[0].mxu0
      %1636 = vmatprep.mubr.bf16.mxu0 0
      %1637 = vmatmul.mubr.bf16.gmra.mrb[0].mxu0 %v1483
      %v1638 = vpop.f32.mrb[0].mxu0
      %v1639 = vadd.f32 0.0, %v1638
      %v1640 = vpop.f32.mrb[0].mxu0
      %v1641 = vpop.f32.mrb[0].mxu0
      %v1642 = vadd.f32 0.0, %v1641
      %v1643 = vpop.f32.mrb[0].mxu0
      %1644 = vmatprep.mubr.bf16.mxu0 0
      %1645 = vmatmul.mubr.bf16.gmra.mrb[0].mxu0 %v1486
      %v1646 = vpop.f32.mrb[0].mxu0
      %v1647 = vadd.f32 0.0, %v1646
      %v1648 = vpop.f32.mrb[0].mxu0
      %v1649 = vpop.f32.mrb[0].mxu0
      %v1650 = vadd.f32 0.0, %v1649
      %v1651 = vpop.f32.mrb[0].mxu0
      %1652 = vmatprep.mubr.bf16.mxu0 0
      %1653 = vmatmul.mubr.bf16.gmra.mrb[0].mxu0 %v1489
      %v1654 = vpop.f32.mrb[0].mxu0
      %v1655 = vadd.f32 0.0, %v1654
      %v1656 = vpop.f32.mrb[0].mxu0
      %v1657 = vpop.f32.mrb[0].mxu0
      %v1658 = vadd.f32 0.0, %v1657
      %v1659 = vpop.f32.mrb[0].mxu0
      %1660 = vmatprep.mubr.bf16.mxu0 0
      %1661 = vmatmul.mubr.bf16.gmra.mrb[0].mxu0 %v1492
      %v1662 = vpop.f32.mrb[0].mxu0
      %v1663 = vadd.f32 0.0, %v1662
      %v1664 = vpop.f32.mrb[0].mxu0
      %v1665 = vpop.f32.mrb[0].mxu0
      %v1666 = vadd.f32 0.0, %v1665
      %v1667 = vpop.f32.mrb[0].mxu0
      %1668 = vmatprep.mubr.bf16.mxu0 0
      %1669 = vmatmul.mubr.bf16.gmra.mrb[0].mxu0 %v1495
      %v1670 = vpop.f32.mrb[0].mxu0
      %v1671 = vadd.f32 0.0, %v1670
      %v1672 = vpop.f32.mrb[0].mxu0
      %v1673 = vpop.f32.mrb[0].mxu0
      %v1674 = vadd.f32 0.0, %v1673
      %v1675 = vpop.f32.mrb[0].mxu0
      %1676 = vdwg.mxu0
      %v1677 = vadd.f32 %v1238, %v1535
      %v1678 = vadd.f32 %v1239, %v1538
      %v1679 = vadd.f32 %v1240, %v1543
      %v1680 = vadd.f32 %v1241, %v1546
      %v1681 = vadd.f32 %v1242, %v1551
      %v1682 = vadd.f32 %v1243, %v1554
      %v1683 = vadd.f32 %v1244, %v1559
      %v1684 = vadd.f32 %v1245, %v1562
      %v1685 = vadd.f32 %v1246, %v1567
      %v1686 = vadd.f32 %v1247, %v1570
      %v1687 = vadd.f32 %v1248, %v1575
      %v1688 = vadd.f32 %v1249, %v1578
      %v1689 = vadd.f32 %v1250, %v1583
      %v1690 = vadd.f32 %v1251, %v1586
      %v1691 = vadd.f32 %v1252, %v1591
      %v1692 = vadd.f32 %v1253, %v1594
      %v1693 = vadd.f32 %v1254, %v1599
      %v1694 = vadd.f32 %v1255, %v1602
      %v1695 = vadd.f32 %v1256, %v1607
      %v1696 = vadd.f32 %v1257, %v1610
      %v1697 = vadd.f32 %v1258, %v1615
      %v1698 = vadd.f32 %v1259, %v1618
      %v1699 = vadd.f32 %v1260, %v1623
      %v1700 = vadd.f32 %v1261, %v1626
      %v1701 = vadd.f32 %v1262, %v1631
      %v1702 = vadd.f32 %v1263, %v1634
      %v1703 = vadd.f32 %v1264, %v1639
      %v1704 = vadd.f32 %v1265, %v1642
      %v1705 = vadd.f32 %v1266, %v1647
      %v1706 = vadd.f32 %v1267, %v1650
      %v1707 = vadd.f32 %v1268, %v1655
      %v1708 = vadd.f32 %v1269, %v1658
      %v1709 = vadd.f32 %v1270, %v1663
      %v1710 = vadd.f32 %v1271, %v1666
      %v1711 = vadd.f32 %v1272, %v1671
      %v1712 = vadd.f32 %v1273, %v1674
      %v1713 = vld [vmem:[%s206 + $0x98] sm:$0x3]
      %s1714 = scalar_lea.vmem %s210, 8
      %v1715 = vld [vmem:[%s1714] sm:$0x3]
      %v1717 = vunpack.c.l.b16 %v1713
      %v1718 = vpack.c.b16 %v1717, %v1717
      %vm1719 = vsmask.f32 6400
      %v1721 = vshrl.u32 %v1387, 16
      %v1723 = vrot.slane %v1721, 1
      %v1724 = vshll.u32 %v1387, 16
      %v1726 = vrot.slane %v1724, 2
      %v1727 = vor.u32 %v1723, %v1726
      %v1729 = vshrl.u32 %v1388, 16
      %v1731 = vrot.slane %v1729, 1
      %v1732 = vshll.u32 %v1388, 16
      %v1734 = vrot.slane %v1732, 2
      %v1735 = vor.u32 %v1731, %v1734
      %v1736 = vsel %vm1719, %v1727, %v1735
      %v1738 = vshrl.u32 %v1389, 16
      %v1740 = vrot.slane %v1738, 1
      %v1741 = vshll.u32 %v1389, 16
      %v1743 = vrot.slane %v1741, 2
      %v1744 = vor.u32 %v1740, %v1743
      %v1745 = vsel %vm1719, %v1735, %v1744
      %v1747 = vshrl.u32 %v1390, 16
      %v1749 = vrot.slane %v1747, 1
      %v1750 = vshll.u32 %v1390, 16
      %v1752 = vrot.slane %v1750, 2
      %v1753 = vor.u32 %v1749, %v1752
      %v1754 = vsel %vm1719, %v1744, %v1753
      %v1756 = vshrl.u32 %v1391, 16
      %v1758 = vrot.slane %v1756, 1
      %v1759 = vshll.u32 %v1391, 16
      %v1761 = vrot.slane %v1759, 2
      %v1762 = vor.u32 %v1758, %v1761
      %v1763 = vsel %vm1719, %v1753, %v1762
      %v1765 = vshrl.u32 %v1392, 16
      %v1767 = vrot.slane %v1765, 1
      %v1768 = vshll.u32 %v1392, 16
      %v1770 = vrot.slane %v1768, 2
      %v1771 = vor.u32 %v1767, %v1770
      %v1772 = vsel %vm1719, %v1762, %v1771
      %v1774 = vshrl.u32 %v1393, 16
      %v1776 = vrot.slane %v1774, 1
      %v1777 = vshll.u32 %v1393, 16
      %v1779 = vrot.slane %v1777, 2
      %v1780 = vor.u32 %v1776, %v1779
      %v1781 = vsel %vm1719, %v1771, %v1780
      %v1783 = vshrl.u32 %v1394, 16
      %v1785 = vrot.slane %v1783, 1
      %v1786 = vshll.u32 %v1394, 16
      %v1788 = vrot.slane %v1786, 2
      %v1789 = vor.u32 %v1785, %v1788
      %v1790 = vsel %vm1719, %v1780, %v1789
      %v1792 = vshrl.u32 %v1395, 16
      %v1794 = vrot.slane %v1792, 1
      %v1795 = vshll.u32 %v1395, 16
      %v1797 = vrot.slane %v1795, 2
      %v1798 = vor.u32 %v1794, %v1797
      %v1799 = vsel %vm1719, %v1789, %v1798
      %v1801 = vshrl.u32 %v1396, 16
      %v1803 = vrot.slane %v1801, 1
      %v1804 = vshll.u32 %v1396, 16
      %v1806 = vrot.slane %v1804, 2
      %v1807 = vor.u32 %v1803, %v1806
      %v1808 = vsel %vm1719, %v1798, %v1807
      %v1810 = vshrl.u32 %v1397, 16
      %v1812 = vrot.slane %v1810, 1
      %v1813 = vshll.u32 %v1397, 16
      %v1815 = vrot.slane %v1813, 2
      %v1816 = vor.u32 %v1812, %v1815
      %v1817 = vsel %vm1719, %v1807, %v1816
      %v1819 = vshrl.u32 %v1398, 16
      %v1821 = vrot.slane %v1819, 1
      %v1822 = vshll.u32 %v1398, 16
      %v1824 = vrot.slane %v1822, 2
      %v1825 = vor.u32 %v1821, %v1824
      %v1826 = vsel %vm1719, %v1816, %v1825
      %v1828 = vshrl.u32 %v1399, 16
      %v1830 = vrot.slane %v1828, 1
      %v1831 = vshll.u32 %v1399, 16
      %v1833 = vrot.slane %v1831, 2
      %v1834 = vor.u32 %v1830, %v1833
      %v1835 = vsel %vm1719, %v1825, %v1834
      %v1837 = vshrl.u32 %v1400, 16
      %v1839 = vrot.slane %v1837, 1
      %v1840 = vshll.u32 %v1400, 16
      %v1842 = vrot.slane %v1840, 2
      %v1843 = vor.u32 %v1839, %v1842
      %v1844 = vsel %vm1719, %v1834, %v1843
      %v1846 = vshrl.u32 %v1401, 16
      %v1848 = vrot.slane %v1846, 1
      %v1849 = vshll.u32 %v1401, 16
      %v1851 = vrot.slane %v1849, 2
      %v1852 = vor.u32 %v1848, %v1851
      %v1853 = vsel %vm1719, %v1843, %v1852
      %v1855 = vshrl.u32 %v1402, 16
      %v1857 = vrot.slane %v1855, 1
      %v1858 = vshll.u32 %v1402, 16
      %v1860 = vrot.slane %v1858, 2
      %v1861 = vor.u32 %v1857, %v1860
      %v1862 = vsel %vm1719, %v1852, %v1861
      %v1864 = vshrl.u32 %v1403, 16
      %v1866 = vrot.slane %v1864, 1
      %v1867 = vshll.u32 %v1403, 16
      %v1869 = vrot.slane %v1867, 2
      %v1870 = vor.u32 %v1866, %v1869
      %v1871 = vsel %vm1719, %v1861, %v1870
      %v1873 = vshrl.u32 %v1404, 16
      %v1875 = vrot.slane %v1873, 1
      %v1876 = vshll.u32 %v1404, 16
      %v1878 = vrot.slane %v1876, 2
      %v1879 = vor.u32 %v1875, %v1878
      %v1880 = vsel %vm1719, %v1870, %v1879
      %v1882 = vshrl.u32 %v1718, 16
      %v1884 = vrot.slane %v1882, 1
      %v1885 = vshll.u32 %v1718, 16
      %v1887 = vrot.slane %v1885, 2
      %v1888 = vor.u32 %v1884, %v1887
      %v1889 = vsel %vm1719, %v1879, %v1888
      %v1891 = vsel %vm505, %v1736, 0
      %v1894 = vsel %vm505, %v1745, 0
      %v1897 = vsel %vm505, %v1754, 0
      %v1900 = vsel %vm505, %v1763, 0
      %v1903 = vsel %vm505, %v1772, 0
      %v1906 = vsel %vm505, %v1781, 0
      %v1909 = vsel %vm505, %v1790, 0
      %v1912 = vsel %vm505, %v1799, 0
      %v1915 = vsel %vm505, %v1808, 0
      %v1918 = vsel %vm505, %v1817, 0
      %v1921 = vsel %vm505, %v1826, 0
      %v1924 = vsel %vm505, %v1835, 0
      %v1927 = vsel %vm505, %v1844, 0
      %v1930 = vsel %vm505, %v1853, 0
      %v1933 = vsel %vm505, %v1862, 0
      %v1936 = vsel %vm505, %v1871, 0
      %v1939 = vsel %vm505, %v1880, 0
      %v1942 = vsel %vm505, %v1889, 0
      %v1945 = vand.u32 %v1715, %v563
      %1947 = vmatprep.subr.bf16.mxu0 0
      %1948 = vmatpush1.bf16.msra.mxu0 %v1945
      %1949 = vmatprep.subr.bf16.mxu0 0
      %1950 = vmatpush1.bf16.msra.mxu0 0
      %1951 = vmatprep.subr.bf16.mxu0 0
      %1952 = vmatpush1.bf16.msra.mxu0 0
      %1953 = vmatprep.subr.bf16.mxu0 0
      %1954 = vmatpush1.bf16.msra.mxu0 0
      %1955 = vmatprep.subr.bf16.mxu0 0
      %1956 = vmatpush1.bf16.msra.mxu0 0
      %1957 = vmatprep.subr.bf16.mxu0 0
      %1958 = vmatpush1.bf16.msra.mxu0 0
      %1959 = vmatprep.subr.bf16.mxu0 0
      %1960 = vmatpush1.bf16.msra.mxu0 0
      %1961 = vmatprep.subr.bf16.mxu0 0
      %1962 = vmatpush1.bf16.msra.mxu0 0
      %1963 = vmatprep.subr.bf16.mxu0 0
      %1964 = vmatpush1.bf16.msra.mxu0 0
      %1965 = vmatprep.subr.bf16.mxu0 0
      %1966 = vmatpush1.bf16.msra.mxu0 0
      %1967 = vmatprep.subr.bf16.mxu0 0
      %1968 = vmatpush1.bf16.msra.mxu0 0
      %1969 = vmatprep.subr.bf16.mxu0 0
      %1970 = vmatpush1.bf16.msra.mxu0 0
      %1971 = vmatprep.subr.bf16.mxu0 0
      %1972 = vmatpush1.bf16.msra.mxu0 0
      %1973 = vmatprep.subr.bf16.mxu0 0
      %1974 = vmatpush1.bf16.msra.mxu0 0
      %1975 = vmatprep.subr.bf16.mxu0 0
      %1976 = vmatpush1.bf16.msra.mxu0 0
      %1977 = vmatprep.subr.bf16.mxu0 0
      %1978 = vmatpush1.bf16.msra.mxu0 0
      %1979 = vmatprep.mubr.bf16.mxu0 0
      %1980 = vmatmul.mubr.bf16.gmra.mrb[0].mxu0 %v1891
      %v1981 = vpop.f32.mrb[0].mxu0
      %v1982 = vadd.f32 0.0, %v1981
      %v1983 = vpop.f32.mrb[0].mxu0
      %v1984 = vpop.f32.mrb[0].mxu0
      %v1985 = vadd.f32 0.0, %v1984
      %v1986 = vpop.f32.mrb[0].mxu0
      %1987 = vmatprep.mubr.bf16.mxu0 0
      %1988 = vmatmul.mubr.bf16.gmra.mrb[0].mxu0 %v1894
      %v1989 = vpop.f32.mrb[0].mxu0
      %v1990 = vadd.f32 0.0, %v1989
      %v1991 = vpop.f32.mrb[0].mxu0
      %v1992 = vpop.f32.mrb[0].mxu0
      %v1993 = vadd.f32 0.0, %v1992
      %v1994 = vpop.f32.mrb[0].mxu0
      %1995 = vmatprep.mubr.bf16.mxu0 0
      %1996 = vmatmul.mubr.bf16.gmra.mrb[0].mxu0 %v1897
      %v1997 = vpop.f32.mrb[0].mxu0
      %v1998 = vadd.f32 0.0, %v1997
      %v1999 = vpop.f32.mrb[0].mxu0
      %v2000 = vpop.f32.mrb[0].mxu0
      %v2001 = vadd.f32 0.0, %v2000
      %v2002 = vpop.f32.mrb[0].mxu0
      %2003 = vmatprep.mubr.bf16.mxu0 0
      %2004 = vmatmul.mubr.bf16.gmra.mrb[0].mxu0 %v1900
      %v2005 = vpop.f32.mrb[0].mxu0
      %v2006 = vadd.f32 0.0, %v2005
      %v2007 = vpop.f32.mrb[0].mxu0
      %v2008 = vpop.f32.mrb[0].mxu0
      %v2009 = vadd.f32 0.0, %v2008
      %v2010 = vpop.f32.mrb[0].mxu0
      %2011 = vmatprep.mubr.bf16.mxu0 0
      %2012 = vmatmul.mubr.bf16.gmra.mrb[0].mxu0 %v1903
      %v2013 = vpop.f32.mrb[0].mxu0
      %v2014 = vadd.f32 0.0, %v2013
      %v2015 = vpop.f32.mrb[0].mxu0
      %v2016 = vpop.f32.mrb[0].mxu0
      %v2017 = vadd.f32 0.0, %v2016
      %v2018 = vpop.f32.mrb[0].mxu0
      %2019 = vmatprep.mubr.bf16.mxu0 0
      %2020 = vmatmul.mubr.bf16.gmra.mrb[0].mxu0 %v1906
      %v2021 = vpop.f32.mrb[0].mxu0
      %v2022 = vadd.f32 0.0, %v2021
      %v2023 = vpop.f32.mrb[0].mxu0
      %v2024 = vpop.f32.mrb[0].mxu0
      %v2025 = vadd.f32 0.0, %v2024
      %v2026 = vpop.f32.mrb[0].mxu0
      %2027 = vmatprep.mubr.bf16.mxu0 0
      %2028 = vmatmul.mubr.bf16.gmra.mrb[0].mxu0 %v1909
      %v2029 = vpop.f32.mrb[0].mxu0
      %v2030 = vadd.f32 0.0, %v2029
      %v2031 = vpop.f32.mrb[0].mxu0
      %v2032 = vpop.f32.mrb[0].mxu0
      %v2033 = vadd.f32 0.0, %v2032
      %v2034 = vpop.f32.mrb[0].mxu0
      %2035 = vmatprep.mubr.bf16.mxu0 0
      %2036 = vmatmul.mubr.bf16.gmra.mrb[0].mxu0 %v1912
      %v2037 = vpop.f32.mrb[0].mxu0
      %v2038 = vadd.f32 0.0, %v2037
      %v2039 = vpop.f32.mrb[0].mxu0
      %v2040 = vpop.f32.mrb[0].mxu0
      %v2041 = vadd.f32 0.0, %v2040
      %v2042 = vpop.f32.mrb[0].mxu0
      %2043 = vmatprep.mubr.bf16.mxu0 0
      %2044 = vmatmul.mubr.bf16.gmra.mrb[0].mxu0 %v1915
      %v2045 = vpop.f32.mrb[0].mxu0
      %v2046 = vadd.f32 0.0, %v2045
      %v2047 = vpop.f32.mrb[0].mxu0
      %v2048 = vpop.f32.mrb[0].mxu0
      %v2049 = vadd.f32 0.0, %v2048
      %v2050 = vpop.f32.mrb[0].mxu0
      %2051 = vmatprep.mubr.bf16.mxu0 0
      %2052 = vmatmul.mubr.bf16.gmra.mrb[0].mxu0 %v1918
      %v2053 = vpop.f32.mrb[0].mxu0
      %v2054 = vadd.f32 0.0, %v2053
      %v2055 = vpop.f32.mrb[0].mxu0
      %v2056 = vpop.f32.mrb[0].mxu0
      %v2057 = vadd.f32 0.0, %v2056
      %v2058 = vpop.f32.mrb[0].mxu0
      %2059 = vmatprep.mubr.bf16.mxu0 0
      %2060 = vmatmul.mubr.bf16.gmra.mrb[0].mxu0 %v1921
      %v2061 = vpop.f32.mrb[0].mxu0
      %v2062 = vadd.f32 0.0, %v2061
      %v2063 = vpop.f32.mrb[0].mxu0
      %v2064 = vpop.f32.mrb[0].mxu0
      %v2065 = vadd.f32 0.0, %v2064
      %v2066 = vpop.f32.mrb[0].mxu0
      %2067 = vmatprep.mubr.bf16.mxu0 0
      %2068 = vmatmul.mubr.bf16.gmra.mrb[0].mxu0 %v1924
      %v2069 = vpop.f32.mrb[0].mxu0
      %v2070 = vadd.f32 0.0, %v2069
      %v2071 = vpop.f32.mrb[0].mxu0
      %v2072 = vpop.f32.mrb[0].mxu0
      %v2073 = vadd.f32 0.0, %v2072
      %v2074 = vpop.f32.mrb[0].mxu0
      %2075 = vmatprep.mubr.bf16.mxu0 0
      %2076 = vmatmul.mubr.bf16.gmra.mrb[0].mxu0 %v1927
      %v2077 = vpop.f32.mrb[0].mxu0
      %v2078 = vadd.f32 0.0, %v2077
      %v2079 = vpop.f32.mrb[0].mxu0
      %v2080 = vpop.f32.mrb[0].mxu0
      %v2081 = vadd.f32 0.0, %v2080
      %v2082 = vpop.f32.mrb[0].mxu0
      %2083 = vmatprep.mubr.bf16.mxu0 0
      %2084 = vmatmul.mubr.bf16.gmra.mrb[0].mxu0 %v1930
      %v2085 = vpop.f32.mrb[0].mxu0
      %v2086 = vadd.f32 0.0, %v2085
      %v2087 = vpop.f32.mrb[0].mxu0
      %v2088 = vpop.f32.mrb[0].mxu0
      %v2089 = vadd.f32 0.0, %v2088
      %v2090 = vpop.f32.mrb[0].mxu0
      %2091 = vmatprep.mubr.bf16.mxu0 0
      %2092 = vmatmul.mubr.bf16.gmra.mrb[0].mxu0 %v1933
      %v2093 = vpop.f32.mrb[0].mxu0
      %v2094 = vadd.f32 0.0, %v2093
      %v2095 = vpop.f32.mrb[0].mxu0
      %v2096 = vpop.f32.mrb[0].mxu0
      %v2097 = vadd.f32 0.0, %v2096
      %v2098 = vpop.f32.mrb[0].mxu0
      %2099 = vmatprep.mubr.bf16.mxu0 0
      %2100 = vmatmul.mubr.bf16.gmra.mrb[0].mxu0 %v1936
      %v2101 = vpop.f32.mrb[0].mxu0
      %v2102 = vadd.f32 0.0, %v2101
      %v2103 = vpop.f32.mrb[0].mxu0
      %v2104 = vpop.f32.mrb[0].mxu0
      %v2105 = vadd.f32 0.0, %v2104
      %v2106 = vpop.f32.mrb[0].mxu0
      %2107 = vmatprep.mubr.bf16.mxu0 0
      %2108 = vmatmul.mubr.bf16.gmra.mrb[0].mxu0 %v1939
      %v2109 = vpop.f32.mrb[0].mxu0
      %v2110 = vadd.f32 0.0, %v2109
      %v2111 = vpop.f32.mrb[0].mxu0
      %v2112 = vpop.f32.mrb[0].mxu0
      %v2113 = vadd.f32 0.0, %v2112
      %v2114 = vpop.f32.mrb[0].mxu0
      %2115 = vmatprep.mubr.bf16.mxu0 0
      %2116 = vmatmul.mubr.bf16.gmra.mrb[0].mxu0 %v1942
      %v2117 = vpop.f32.mrb[0].mxu0
      %v2118 = vadd.f32 0.0, %v2117
      %v2119 = vpop.f32.mrb[0].mxu0
      %v2120 = vpop.f32.mrb[0].mxu0
      %v2121 = vadd.f32 0.0, %v2120
      %v2122 = vpop.f32.mrb[0].mxu0
      %2123 = vdwg.mxu0
      %v2124 = vadd.f32 %v1677, %v1982
      %v2125 = vadd.f32 %v1678, %v1985
      %v2126 = vadd.f32 %v1679, %v1990
      %v2127 = vadd.f32 %v1680, %v1993
      %v2128 = vadd.f32 %v1681, %v1998
      %v2129 = vadd.f32 %v1682, %v2001
      %v2130 = vadd.f32 %v1683, %v2006
      %v2131 = vadd.f32 %v1684, %v2009
      %v2132 = vadd.f32 %v1685, %v2014
      %v2133 = vadd.f32 %v1686, %v2017
      %v2134 = vadd.f32 %v1687, %v2022
      %v2135 = vadd.f32 %v1688, %v2025
      %v2136 = vadd.f32 %v1689, %v2030
      %v2137 = vadd.f32 %v1690, %v2033
      %v2138 = vadd.f32 %v1691, %v2038
      %v2139 = vadd.f32 %v1692, %v2041
      %v2140 = vadd.f32 %v1693, %v2046
      %v2141 = vadd.f32 %v1694, %v2049
      %v2142 = vadd.f32 %v1695, %v2054
      %v2143 = vadd.f32 %v1696, %v2057
      %v2144 = vadd.f32 %v1697, %v2062
      %v2145 = vadd.f32 %v1698, %v2065
      %v2146 = vadd.f32 %v1699, %v2070
      %v2147 = vadd.f32 %v1700, %v2073
      %v2148 = vadd.f32 %v1701, %v2078
      %v2149 = vadd.f32 %v1702, %v2081
      %v2150 = vadd.f32 %v1703, %v2086
      %v2151 = vadd.f32 %v1704, %v2089
      %v2152 = vadd.f32 %v1705, %v2094
      %v2153 = vadd.f32 %v1706, %v2097
      %v2154 = vadd.f32 %v1707, %v2102
      %v2155 = vadd.f32 %v1708, %v2105
      %v2156 = vadd.f32 %v1709, %v2110
      %v2157 = vadd.f32 %v1710, %v2113
      %v2158 = vadd.f32 %v1711, %v2118
      %v2159 = vadd.f32 %v1712, %v2121
      %v2160 = vld [vmem:[%s206 + $0x8] sm:$0xc]
      %s2161 = scalar_lea.vmem %s210, 10
      %v2162 = vld [vmem:[%s2161] sm:$0x3]
      %v2164 = vunpack.c.l.b16 %v2160
      %v2165 = vpack.c.b16 %v1351, %v2164
      %vm2166 = vcmask 1045504
      %v2167 = vrot.slane %v2165, 2
      %v2168 = vrot.slane %v1388, 2
      %v2169 = vsel %vm2166, %v2167, %v2168
      %v2170 = vrot.slane %v1389, 2
      %v2171 = vsel %vm2166, %v2168, %v2170
      %v2172 = vrot.slane %v1390, 2
      %v2173 = vsel %vm2166, %v2170, %v2172
      %v2174 = vrot.slane %v1391, 2
      %v2175 = vsel %vm2166, %v2172, %v2174
      %v2176 = vrot.slane %v1392, 2
      %v2177 = vsel %vm2166, %v2174, %v2176
      %v2178 = vrot.slane %v1393, 2
      %v2179 = vsel %vm2166, %v2176, %v2178
      %v2180 = vrot.slane %v1394, 2
      %v2181 = vsel %vm2166, %v2178, %v2180
      %v2182 = vrot.slane %v1395, 2
      %v2183 = vsel %vm2166, %v2180, %v2182
      %v2184 = vrot.slane %v1396, 2
      %v2185 = vsel %vm2166, %v2182, %v2184
      %v2186 = vrot.slane %v1397, 2
      %v2187 = vsel %vm2166, %v2184, %v2186
      %v2188 = vrot.slane %v1398, 2
      %v2189 = vsel %vm2166, %v2186, %v2188
      %v2190 = vrot.slane %v1399, 2
      %v2191 = vsel %vm2166, %v2188, %v2190
      %v2192 = vrot.slane %v1400, 2
      %v2193 = vsel %vm2166, %v2190, %v2192
      %v2194 = vrot.slane %v1401, 2
      %v2195 = vsel %vm2166, %v2192, %v2194
      %v2196 = vrot.slane %v1402, 2
      %v2197 = vsel %vm2166, %v2194, %v2196
      %v2198 = vrot.slane %v1403, 2
      %v2199 = vsel %vm2166, %v2196, %v2198
      %v2200 = vrot.slane %v1404, 2
      %v2201 = vsel %vm2166, %v2198, %v2200
      %v2202 = vrot.slane %v1718, 2
      %v2203 = vsel %vm2166, %v2200, %v2202
      %v2205 = vsel %vm505, %v2169, 0
      %v2208 = vsel %vm505, %v2171, 0
      %v2211 = vsel %vm505, %v2173, 0
      %v2214 = vsel %vm505, %v2175, 0
      %v2217 = vsel %vm505, %v2177, 0
      %v2220 = vsel %vm505, %v2179, 0
      %v2223 = vsel %vm505, %v2181, 0
      %v2226 = vsel %vm505, %v2183, 0
      %v2229 = vsel %vm505, %v2185, 0
      %v2232 = vsel %vm505, %v2187, 0
      %v2235 = vsel %vm505, %v2189, 0
      %v2238 = vsel %vm505, %v2191, 0
      %v2241 = vsel %vm505, %v2193, 0
      %v2244 = vsel %vm505, %v2195, 0
      %v2247 = vsel %vm505, %v2197, 0
      %v2250 = vsel %vm505, %v2199, 0
      %v2253 = vsel %vm505, %v2201, 0
      %v2256 = vsel %vm505, %v2203, 0
      %v2259 = vand.u32 %v2162, %v563
      %2261 = vmatprep.subr.bf16.mxu0 0
      %2262 = vmatpush1.bf16.msra.mxu0 %v2259
      %2263 = vmatprep.subr.bf16.mxu0 0
      %2264 = vmatpush1.bf16.msra.mxu0 0
      %2265 = vmatprep.subr.bf16.mxu0 0
      %2266 = vmatpush1.bf16.msra.mxu0 0
      %2267 = vmatprep.subr.bf16.mxu0 0
      %2268 = vmatpush1.bf16.msra.mxu0 0
      %2269 = vmatprep.subr.bf16.mxu0 0
      %2270 = vmatpush1.bf16.msra.mxu0 0
      %2271 = vmatprep.subr.bf16.mxu0 0
      %2272 = vmatpush1.bf16.msra.mxu0 0
      %2273 = vmatprep.subr.bf16.mxu0 0
      %2274 = vmatpush1.bf16.msra.mxu0 0
      %2275 = vmatprep.subr.bf16.mxu0 0
      %2276 = vmatpush1.bf16.msra.mxu0 0
      %2277 = vmatprep.subr.bf16.mxu0 0
      %2278 = vmatpush1.bf16.msra.mxu0 0
      %2279 = vmatprep.subr.bf16.mxu0 0
      %2280 = vmatpush1.bf16.msra.mxu0 0
      %2281 = vmatprep.subr.bf16.mxu0 0
      %2282 = vmatpush1.bf16.msra.mxu0 0
      %2283 = vmatprep.subr.bf16.mxu0 0
      %2284 = vmatpush1.bf16.msra.mxu0 0
      %2285 = vmatprep.subr.bf16.mxu0 0
      %2286 = vmatpush1.bf16.msra.mxu0 0
      %2287 = vmatprep.subr.bf16.mxu0 0
      %2288 = vmatpush1.bf16.msra.mxu0 0
      %2289 = vmatprep.subr.bf16.mxu0 0
      %2290 = vmatpush1.bf16.msra.mxu0 0
      %2291 = vmatprep.subr.bf16.mxu0 0
      %2292 = vmatpush1.bf16.msra.mxu0 0
      %2293 = vmatprep.mubr.bf16.mxu0 0
      %2294 = vmatmul.mubr.bf16.gmra.mrb[0].mxu0 %v2205
      %v2295 = vpop.f32.mrb[0].mxu0
      %v2296 = vadd.f32 0.0, %v2295
      %v2297 = vpop.f32.mrb[0].mxu0
      %v2298 = vpop.f32.mrb[0].mxu0
      %v2299 = vadd.f32 0.0, %v2298
      %v2300 = vpop.f32.mrb[0].mxu0
      %2301 = vmatprep.mubr.bf16.mxu0 0
      %2302 = vmatmul.mubr.bf16.gmra.mrb[0].mxu0 %v2208
      %v2303 = vpop.f32.mrb[0].mxu0
      %v2304 = vadd.f32 0.0, %v2303
      %v2305 = vpop.f32.mrb[0].mxu0
      %v2306 = vpop.f32.mrb[0].mxu0
      %v2307 = vadd.f32 0.0, %v2306
      %v2308 = vpop.f32.mrb[0].mxu0
      %2309 = vmatprep.mubr.bf16.mxu0 0
      %2310 = vmatmul.mubr.bf16.gmra.mrb[0].mxu0 %v2211
      %v2311 = vpop.f32.mrb[0].mxu0
      %v2312 = vadd.f32 0.0, %v2311
      %v2313 = vpop.f32.mrb[0].mxu0
      %v2314 = vpop.f32.mrb[0].mxu0
      %v2315 = vadd.f32 0.0, %v2314
      %v2316 = vpop.f32.mrb[0].mxu0
      %2317 = vmatprep.mubr.bf16.mxu0 0
      %2318 = vmatmul.mubr.bf16.gmra.mrb[0].mxu0 %v2214
      %v2319 = vpop.f32.mrb[0].mxu0
      %v2320 = vadd.f32 0.0, %v2319
      %v2321 = vpop.f32.mrb[0].mxu0
      %v2322 = vpop.f32.mrb[0].mxu0
      %v2323 = vadd.f32 0.0, %v2322
      %v2324 = vpop.f32.mrb[0].mxu0
      %2325 = vmatprep.mubr.bf16.mxu0 0
      %2326 = vmatmul.mubr.bf16.gmra.mrb[0].mxu0 %v2217
      %v2327 = vpop.f32.mrb[0].mxu0
      %v2328 = vadd.f32 0.0, %v2327
      %v2329 = vpop.f32.mrb[0].mxu0
      %v2330 = vpop.f32.mrb[0].mxu0
      %v2331 = vadd.f32 0.0, %v2330
      %v2332 = vpop.f32.mrb[0].mxu0
      %2333 = vmatprep.mubr.bf16.mxu0 0
      %2334 = vmatmul.mubr.bf16.gmra.mrb[0].mxu0 %v2220
      %v2335 = vpop.f32.mrb[0].mxu0
      %v2336 = vadd.f32 0.0, %v2335
      %v2337 = vpop.f32.mrb[0].mxu0
      %v2338 = vpop.f32.mrb[0].mxu0
      %v2339 = vadd.f32 0.0, %v2338
      %v2340 = vpop.f32.mrb[0].mxu0
      %2341 = vmatprep.mubr.bf16.mxu0 0
      %2342 = vmatmul.mubr.bf16.gmra.mrb[0].mxu0 %v2223
      %v2343 = vpop.f32.mrb[0].mxu0
      %v2344 = vadd.f32 0.0, %v2343
      %v2345 = vpop.f32.mrb[0].mxu0
      %v2346 = vpop.f32.mrb[0].mxu0
      %v2347 = vadd.f32 0.0, %v2346
      %v2348 = vpop.f32.mrb[0].mxu0
      %2349 = vmatprep.mubr.bf16.mxu0 0
      %2350 = vmatmul.mubr.bf16.gmra.mrb[0].mxu0 %v2226
      %v2351 = vpop.f32.mrb[0].mxu0
      %v2352 = vadd.f32 0.0, %v2351
      %v2353 = vpop.f32.mrb[0].mxu0
      %v2354 = vpop.f32.mrb[0].mxu0
      %v2355 = vadd.f32 0.0, %v2354
      %v2356 = vpop.f32.mrb[0].mxu0
      %2357 = vmatprep.mubr.bf16.mxu0 0
      %2358 = vmatmul.mubr.bf16.gmra.mrb[0].mxu0 %v2229
      %v2359 = vpop.f32.mrb[0].mxu0
      %v2360 = vadd.f32 0.0, %v2359
      %v2361 = vpop.f32.mrb[0].mxu0
      %v2362 = vpop.f32.mrb[0].mxu0
      %v2363 = vadd.f32 0.0, %v2362
      %v2364 = vpop.f32.mrb[0].mxu0
      %2365 = vmatprep.mubr.bf16.mxu0 0
      %2366 = vmatmul.mubr.bf16.gmra.mrb[0].mxu0 %v2232
      %v2367 = vpop.f32.mrb[0].mxu0
      %v2368 = vadd.f32 0.0, %v2367
      %v2369 = vpop.f32.mrb[0].mxu0
      %v2370 = vpop.f32.mrb[0].mxu0
      %v2371 = vadd.f32 0.0, %v2370
      %v2372 = vpop.f32.mrb[0].mxu0
      %2373 = vmatprep.mubr.bf16.mxu0 0
      %2374 = vmatmul.mubr.bf16.gmra.mrb[0].mxu0 %v2235
      %v2375 = vpop.f32.mrb[0].mxu0
      %v2376 = vadd.f32 0.0, %v2375
      %v2377 = vpop.f32.mrb[0].mxu0
      %v2378 = vpop.f32.mrb[0].mxu0
      %v2379 = vadd.f32 0.0, %v2378
      %v2380 = vpop.f32.mrb[0].mxu0
      %2381 = vmatprep.mubr.bf16.mxu0 0
      %2382 = vmatmul.mubr.bf16.gmra.mrb[0].mxu0 %v2238
      %v2383 = vpop.f32.mrb[0].mxu0
      %v2384 = vadd.f32 0.0, %v2383
      %v2385 = vpop.f32.mrb[0].mxu0
      %v2386 = vpop.f32.mrb[0].mxu0
      %v2387 = vadd.f32 0.0, %v2386
      %v2388 = vpop.f32.mrb[0].mxu0
      %2389 = vmatprep.mubr.bf16.mxu0 0
      %2390 = vmatmul.mubr.bf16.gmra.mrb[0].mxu0 %v2241
      %v2391 = vpop.f32.mrb[0].mxu0
      %v2392 = vadd.f32 0.0, %v2391
      %v2393 = vpop.f32.mrb[0].mxu0
      %v2394 = vpop.f32.mrb[0].mxu0
      %v2395 = vadd.f32 0.0, %v2394
      %v2396 = vpop.f32.mrb[0].mxu0
      %2397 = vmatprep.mubr.bf16.mxu0 0
      %2398 = vmatmul.mubr.bf16.gmra.mrb[0].mxu0 %v2244
      %v2399 = vpop.f32.mrb[0].mxu0
      %v2400 = vadd.f32 0.0, %v2399
      %v2401 = vpop.f32.mrb[0].mxu0
      %v2402 = vpop.f32.mrb[0].mxu0
      %v2403 = vadd.f32 0.0, %v2402
      %v2404 = vpop.f32.mrb[0].mxu0
      %2405 = vmatprep.mubr.bf16.mxu0 0
      %2406 = vmatmul.mubr.bf16.gmra.mrb[0].mxu0 %v2247
      %v2407 = vpop.f32.mrb[0].mxu0
      %v2408 = vadd.f32 0.0, %v2407
      %v2409 = vpop.f32.mrb[0].mxu0
      %v2410 = vpop.f32.mrb[0].mxu0
      %v2411 = vadd.f32 0.0, %v2410
      %v2412 = vpop.f32.mrb[0].mxu0
      %2413 = vmatprep.mubr.bf16.mxu0 0
      %2414 = vmatmul.mubr.bf16.gmra.mrb[0].mxu0 %v2250
      %v2415 = vpop.f32.mrb[0].mxu0
      %v2416 = vadd.f32 0.0, %v2415
      %v2417 = vpop.f32.mrb[0].mxu0
      %v2418 = vpop.f32.mrb[0].mxu0
      %v2419 = vadd.f32 0.0, %v2418
      %v2420 = vpop.f32.mrb[0].mxu0
      %2421 = vmatprep.mubr.bf16.mxu0 0
      %2422 = vmatmul.mubr.bf16.gmra.mrb[0].mxu0 %v2253
      %v2423 = vpop.f32.mrb[0].mxu0
      %v2424 = vadd.f32 0.0, %v2423
      %v2425 = vpop.f32.mrb[0].mxu0
      %v2426 = vpop.f32.mrb[0].mxu0
      %v2427 = vadd.f32 0.0, %v2426
      %v2428 = vpop.f32.mrb[0].mxu0
      %2429 = vmatprep.mubr.bf16.mxu0 0
      %2430 = vmatmul.mubr.bf16.gmra.mrb[0].mxu0 %v2256
      %v2431 = vpop.f32.mrb[0].mxu0
      %v2432 = vadd.f32 0.0, %v2431
      %v2433 = vpop.f32.mrb[0].mxu0
      %v2434 = vpop.f32.mrb[0].mxu0
      %v2435 = vadd.f32 0.0, %v2434
      %v2436 = vpop.f32.mrb[0].mxu0
      %2437 = vdwg.mxu0
      %v2438 = vadd.f32 %v2124, %v2296
      %v2439 = vadd.f32 %v2125, %v2299
      %v2440 = vadd.f32 %v2126, %v2304
      %v2441 = vadd.f32 %v2127, %v2307
      %v2442 = vadd.f32 %v2128, %v2312
      %v2443 = vadd.f32 %v2129, %v2315
      %v2444 = vadd.f32 %v2130, %v2320
      %v2445 = vadd.f32 %v2131, %v2323
      %v2446 = vadd.f32 %v2132, %v2328
      %v2447 = vadd.f32 %v2133, %v2331
      %v2448 = vadd.f32 %v2134, %v2336
      %v2449 = vadd.f32 %v2135, %v2339
      %v2450 = vadd.f32 %v2136, %v2344
      %v2451 = vadd.f32 %v2137, %v2347
      %v2452 = vadd.f32 %v2138, %v2352
      %v2453 = vadd.f32 %v2139, %v2355
      %v2454 = vadd.f32 %v2140, %v2360
      %v2455 = vadd.f32 %v2141, %v2363
      %v2456 = vadd.f32 %v2142, %v2368
      %v2457 = vadd.f32 %v2143, %v2371
      %v2458 = vadd.f32 %v2144, %v2376
      %v2459 = vadd.f32 %v2145, %v2379
      %v2460 = vadd.f32 %v2146, %v2384
      %v2461 = vadd.f32 %v2147, %v2387
      %v2462 = vadd.f32 %v2148, %v2392
      %v2463 = vadd.f32 %v2149, %v2395
      %v2464 = vadd.f32 %v2150, %v2400
      %v2465 = vadd.f32 %v2151, %v2403
      %v2466 = vadd.f32 %v2152, %v2408
      %v2467 = vadd.f32 %v2153, %v2411
      %v2468 = vadd.f32 %v2154, %v2416
      %v2469 = vadd.f32 %v2155, %v2419
      %v2470 = vadd.f32 %v2156, %v2424
      %v2471 = vadd.f32 %v2157, %v2427
      %v2472 = vadd.f32 %v2158, %v2432
      %v2473 = vadd.f32 %v2159, %v2435
      %v2474 = vld [vmem:[%s206 + $0x10] sm:$0xc]
      %v2475 = vld [vmem:[%s206 + $0x14] sm:$0xf]
      %v2476 = vld [vmem:[%s206 + $0x18] sm:$0xf]
      %v2477 = vld [vmem:[%s206 + $0x1c] sm:$0xf]
      %v2478 = vld [vmem:[%s206 + $0x20] sm:$0xf]
      %v2479 = vld [vmem:[%s206 + $0x24] sm:$0xf]
      %v2480 = vld [vmem:[%s206 + $0x28] sm:$0xf]
      %v2481 = vld [vmem:[%s206 + $0x2c] sm:$0xf]
      %v2482 = vld [vmem:[%s206 + $0x30] sm:$0xf]
      %v2483 = vld [vmem:[%s206 + $0x34] sm:$0xf]
      %v2484 = vld [vmem:[%s206 + $0x38] sm:$0xf]
      %v2485 = vld [vmem:[%s206 + $0x3c] sm:$0xf]
      %v2486 = vld [vmem:[%s206 + $0x40] sm:$0xf]
      %v2487 = vld [vmem:[%s206 + $0x44] sm:$0xf]
      %v2488 = vld [vmem:[%s206 + $0x48] sm:$0xf]
      %v2489 = vld [vmem:[%s206 + $0x4c] sm:$0xf]
      %v2490 = vld [vmem:[%s206 + $0x50] sm:$0xf]
      %v2491 = vld [vmem:[%s206 + $0x54] sm:$0xf]
      %v2492 = vld [vmem:[%s206 + $0x58] sm:$0xf]
      %v2493 = vld [vmem:[%s206 + $0x5c] sm:$0xf]
      %v2494 = vld [vmem:[%s206 + $0x60] sm:$0xf]
      %v2495 = vld [vmem:[%s206 + $0x64] sm:$0xf]
      %v2496 = vld [vmem:[%s206 + $0x68] sm:$0xf]
      %v2497 = vld [vmem:[%s206 + $0x6c] sm:$0xf]
      %v2498 = vld [vmem:[%s206 + $0x70] sm:$0xf]
      %v2499 = vld [vmem:[%s206 + $0x74] sm:$0xf]
      %v2500 = vld [vmem:[%s206 + $0x78] sm:$0xf]
      %v2501 = vld [vmem:[%s206 + $0x7c] sm:$0xf]
      %v2502 = vld [vmem:[%s206 + $0x80] sm:$0xf]
      %v2503 = vld [vmem:[%s206 + $0x84] sm:$0xf]
      %v2504 = vld [vmem:[%s206 + $0x88] sm:$0xf]
      %v2505 = vld [vmem:[%s206 + $0x8c] sm:$0xf]
      %v2506 = vld [vmem:[%s206 + $0x90] sm:$0xf]
      %v2507 = vld [vmem:[%s206 + $0x94] sm:$0xf]
      %v2508 = vld [vmem:[%s206 + $0x98] sm:$0xf]
      %v2509 = vld [vmem:[%s206 + $0x9c] sm:$0xf]
      %v2510 = vld [vmem:[%s206 + $0xa0] sm:$0x3]
      %s2511 = scalar_lea.vmem %s210, 12
      %v2512 = vld [vmem:[%s2511] sm:$0x3]
      %v2550 = vunpack.c.l.b16 %v2474
      %v2551 = vunpack.c.l.b16 %v2475
      %v2552 = vunpack.c.l.b16 %v2476
      %v2553 = vunpack.c.l.b16 %v2477
      %v2554 = vunpack.c.l.b16 %v2478
      %v2555 = vunpack.c.l.b16 %v2479
      %v2556 = vunpack.c.l.b16 %v2480
      %v2557 = vunpack.c.l.b16 %v2481
      %v2558 = vunpack.c.l.b16 %v2482
      %v2559 = vunpack.c.l.b16 %v2483
      %v2560 = vunpack.c.l.b16 %v2484
      %v2561 = vunpack.c.l.b16 %v2485
      %v2562 = vunpack.c.l.b16 %v2486
      %v2563 = vunpack.c.l.b16 %v2487
      %v2564 = vunpack.c.l.b16 %v2488
      %v2565 = vunpack.c.l.b16 %v2489
      %v2566 = vunpack.c.l.b16 %v2490
      %v2567 = vunpack.c.l.b16 %v2491
      %v2568 = vunpack.c.l.b16 %v2492
      %v2569 = vunpack.c.l.b16 %v2493
      %v2570 = vunpack.c.l.b16 %v2494
      %v2571 = vunpack.c.l.b16 %v2495
      %v2572 = vunpack.c.l.b16 %v2496
      %v2573 = vunpack.c.l.b16 %v2497
      %v2574 = vunpack.c.l.b16 %v2498
      %v2575 = vunpack.c.l.b16 %v2499
      %v2576 = vunpack.c.l.b16 %v2500
      %v2577 = vunpack.c.l.b16 %v2501
      %v2578 = vunpack.c.l.b16 %v2502
      %v2579 = vunpack.c.l.b16 %v2503
      %v2580 = vunpack.c.l.b16 %v2504
      %v2581 = vunpack.c.l.b16 %v2505
      %v2582 = vunpack.c.l.b16 %v2506
      %v2583 = vunpack.c.l.b16 %v2507
      %v2584 = vunpack.c.l.b16 %v2508
      %v2585 = vunpack.c.l.b16 %v2509
      %v2586 = vunpack.c.l.b16 %v2510
      %v2587 = vpack.c.b16 %v2551, %v2550
      %v2588 = vpack.c.b16 %v2553, %v2552
      %v2589 = vpack.c.b16 %v2555, %v2554
      %v2590 = vpack.c.b16 %v2557, %v2556
      %v2591 = vpack.c.b16 %v2559, %v2558
      %v2592 = vpack.c.b16 %v2561, %v2560
      %v2593 = vpack.c.b16 %v2563, %v2562
      %v2594 = vpack.c.b16 %v2565, %v2564
      %v2595 = vpack.c.b16 %v2567, %v2566
      %v2596 = vpack.c.b16 %v2569, %v2568
      %v2597 = vpack.c.b16 %v2571, %v2570
      %v2598 = vpack.c.b16 %v2573, %v2572
      %v2599 = vpack.c.b16 %v2575, %v2574
      %v2600 = vpack.c.b16 %v2577, %v2576
      %v2601 = vpack.c.b16 %v2579, %v2578
      %v2602 = vpack.c.b16 %v2581, %v2580
      %v2603 = vpack.c.b16 %v2583, %v2582
      %v2604 = vpack.c.b16 %v2585, %v2584
      %v2605 = vpack.c.b16 %v2586, %v2586
      %v2606 = vrot.slane %v2587, 2
      %v2607 = vrot.slane %v2588, 2
      %v2608 = vsel %vm2166, %v2606, %v2607
      %v2609 = vrot.slane %v2589, 2
      %v2610 = vsel %vm2166, %v2607, %v2609
      %v2611 = vrot.slane %v2590, 2
      %v2612 = vsel %vm2166, %v2609, %v2611
      %v2613 = vrot.slane %v2591, 2
      %v2614 = vsel %vm2166, %v2611, %v2613
      %v2615 = vrot.slane %v2592, 2
      %v2616 = vsel %vm2166, %v2613, %v2615
      %v2617 = vrot.slane %v2593, 2
      %v2618 = vsel %vm2166, %v2615, %v2617
      %v2619 = vrot.slane %v2594, 2
      %v2620 = vsel %vm2166, %v2617, %v2619
      %v2621 = vrot.slane %v2595, 2
      %v2622 = vsel %vm2166, %v2619, %v2621
      %v2623 = vrot.slane %v2596, 2
      %v2624 = vsel %vm2166, %v2621, %v2623
      %v2625 = vrot.slane %v2597, 2
      %v2626 = vsel %vm2166, %v2623, %v2625
      %v2627 = vrot.slane %v2598, 2
      %v2628 = vsel %vm2166, %v2625, %v2627
      %v2629 = vrot.slane %v2599, 2
      %v2630 = vsel %vm2166, %v2627, %v2629
      %v2631 = vrot.slane %v2600, 2
      %v2632 = vsel %vm2166, %v2629, %v2631
      %v2633 = vrot.slane %v2601, 2
      %v2634 = vsel %vm2166, %v2631, %v2633
      %v2635 = vrot.slane %v2602, 2
      %v2636 = vsel %vm2166, %v2633, %v2635
      %v2637 = vrot.slane %v2603, 2
      %v2638 = vsel %vm2166, %v2635, %v2637
      %v2639 = vrot.slane %v2604, 2
      %v2640 = vsel %vm2166, %v2637, %v2639
      %v2641 = vrot.slane %v2605, 2
      %v2642 = vsel %vm2166, %v2639, %v2641
      %v2644 = vsel %vm505, %v2608, 0
      %v2647 = vsel %vm505, %v2610, 0
      %v2650 = vsel %vm505, %v2612, 0
      %v2653 = vsel %vm505, %v2614, 0
      %v2656 = vsel %vm505, %v2616, 0
      %v2659 = vsel %vm505, %v2618, 0
      %v2662 = vsel %vm505, %v2620, 0
      %v2665 = vsel %vm505, %v2622, 0
      %v2668 = vsel %vm505, %v2624, 0
      %v2671 = vsel %vm505, %v2626, 0
      %v2674 = vsel %vm505, %v2628, 0
      %v2677 = vsel %vm505, %v2630, 0
      %v2680 = vsel %vm505, %v2632, 0
      %v2683 = vsel %vm505, %v2634, 0
      %v2686 = vsel %vm505, %v2636, 0
      %v2689 = vsel %vm505, %v2638, 0
      %v2692 = vsel %vm505, %v2640, 0
      %v2695 = vsel %vm505, %v2642, 0
      %v2698 = vand.u32 %v2512, %v563
      %2700 = vmatprep.subr.bf16.mxu0 0
      %2701 = vmatpush1.bf16.msra.mxu0 %v2698
      %2702 = vmatprep.subr.bf16.mxu0 0
      %2703 = vmatpush1.bf16.msra.mxu0 0
      %2704 = vmatprep.subr.bf16.mxu0 0
      %2705 = vmatpush1.bf16.msra.mxu0 0
      %2706 = vmatprep.subr.bf16.mxu0 0
      %2707 = vmatpush1.bf16.msra.mxu0 0
      %2708 = vmatprep.subr.bf16.mxu0 0
      %2709 = vmatpush1.bf16.msra.mxu0 0
      %2710 = vmatprep.subr.bf16.mxu0 0
      %2711 = vmatpush1.bf16.msra.mxu0 0
      %2712 = vmatprep.subr.bf16.mxu0 0
      %2713 = vmatpush1.bf16.msra.mxu0 0
      %2714 = vmatprep.subr.bf16.mxu0 0
      %2715 = vmatpush1.bf16.msra.mxu0 0
      %2716 = vmatprep.subr.bf16.mxu0 0
      %2717 = vmatpush1.bf16.msra.mxu0 0
      %2718 = vmatprep.subr.bf16.mxu0 0
      %2719 = vmatpush1.bf16.msra.mxu0 0
      %2720 = vmatprep.subr.bf16.mxu0 0
      %2721 = vmatpush1.bf16.msra.mxu0 0
      %2722 = vmatprep.subr.bf16.mxu0 0
      %2723 = vmatpush1.bf16.msra.mxu0 0
      %2724 = vmatprep.subr.bf16.mxu0 0
      %2725 = vmatpush1.bf16.msra.mxu0 0
      %2726 = vmatprep.subr.bf16.mxu0 0
      %2727 = vmatpush1.bf16.msra.mxu0 0
      %2728 = vmatprep.subr.bf16.mxu0 0
      %2729 = vmatpush1.bf16.msra.mxu0 0
      %2730 = vmatprep.subr.bf16.mxu0 0
      %2731 = vmatpush1.bf16.msra.mxu0 0
      %2732 = vmatprep.mubr.bf16.mxu0 0
      %2733 = vmatmul.mubr.bf16.gmra.mrb[0].mxu0 %v2644
      %v2734 = vpop.f32.mrb[0].mxu0
      %v2735 = vadd.f32 0.0, %v2734
      %v2736 = vpop.f32.mrb[0].mxu0
      %v2737 = vpop.f32.mrb[0].mxu0
      %v2738 = vadd.f32 0.0, %v2737
      %v2739 = vpop.f32.mrb[0].mxu0
      %2740 = vmatprep.mubr.bf16.mxu0 0
      %2741 = vmatmul.mubr.bf16.gmra.mrb[0].mxu0 %v2647
      %v2742 = vpop.f32.mrb[0].mxu0
      %v2743 = vadd.f32 0.0, %v2742
      %v2744 = vpop.f32.mrb[0].mxu0
      %v2745 = vpop.f32.mrb[0].mxu0
      %v2746 = vadd.f32 0.0, %v2745
      %v2747 = vpop.f32.mrb[0].mxu0
      %2748 = vmatprep.mubr.bf16.mxu0 0
      %2749 = vmatmul.mubr.bf16.gmra.mrb[0].mxu0 %v2650
      %v2750 = vpop.f32.mrb[0].mxu0
      %v2751 = vadd.f32 0.0, %v2750
      %v2752 = vpop.f32.mrb[0].mxu0
      %v2753 = vpop.f32.mrb[0].mxu0
      %v2754 = vadd.f32 0.0, %v2753
      %v2755 = vpop.f32.mrb[0].mxu0
      %2756 = vmatprep.mubr.bf16.mxu0 0
      %2757 = vmatmul.mubr.bf16.gmra.mrb[0].mxu0 %v2653
      %v2758 = vpop.f32.mrb[0].mxu0
      %v2759 = vadd.f32 0.0, %v2758
      %v2760 = vpop.f32.mrb[0].mxu0
      %v2761 = vpop.f32.mrb[0].mxu0
      %v2762 = vadd.f32 0.0, %v2761
      %v2763 = vpop.f32.mrb[0].mxu0
      %2764 = vmatprep.mubr.bf16.mxu0 0
      %2765 = vmatmul.mubr.bf16.gmra.mrb[0].mxu0 %v2656
      %v2766 = vpop.f32.mrb[0].mxu0
      %v2767 = vadd.f32 0.0, %v2766
      %v2768 = vpop.f32.mrb[0].mxu0
      %v2769 = vpop.f32.mrb[0].mxu0
      %v2770 = vadd.f32 0.0, %v2769
      %v2771 = vpop.f32.mrb[0].mxu0
      %2772 = vmatprep.mubr.bf16.mxu0 0
      %2773 = vmatmul.mubr.bf16.gmra.mrb[0].mxu0 %v2659
      %v2774 = vpop.f32.mrb[0].mxu0
      %v2775 = vadd.f32 0.0, %v2774
      %v2776 = vpop.f32.mrb[0].mxu0
      %v2777 = vpop.f32.mrb[0].mxu0
      %v2778 = vadd.f32 0.0, %v2777
      %v2779 = vpop.f32.mrb[0].mxu0
      %2780 = vmatprep.mubr.bf16.mxu0 0
      %2781 = vmatmul.mubr.bf16.gmra.mrb[0].mxu0 %v2662
      %v2782 = vpop.f32.mrb[0].mxu0
      %v2783 = vadd.f32 0.0, %v2782
      %v2784 = vpop.f32.mrb[0].mxu0
      %v2785 = vpop.f32.mrb[0].mxu0
      %v2786 = vadd.f32 0.0, %v2785
      %v2787 = vpop.f32.mrb[0].mxu0
      %2788 = vmatprep.mubr.bf16.mxu0 0
      %2789 = vmatmul.mubr.bf16.gmra.mrb[0].mxu0 %v2665
      %v2790 = vpop.f32.mrb[0].mxu0
      %v2791 = vadd.f32 0.0, %v2790
      %v2792 = vpop.f32.mrb[0].mxu0
      %v2793 = vpop.f32.mrb[0].mxu0
      %v2794 = vadd.f32 0.0, %v2793
      %v2795 = vpop.f32.mrb[0].mxu0
      %2796 = vmatprep.mubr.bf16.mxu0 0
      %2797 = vmatmul.mubr.bf16.gmra.mrb[0].mxu0 %v2668
      %v2798 = vpop.f32.mrb[0].mxu0
      %v2799 = vadd.f32 0.0, %v2798
      %v2800 = vpop.f32.mrb[0].mxu0
      %v2801 = vpop.f32.mrb[0].mxu0
      %v2802 = vadd.f32 0.0, %v2801
      %v2803 = vpop.f32.mrb[0].mxu0
      %2804 = vmatprep.mubr.bf16.mxu0 0
      %2805 = vmatmul.mubr.bf16.gmra.mrb[0].mxu0 %v2671
      %v2806 = vpop.f32.mrb[0].mxu0
      %v2807 = vadd.f32 0.0, %v2806
      %v2808 = vpop.f32.mrb[0].mxu0
      %v2809 = vpop.f32.mrb[0].mxu0
      %v2810 = vadd.f32 0.0, %v2809
      %v2811 = vpop.f32.mrb[0].mxu0
      %2812 = vmatprep.mubr.bf16.mxu0 0
      %2813 = vmatmul.mubr.bf16.gmra.mrb[0].mxu0 %v2674
      %v2814 = vpop.f32.mrb[0].mxu0
      %v2815 = vadd.f32 0.0, %v2814
      %v2816 = vpop.f32.mrb[0].mxu0
      %v2817 = vpop.f32.mrb[0].mxu0
      %v2818 = vadd.f32 0.0, %v2817
      %v2819 = vpop.f32.mrb[0].mxu0
      %2820 = vmatprep.mubr.bf16.mxu0 0
      %2821 = vmatmul.mubr.bf16.gmra.mrb[0].mxu0 %v2677
      %v2822 = vpop.f32.mrb[0].mxu0
      %v2823 = vadd.f32 0.0, %v2822
      %v2824 = vpop.f32.mrb[0].mxu0
      %v2825 = vpop.f32.mrb[0].mxu0
      %v2826 = vadd.f32 0.0, %v2825
      %v2827 = vpop.f32.mrb[0].mxu0
      %2828 = vmatprep.mubr.bf16.mxu0 0
      %2829 = vmatmul.mubr.bf16.gmra.mrb[0].mxu0 %v2680
      %v2830 = vpop.f32.mrb[0].mxu0
      %v2831 = vadd.f32 0.0, %v2830
      %v2832 = vpop.f32.mrb[0].mxu0
      %v2833 = vpop.f32.mrb[0].mxu0
      %v2834 = vadd.f32 0.0, %v2833
      %v2835 = vpop.f32.mrb[0].mxu0
      %2836 = vmatprep.mubr.bf16.mxu0 0
      %2837 = vmatmul.mubr.bf16.gmra.mrb[0].mxu0 %v2683
      %v2838 = vpop.f32.mrb[0].mxu0
      %v2839 = vadd.f32 0.0, %v2838
      %v2840 = vpop.f32.mrb[0].mxu0
      %v2841 = vpop.f32.mrb[0].mxu0
      %v2842 = vadd.f32 0.0, %v2841
      %v2843 = vpop.f32.mrb[0].mxu0
      %2844 = vmatprep.mubr.bf16.mxu0 0
      %2845 = vmatmul.mubr.bf16.gmra.mrb[0].mxu0 %v2686
      %v2846 = vpop.f32.mrb[0].mxu0
      %v2847 = vadd.f32 0.0, %v2846
      %v2848 = vpop.f32.mrb[0].mxu0
      %v2849 = vpop.f32.mrb[0].mxu0
      %v2850 = vadd.f32 0.0, %v2849
      %v2851 = vpop.f32.mrb[0].mxu0
      %2852 = vmatprep.mubr.bf16.mxu0 0
      %2853 = vmatmul.mubr.bf16.gmra.mrb[0].mxu0 %v2689
      %v2854 = vpop.f32.mrb[0].mxu0
      %v2855 = vadd.f32 0.0, %v2854
      %v2856 = vpop.f32.mrb[0].mxu0
      %v2857 = vpop.f32.mrb[0].mxu0
      %v2858 = vadd.f32 0.0, %v2857
      %v2859 = vpop.f32.mrb[0].mxu0
      %2860 = vmatprep.mubr.bf16.mxu0 0
      %2861 = vmatmul.mubr.bf16.gmra.mrb[0].mxu0 %v2692
      %v2862 = vpop.f32.mrb[0].mxu0
      %v2863 = vadd.f32 0.0, %v2862
      %v2864 = vpop.f32.mrb[0].mxu0
      %v2865 = vpop.f32.mrb[0].mxu0
      %v2866 = vadd.f32 0.0, %v2865
      %v2867 = vpop.f32.mrb[0].mxu0
      %2868 = vmatprep.mubr.bf16.mxu0 0
      %2869 = vmatmul.mubr.bf16.gmra.mrb[0].mxu0 %v2695
      %v2870 = vpop.f32.mrb[0].mxu0
      %v2871 = vadd.f32 0.0, %v2870
      %v2872 = vpop.f32.mrb[0].mxu0
      %v2873 = vpop.f32.mrb[0].mxu0
      %v2874 = vadd.f32 0.0, %v2873
      %v2875 = vpop.f32.mrb[0].mxu0
      %2876 = vdwg.mxu0
      %v2877 = vadd.f32 %v2438, %v2735
      %v2878 = vadd.f32 %v2439, %v2738
      %v2879 = vadd.f32 %v2440, %v2743
      %v2880 = vadd.f32 %v2441, %v2746
      %v2881 = vadd.f32 %v2442, %v2751
      %v2882 = vadd.f32 %v2443, %v2754
      %v2883 = vadd.f32 %v2444, %v2759
      %v2884 = vadd.f32 %v2445, %v2762
      %v2885 = vadd.f32 %v2446, %v2767
      %v2886 = vadd.f32 %v2447, %v2770
      %v2887 = vadd.f32 %v2448, %v2775
      %v2888 = vadd.f32 %v2449, %v2778
      %v2889 = vadd.f32 %v2450, %v2783
      %v2890 = vadd.f32 %v2451, %v2786
      %v2891 = vadd.f32 %v2452, %v2791
      %v2892 = vadd.f32 %v2453, %v2794
      %v2893 = vadd.f32 %v2454, %v2799
      %v2894 = vadd.f32 %v2455, %v2802
      %v2895 = vadd.f32 %v2456, %v2807
      %v2896 = vadd.f32 %v2457, %v2810
      %v2897 = vadd.f32 %v2458, %v2815
      %v2898 = vadd.f32 %v2459, %v2818
      %v2899 = vadd.f32 %v2460, %v2823
      %v2900 = vadd.f32 %v2461, %v2826
      %v2901 = vadd.f32 %v2462, %v2831
      %v2902 = vadd.f32 %v2463, %v2834
      %v2903 = vadd.f32 %v2464, %v2839
      %v2904 = vadd.f32 %v2465, %v2842
      %v2905 = vadd.f32 %v2466, %v2847
      %v2906 = vadd.f32 %v2467, %v2850
      %v2907 = vadd.f32 %v2468, %v2855
      %v2908 = vadd.f32 %v2469, %v2858
      %v2909 = vadd.f32 %v2470, %v2863
      %v2910 = vadd.f32 %v2471, %v2866
      %v2911 = vadd.f32 %v2472, %v2871
      %v2912 = vadd.f32 %v2473, %v2874
      %v2913 = vld [vmem:[%s206 + $0xa0] sm:$0x7]
      %s2914 = scalar_lea.vmem %s210, 14
      %v2915 = vld [vmem:[%s2914] sm:$0x3]
      %v2917 = vunpack.c.l.b16 %v2913
      %v2918 = vpack.c.b16 %v2917, %v2917
      %vm2919 = vsmask.f32 5376
      %v2921 = vshrl.u32 %v2587, 16
      %v2923 = vrot.slane %v2921, 2
      %v2924 = vshll.u32 %v2587, 16
      %v2926 = vrot.slane %v2924, 3
      %v2927 = vor.u32 %v2923, %v2926
      %v2929 = vshrl.u32 %v2588, 16
      %v2931 = vrot.slane %v2929, 2
      %v2932 = vshll.u32 %v2588, 16
      %v2934 = vrot.slane %v2932, 3
      %v2935 = vor.u32 %v2931, %v2934
      %v2936 = vsel %vm2919, %v2927, %v2935
      %v2938 = vshrl.u32 %v2589, 16
      %v2940 = vrot.slane %v2938, 2
      %v2941 = vshll.u32 %v2589, 16
      %v2943 = vrot.slane %v2941, 3
      %v2944 = vor.u32 %v2940, %v2943
      %v2945 = vsel %vm2919, %v2935, %v2944
      %v2947 = vshrl.u32 %v2590, 16
      %v2949 = vrot.slane %v2947, 2
      %v2950 = vshll.u32 %v2590, 16
      %v2952 = vrot.slane %v2950, 3
      %v2953 = vor.u32 %v2949, %v2952
      %v2954 = vsel %vm2919, %v2944, %v2953
      %v2956 = vshrl.u32 %v2591, 16
      %v2958 = vrot.slane %v2956, 2
      %v2959 = vshll.u32 %v2591, 16
      %v2961 = vrot.slane %v2959, 3
      %v2962 = vor.u32 %v2958, %v2961
      %v2963 = vsel %vm2919, %v2953, %v2962
      %v2965 = vshrl.u32 %v2592, 16
      %v2967 = vrot.slane %v2965, 2
      %v2968 = vshll.u32 %v2592, 16
      %v2970 = vrot.slane %v2968, 3
      %v2971 = vor.u32 %v2967, %v2970
      %v2972 = vsel %vm2919, %v2962, %v2971
      %v2974 = vshrl.u32 %v2593, 16
      %v2976 = vrot.slane %v2974, 2
      %v2977 = vshll.u32 %v2593, 16
      %v2979 = vrot.slane %v2977, 3
      %v2980 = vor.u32 %v2976, %v2979
      %v2981 = vsel %vm2919, %v2971, %v2980
      %v2983 = vshrl.u32 %v2594, 16
      %v2985 = vrot.slane %v2983, 2
      %v2986 = vshll.u32 %v2594, 16
      %v2988 = vrot.slane %v2986, 3
      %v2989 = vor.u32 %v2985, %v2988
      %v2990 = vsel %vm2919, %v2980, %v2989
      %v2992 = vshrl.u32 %v2595, 16
      %v2994 = vrot.slane %v2992, 2
      %v2995 = vshll.u32 %v2595, 16
      %v2997 = vrot.slane %v2995, 3
      %v2998 = vor.u32 %v2994, %v2997
      %v2999 = vsel %vm2919, %v2989, %v2998
      %v3001 = vshrl.u32 %v2596, 16
      %v3003 = vrot.slane %v3001, 2
      %v3004 = vshll.u32 %v2596, 16
      %v3006 = vrot.slane %v3004, 3
      %v3007 = vor.u32 %v3003, %v3006
      %v3008 = vsel %vm2919, %v2998, %v3007
      %v3010 = vshrl.u32 %v2597, 16
      %v3012 = vrot.slane %v3010, 2
      %v3013 = vshll.u32 %v2597, 16
      %v3015 = vrot.slane %v3013, 3
      %v3016 = vor.u32 %v3012, %v3015
      %v3017 = vsel %vm2919, %v3007, %v3016
      %v3019 = vshrl.u32 %v2598, 16
      %v3021 = vrot.slane %v3019, 2
      %v3022 = vshll.u32 %v2598, 16
      %v3024 = vrot.slane %v3022, 3
      %v3025 = vor.u32 %v3021, %v3024
      %v3026 = vsel %vm2919, %v3016, %v3025
      %v3028 = vshrl.u32 %v2599, 16
      %v3030 = vrot.slane %v3028, 2
      %v3031 = vshll.u32 %v2599, 16
      %v3033 = vrot.slane %v3031, 3
      %v3034 = vor.u32 %v3030, %v3033
      %v3035 = vsel %vm2919, %v3025, %v3034
      %v3037 = vshrl.u32 %v2600, 16
      %v3039 = vrot.slane %v3037, 2
      %v3040 = vshll.u32 %v2600, 16
      %v3042 = vrot.slane %v3040, 3
      %v3043 = vor.u32 %v3039, %v3042
      %v3044 = vsel %vm2919, %v3034, %v3043
      %v3046 = vshrl.u32 %v2601, 16
      %v3048 = vrot.slane %v3046, 2
      %v3049 = vshll.u32 %v2601, 16
      %v3051 = vrot.slane %v3049, 3
      %v3052 = vor.u32 %v3048, %v3051
      %v3053 = vsel %vm2919, %v3043, %v3052
      %v3055 = vshrl.u32 %v2602, 16
      %v3057 = vrot.slane %v3055, 2
      %v3058 = vshll.u32 %v2602, 16
      %v3060 = vrot.slane %v3058, 3
      %v3061 = vor.u32 %v3057, %v3060
      %v3062 = vsel %vm2919, %v3052, %v3061
      %v3064 = vshrl.u32 %v2603, 16
      %v3066 = vrot.slane %v3064, 2
      %v3067 = vshll.u32 %v2603, 16
      %v3069 = vrot.slane %v3067, 3
      %v3070 = vor.u32 %v3066, %v3069
      %v3071 = vsel %vm2919, %v3061, %v3070
      %v3073 = vshrl.u32 %v2604, 16
      %v3075 = vrot.slane %v3073, 2
      %v3076 = vshll.u32 %v2604, 16
      %v3078 = vrot.slane %v3076, 3
      %v3079 = vor.u32 %v3075, %v3078
      %v3080 = vsel %vm2919, %v3070, %v3079
      %v3082 = vshrl.u32 %v2918, 16
      %v3084 = vrot.slane %v3082, 2
      %v3085 = vshll.u32 %v2918, 16
      %v3087 = vrot.slane %v3085, 3
      %v3088 = vor.u32 %v3084, %v3087
      %v3089 = vsel %vm2919, %v3079, %v3088
      %v3091 = vsel %vm505, %v2936, 0
      %v3094 = vsel %vm505, %v2945, 0
      %v3097 = vsel %vm505, %v2954, 0
      %v3100 = vsel %vm505, %v2963, 0
      %v3103 = vsel %vm505, %v2972, 0
      %v3106 = vsel %vm505, %v2981, 0
      %v3109 = vsel %vm505, %v2990, 0
      %v3112 = vsel %vm505, %v2999, 0
      %v3115 = vsel %vm505, %v3008, 0
      %v3118 = vsel %vm505, %v3017, 0
      %v3121 = vsel %vm505, %v3026, 0
      %v3124 = vsel %vm505, %v3035, 0
      %v3127 = vsel %vm505, %v3044, 0
      %v3130 = vsel %vm505, %v3053, 0
      %v3133 = vsel %vm505, %v3062, 0
      %v3136 = vsel %vm505, %v3071, 0
      %v3139 = vsel %vm505, %v3080, 0
      %v3142 = vsel %vm505, %v3089, 0
      %v3145 = vand.u32 %v2915, %v563
      %3147 = vmatprep.subr.bf16.mxu0 0
      %3148 = vmatpush1.bf16.msra.mxu0 %v3145
      %3149 = vmatprep.subr.bf16.mxu0 0
      %3150 = vmatpush1.bf16.msra.mxu0 0
      %3151 = vmatprep.subr.bf16.mxu0 0
      %3152 = vmatpush1.bf16.msra.mxu0 0
      %3153 = vmatprep.subr.bf16.mxu0 0
      %3154 = vmatpush1.bf16.msra.mxu0 0
      %3155 = vmatprep.subr.bf16.mxu0 0
      %3156 = vmatpush1.bf16.msra.mxu0 0
      %3157 = vmatprep.subr.bf16.mxu0 0
      %3158 = vmatpush1.bf16.msra.mxu0 0
      %3159 = vmatprep.subr.bf16.mxu0 0
      %3160 = vmatpush1.bf16.msra.mxu0 0
      %3161 = vmatprep.subr.bf16.mxu0 0
      %3162 = vmatpush1.bf16.msra.mxu0 0
      %3163 = vmatprep.subr.bf16.mxu0 0
      %3164 = vmatpush1.bf16.msra.mxu0 0
      %3165 = vmatprep.subr.bf16.mxu0 0
      %3166 = vmatpush1.bf16.msra.mxu0 0
      %3167 = vmatprep.subr.bf16.mxu0 0
      %3168 = vmatpush1.bf16.msra.mxu0 0
      %3169 = vmatprep.subr.bf16.mxu0 0
      %3170 = vmatpush1.bf16.msra.mxu0 0
      %3171 = vmatprep.subr.bf16.mxu0 0
      %3172 = vmatpush1.bf16.msra.mxu0 0
      %3173 = vmatprep.subr.bf16.mxu0 0
      %3174 = vmatpush1.bf16.msra.mxu0 0
      %3175 = vmatprep.subr.bf16.mxu0 0
      %3176 = vmatpush1.bf16.msra.mxu0 0
      %3177 = vmatprep.subr.bf16.mxu0 0
      %3178 = vmatpush1.bf16.msra.mxu0 0
      %3179 = vmatprep.mubr.bf16.mxu0 0
      %3180 = vmatmul.mubr.bf16.gmra.mrb[0].mxu0 %v3091
      %v3181 = vpop.f32.mrb[0].mxu0
      %v3182 = vadd.f32 0.0, %v3181
      %v3183 = vpop.f32.mrb[0].mxu0
      %v3184 = vpop.f32.mrb[0].mxu0
      %v3185 = vadd.f32 0.0, %v3184
      %v3186 = vpop.f32.mrb[0].mxu0
      %3187 = vmatprep.mubr.bf16.mxu0 0
      %3188 = vmatmul.mubr.bf16.gmra.mrb[0].mxu0 %v3094
      %v3189 = vpop.f32.mrb[0].mxu0
      %v3190 = vadd.f32 0.0, %v3189
      %v3191 = vpop.f32.mrb[0].mxu0
      %v3192 = vpop.f32.mrb[0].mxu0
      %v3193 = vadd.f32 0.0, %v3192
      %v3194 = vpop.f32.mrb[0].mxu0
      %3195 = vmatprep.mubr.bf16.mxu0 0
      %3196 = vmatmul.mubr.bf16.gmra.mrb[0].mxu0 %v3097
      %v3197 = vpop.f32.mrb[0].mxu0
      %v3198 = vadd.f32 0.0, %v3197
      %v3199 = vpop.f32.mrb[0].mxu0
      %v3200 = vpop.f32.mrb[0].mxu0
      %v3201 = vadd.f32 0.0, %v3200
      %v3202 = vpop.f32.mrb[0].mxu0
      %3203 = vmatprep.mubr.bf16.mxu0 0
      %3204 = vmatmul.mubr.bf16.gmra.mrb[0].mxu0 %v3100
      %v3205 = vpop.f32.mrb[0].mxu0
      %v3206 = vadd.f32 0.0, %v3205
      %v3207 = vpop.f32.mrb[0].mxu0
      %v3208 = vpop.f32.mrb[0].mxu0
      %v3209 = vadd.f32 0.0, %v3208
      %v3210 = vpop.f32.mrb[0].mxu0
      %3211 = vmatprep.mubr.bf16.mxu0 0
      %3212 = vmatmul.mubr.bf16.gmra.mrb[0].mxu0 %v3103
      %v3213 = vpop.f32.mrb[0].mxu0
      %v3214 = vadd.f32 0.0, %v3213
      %v3215 = vpop.f32.mrb[0].mxu0
      %v3216 = vpop.f32.mrb[0].mxu0
      %v3217 = vadd.f32 0.0, %v3216
      %v3218 = vpop.f32.mrb[0].mxu0
      %3219 = vmatprep.mubr.bf16.mxu0 0
      %3220 = vmatmul.mubr.bf16.gmra.mrb[0].mxu0 %v3106
      %v3221 = vpop.f32.mrb[0].mxu0
      %v3222 = vadd.f32 0.0, %v3221
      %v3223 = vpop.f32.mrb[0].mxu0
      %v3224 = vpop.f32.mrb[0].mxu0
      %v3225 = vadd.f32 0.0, %v3224
      %v3226 = vpop.f32.mrb[0].mxu0
      %3227 = vmatprep.mubr.bf16.mxu0 0
      %3228 = vmatmul.mubr.bf16.gmra.mrb[0].mxu0 %v3109
      %v3229 = vpop.f32.mrb[0].mxu0
      %v3230 = vadd.f32 0.0, %v3229
      %v3231 = vpop.f32.mrb[0].mxu0
      %v3232 = vpop.f32.mrb[0].mxu0
      %v3233 = vadd.f32 0.0, %v3232
      %v3234 = vpop.f32.mrb[0].mxu0
      %3235 = vmatprep.mubr.bf16.mxu0 0
      %3236 = vmatmul.mubr.bf16.gmra.mrb[0].mxu0 %v3112
      %v3237 = vpop.f32.mrb[0].mxu0
      %v3238 = vadd.f32 0.0, %v3237
      %v3239 = vpop.f32.mrb[0].mxu0
      %v3240 = vpop.f32.mrb[0].mxu0
      %v3241 = vadd.f32 0.0, %v3240
      %v3242 = vpop.f32.mrb[0].mxu0
      %3243 = vmatprep.mubr.bf16.mxu0 0
      %3244 = vmatmul.mubr.bf16.gmra.mrb[0].mxu0 %v3115
      %v3245 = vpop.f32.mrb[0].mxu0
      %v3246 = vadd.f32 0.0, %v3245
      %v3247 = vpop.f32.mrb[0].mxu0
      %v3248 = vpop.f32.mrb[0].mxu0
      %v3249 = vadd.f32 0.0, %v3248
      %v3250 = vpop.f32.mrb[0].mxu0
      %3251 = vmatprep.mubr.bf16.mxu0 0
      %3252 = vmatmul.mubr.bf16.gmra.mrb[0].mxu0 %v3118
      %v3253 = vpop.f32.mrb[0].mxu0
      %v3254 = vadd.f32 0.0, %v3253
      %v3255 = vpop.f32.mrb[0].mxu0
      %v3256 = vpop.f32.mrb[0].mxu0
      %v3257 = vadd.f32 0.0, %v3256
      %v3258 = vpop.f32.mrb[0].mxu0
      %3259 = vmatprep.mubr.bf16.mxu0 0
      %3260 = vmatmul.mubr.bf16.gmra.mrb[0].mxu0 %v3121
      %v3261 = vpop.f32.mrb[0].mxu0
      %v3262 = vadd.f32 0.0, %v3261
      %v3263 = vpop.f32.mrb[0].mxu0
      %v3264 = vpop.f32.mrb[0].mxu0
      %v3265 = vadd.f32 0.0, %v3264
      %v3266 = vpop.f32.mrb[0].mxu0
      %3267 = vmatprep.mubr.bf16.mxu0 0
      %3268 = vmatmul.mubr.bf16.gmra.mrb[0].mxu0 %v3124
      %v3269 = vpop.f32.mrb[0].mxu0
      %v3270 = vadd.f32 0.0, %v3269
      %v3271 = vpop.f32.mrb[0].mxu0
      %v3272 = vpop.f32.mrb[0].mxu0
      %v3273 = vadd.f32 0.0, %v3272
      %v3274 = vpop.f32.mrb[0].mxu0
      %3275 = vmatprep.mubr.bf16.mxu0 0
      %3276 = vmatmul.mubr.bf16.gmra.mrb[0].mxu0 %v3127
      %v3277 = vpop.f32.mrb[0].mxu0
      %v3278 = vadd.f32 0.0, %v3277
      %v3279 = vpop.f32.mrb[0].mxu0
      %v3280 = vpop.f32.mrb[0].mxu0
      %v3281 = vadd.f32 0.0, %v3280
      %v3282 = vpop.f32.mrb[0].mxu0
      %3283 = vmatprep.mubr.bf16.mxu0 0
      %3284 = vmatmul.mubr.bf16.gmra.mrb[0].mxu0 %v3130
      %v3285 = vpop.f32.mrb[0].mxu0
      %v3286 = vadd.f32 0.0, %v3285
      %v3287 = vpop.f32.mrb[0].mxu0
      %v3288 = vpop.f32.mrb[0].mxu0
      %v3289 = vadd.f32 0.0, %v3288
      %v3290 = vpop.f32.mrb[0].mxu0
      %3291 = vmatprep.mubr.bf16.mxu0 0
      %3292 = vmatmul.mubr.bf16.gmra.mrb[0].mxu0 %v3133
      %v3293 = vpop.f32.mrb[0].mxu0
      %v3294 = vadd.f32 0.0, %v3293
      %v3295 = vpop.f32.mrb[0].mxu0
      %v3296 = vpop.f32.mrb[0].mxu0
      %v3297 = vadd.f32 0.0, %v3296
      %v3298 = vpop.f32.mrb[0].mxu0
      %3299 = vmatprep.mubr.bf16.mxu0 0
      %3300 = vmatmul.mubr.bf16.gmra.mrb[0].mxu0 %v3136
      %v3301 = vpop.f32.mrb[0].mxu0
      %v3302 = vadd.f32 0.0, %v3301
      %v3303 = vpop.f32.mrb[0].mxu0
      %v3304 = vpop.f32.mrb[0].mxu0
      %v3305 = vadd.f32 0.0, %v3304
      %v3306 = vpop.f32.mrb[0].mxu0
      %3307 = vmatprep.mubr.bf16.mxu0 0
      %3308 = vmatmul.mubr.bf16.gmra.mrb[0].mxu0 %v3139
      %v3309 = vpop.f32.mrb[0].mxu0
      %v3310 = vadd.f32 0.0, %v3309
      %v3311 = vpop.f32.mrb[0].mxu0
      %v3312 = vpop.f32.mrb[0].mxu0
      %v3313 = vadd.f32 0.0, %v3312
      %v3314 = vpop.f32.mrb[0].mxu0
      %3315 = vmatprep.mubr.bf16.mxu0 0
      %3316 = vmatmul.mubr.bf16.gmra.mrb[0].mxu0 %v3142
      %v3317 = vpop.f32.mrb[0].mxu0
      %v3318 = vadd.f32 0.0, %v3317
      %v3319 = vpop.f32.mrb[0].mxu0
      %v3320 = vpop.f32.mrb[0].mxu0
      %v3321 = vadd.f32 0.0, %v3320
      %v3322 = vpop.f32.mrb[0].mxu0
      %3323 = vdwg.mxu0
      %v3324 = vadd.f32 %v2877, %v3182
      %v3325 = vadd.f32 %v2878, %v3185
      %v3326 = vadd.f32 %v2879, %v3190
      %v3327 = vadd.f32 %v2880, %v3193
      %v3328 = vadd.f32 %v2881, %v3198
      %v3329 = vadd.f32 %v2882, %v3201
      %v3330 = vadd.f32 %v2883, %v3206
      %v3331 = vadd.f32 %v2884, %v3209
      %v3332 = vadd.f32 %v2885, %v3214
      %v3333 = vadd.f32 %v2886, %v3217
      %v3334 = vadd.f32 %v2887, %v3222
      %v3335 = vadd.f32 %v2888, %v3225
      %v3336 = vadd.f32 %v2889, %v3230
      %v3337 = vadd.f32 %v2890, %v3233
      %v3338 = vadd.f32 %v2891, %v3238
      %v3339 = vadd.f32 %v2892, %v3241
      %v3340 = vadd.f32 %v2893, %v3246
      %v3341 = vadd.f32 %v2894, %v3249
      %v3342 = vadd.f32 %v2895, %v3254
      %v3343 = vadd.f32 %v2896, %v3257
      %v3344 = vadd.f32 %v2897, %v3262
      %v3345 = vadd.f32 %v2898, %v3265
      %v3346 = vadd.f32 %v2899, %v3270
      %v3347 = vadd.f32 %v2900, %v3273
      %v3348 = vadd.f32 %v2901, %v3278
      %v3349 = vadd.f32 %v2902, %v3281
      %v3350 = vadd.f32 %v2903, %v3286
      %v3351 = vadd.f32 %v2904, %v3289
      %v3352 = vadd.f32 %v2905, %v3294
      %v3353 = vadd.f32 %v2906, %v3297
      %v3354 = vadd.f32 %v2907, %v3302
      %v3355 = vadd.f32 %v2908, %v3305
      %v3356 = vadd.f32 %v2909, %v3310
      %v3357 = vadd.f32 %v2910, %v3313
      %v3358 = vadd.f32 %v2911, %v3318
      %v3359 = vadd.f32 %v2912, %v3321
      %v3360 = vld [vmem:[%s206 + $0x10] sm:$0x8]
      %s3361 = scalar_lea.vmem %s210, 16
      %v3362 = vld [vmem:[%s3361] sm:$0x3]
      %v3364 = vunpack.c.l.b16 %v3360
      %v3365 = vpack.c.b16 %v2551, %v3364
      %vm3366 = vcmask 1044480
      %v3367 = vrot.slane %v3365, 3
      %v3368 = vrot.slane %v2588, 3
      %v3369 = vsel %vm3366, %v3367, %v3368
      %v3370 = vrot.slane %v2589, 3
      %v3371 = vsel %vm3366, %v3368, %v3370
      %v3372 = vrot.slane %v2590, 3
      %v3373 = vsel %vm3366, %v3370, %v3372
      %v3374 = vrot.slane %v2591, 3
      %v3375 = vsel %vm3366, %v3372, %v3374
      %v3376 = vrot.slane %v2592, 3
      %v3377 = vsel %vm3366, %v3374, %v3376
      %v3378 = vrot.slane %v2593, 3
      %v3379 = vsel %vm3366, %v3376, %v3378
      %v3380 = vrot.slane %v2594, 3
      %v3381 = vsel %vm3366, %v3378, %v3380
      %v3382 = vrot.slane %v2595, 3
      %v3383 = vsel %vm3366, %v3380, %v3382
      %v3384 = vrot.slane %v2596, 3
      %v3385 = vsel %vm3366, %v3382, %v3384
      %v3386 = vrot.slane %v2597, 3
      %v3387 = vsel %vm3366, %v3384, %v3386
      %v3388 = vrot.slane %v2598, 3
      %v3389 = vsel %vm3366, %v3386, %v3388
      %v3390 = vrot.slane %v2599, 3
      %v3391 = vsel %vm3366, %v3388, %v3390
      %v3392 = vrot.slane %v2600, 3
      %v3393 = vsel %vm3366, %v3390, %v3392
      %v3394 = vrot.slane %v2601, 3
      %v3395 = vsel %vm3366, %v3392, %v3394
      %v3396 = vrot.slane %v2602, 3
      %v3397 = vsel %vm3366, %v3394, %v3396
      %v3398 = vrot.slane %v2603, 3
      %v3399 = vsel %vm3366, %v3396, %v3398
      %v3400 = vrot.slane %v2604, 3
      %v3401 = vsel %vm3366, %v3398, %v3400
      %v3402 = vrot.slane %v2918, 3
      %v3403 = vsel %vm3366, %v3400, %v3402
      %v3405 = vsel %vm505, %v3369, 0
      %v3408 = vsel %vm505, %v3371, 0
      %v3411 = vsel %vm505, %v3373, 0
      %v3414 = vsel %vm505, %v3375, 0
      %v3417 = vsel %vm505, %v3377, 0
      %v3420 = vsel %vm505, %v3379, 0
      %v3423 = vsel %vm505, %v3381, 0
      %v3426 = vsel %vm505, %v3383, 0
      %v3429 = vsel %vm505, %v3385, 0
      %v3432 = vsel %vm505, %v3387, 0
      %v3435 = vsel %vm505, %v3389, 0
      %v3438 = vsel %vm505, %v3391, 0
      %v3441 = vsel %vm505, %v3393, 0
      %v3444 = vsel %vm505, %v3395, 0
      %v3447 = vsel %vm505, %v3397, 0
      %v3450 = vsel %vm505, %v3399, 0
      %v3453 = vsel %vm505, %v3401, 0
      %v3456 = vsel %vm505, %v3403, 0
      %v3459 = vand.u32 %v3362, %v563
      %3461 = vmatprep.subr.bf16.mxu0 0
      %3462 = vmatpush1.bf16.msra.mxu0 %v3459
      %3463 = vmatprep.subr.bf16.mxu0 0
      %3464 = vmatpush1.bf16.msra.mxu0 0
      %3465 = vmatprep.subr.bf16.mxu0 0
      %3466 = vmatpush1.bf16.msra.mxu0 0
      %3467 = vmatprep.subr.bf16.mxu0 0
      %3468 = vmatpush1.bf16.msra.mxu0 0
      %3469 = vmatprep.subr.bf16.mxu0 0
      %3470 = vmatpush1.bf16.msra.mxu0 0
      %3471 = vmatprep.subr.bf16.mxu0 0
      %3472 = vmatpush1.bf16.msra.mxu0 0
      %3473 = vmatprep.subr.bf16.mxu0 0
      %3474 = vmatpush1.bf16.msra.mxu0 0
      %3475 = vmatprep.subr.bf16.mxu0 0
      %3476 = vmatpush1.bf16.msra.mxu0 0
      %3477 = vmatprep.subr.bf16.mxu0 0
      %3478 = vmatpush1.bf16.msra.mxu0 0
      %3479 = vmatprep.subr.bf16.mxu0 0
      %3480 = vmatpush1.bf16.msra.mxu0 0
      %3481 = vmatprep.subr.bf16.mxu0 0
      %3482 = vmatpush1.bf16.msra.mxu0 0
      %3483 = vmatprep.subr.bf16.mxu0 0
      %3484 = vmatpush1.bf16.msra.mxu0 0
      %3485 = vmatprep.subr.bf16.mxu0 0
      %3486 = vmatpush1.bf16.msra.mxu0 0
      %3487 = vmatprep.subr.bf16.mxu0 0
      %3488 = vmatpush1.bf16.msra.mxu0 0
      %3489 = vmatprep.subr.bf16.mxu0 0
      %3490 = vmatpush1.bf16.msra.mxu0 0
      %3491 = vmatprep.subr.bf16.mxu0 0
      %3492 = vmatpush1.bf16.msra.mxu0 0
      %3493 = vmatprep.mubr.bf16.mxu0 0
      %3494 = vmatmul.mubr.bf16.gmra.mrb[0].mxu0 %v3405
      %v3495 = vpop.f32.mrb[0].mxu0
      %v3496 = vadd.f32 0.0, %v3495
      %v3497 = vpop.f32.mrb[0].mxu0
      %v3498 = vpop.f32.mrb[0].mxu0
      %v3499 = vadd.f32 0.0, %v3498
      %v3500 = vpop.f32.mrb[0].mxu0
      %3501 = vmatprep.mubr.bf16.mxu0 0
      %3502 = vmatmul.mubr.bf16.gmra.mrb[0].mxu0 %v3408
      %v3503 = vpop.f32.mrb[0].mxu0
      %v3504 = vadd.f32 0.0, %v3503
      %v3505 = vpop.f32.mrb[0].mxu0
      %v3506 = vpop.f32.mrb[0].mxu0
      %v3507 = vadd.f32 0.0, %v3506
      %v3508 = vpop.f32.mrb[0].mxu0
      %3509 = vmatprep.mubr.bf16.mxu0 0
      %3510 = vmatmul.mubr.bf16.gmra.mrb[0].mxu0 %v3411
      %v3511 = vpop.f32.mrb[0].mxu0
      %v3512 = vadd.f32 0.0, %v3511
      %v3513 = vpop.f32.mrb[0].mxu0
      %v3514 = vpop.f32.mrb[0].mxu0
      %v3515 = vadd.f32 0.0, %v3514
      %v3516 = vpop.f32.mrb[0].mxu0
      %3517 = vmatprep.mubr.bf16.mxu0 0
      %3518 = vmatmul.mubr.bf16.gmra.mrb[0].mxu0 %v3414
      %v3519 = vpop.f32.mrb[0].mxu0
      %v3520 = vadd.f32 0.0, %v3519
      %v3521 = vpop.f32.mrb[0].mxu0
      %v3522 = vpop.f32.mrb[0].mxu0
      %v3523 = vadd.f32 0.0, %v3522
      %v3524 = vpop.f32.mrb[0].mxu0
      %3525 = vmatprep.mubr.bf16.mxu0 0
      %3526 = vmatmul.mubr.bf16.gmra.mrb[0].mxu0 %v3417
      %v3527 = vpop.f32.mrb[0].mxu0
      %v3528 = vadd.f32 0.0, %v3527
      %v3529 = vpop.f32.mrb[0].mxu0
      %v3530 = vpop.f32.mrb[0].mxu0
      %v3531 = vadd.f32 0.0, %v3530
      %v3532 = vpop.f32.mrb[0].mxu0
      %3533 = vmatprep.mubr.bf16.mxu0 0
      %3534 = vmatmul.mubr.bf16.gmra.mrb[0].mxu0 %v3420
      %v3535 = vpop.f32.mrb[0].mxu0
      %v3536 = vadd.f32 0.0, %v3535
      %v3537 = vpop.f32.mrb[0].mxu0
      %v3538 = vpop.f32.mrb[0].mxu0
      %v3539 = vadd.f32 0.0, %v3538
      %v3540 = vpop.f32.mrb[0].mxu0
      %3541 = vmatprep.mubr.bf16.mxu0 0
      %3542 = vmatmul.mubr.bf16.gmra.mrb[0].mxu0 %v3423
      %v3543 = vpop.f32.mrb[0].mxu0
      %v3544 = vadd.f32 0.0, %v3543
      %v3545 = vpop.f32.mrb[0].mxu0
      %v3546 = vpop.f32.mrb[0].mxu0
      %v3547 = vadd.f32 0.0, %v3546
      %v3548 = vpop.f32.mrb[0].mxu0
      %3549 = vmatprep.mubr.bf16.mxu0 0
      %3550 = vmatmul.mubr.bf16.gmra.mrb[0].mxu0 %v3426
      %v3551 = vpop.f32.mrb[0].mxu0
      %v3552 = vadd.f32 0.0, %v3551
      %v3553 = vpop.f32.mrb[0].mxu0
      %v3554 = vpop.f32.mrb[0].mxu0
      %v3555 = vadd.f32 0.0, %v3554
      %v3556 = vpop.f32.mrb[0].mxu0
      %3557 = vmatprep.mubr.bf16.mxu0 0
      %3558 = vmatmul.mubr.bf16.gmra.mrb[0].mxu0 %v3429
      %v3559 = vpop.f32.mrb[0].mxu0
      %v3560 = vadd.f32 0.0, %v3559
      %v3561 = vpop.f32.mrb[0].mxu0
      %v3562 = vpop.f32.mrb[0].mxu0
      %v3563 = vadd.f32 0.0, %v3562
      %v3564 = vpop.f32.mrb[0].mxu0
      %3565 = vmatprep.mubr.bf16.mxu0 0
      %3566 = vmatmul.mubr.bf16.gmra.mrb[0].mxu0 %v3432
      %v3567 = vpop.f32.mrb[0].mxu0
      %v3568 = vadd.f32 0.0, %v3567
      %v3569 = vpop.f32.mrb[0].mxu0
      %v3570 = vpop.f32.mrb[0].mxu0
      %v3571 = vadd.f32 0.0, %v3570
      %v3572 = vpop.f32.mrb[0].mxu0
      %3573 = vmatprep.mubr.bf16.mxu0 0
      %3574 = vmatmul.mubr.bf16.gmra.mrb[0].mxu0 %v3435
      %v3575 = vpop.f32.mrb[0].mxu0
      %v3576 = vadd.f32 0.0, %v3575
      %v3577 = vpop.f32.mrb[0].mxu0
      %v3578 = vpop.f32.mrb[0].mxu0
      %v3579 = vadd.f32 0.0, %v3578
      %v3580 = vpop.f32.mrb[0].mxu0
      %3581 = vmatprep.mubr.bf16.mxu0 0
      %3582 = vmatmul.mubr.bf16.gmra.mrb[0].mxu0 %v3438
      %v3583 = vpop.f32.mrb[0].mxu0
      %v3584 = vadd.f32 0.0, %v3583
      %v3585 = vpop.f32.mrb[0].mxu0
      %v3586 = vpop.f32.mrb[0].mxu0
      %v3587 = vadd.f32 0.0, %v3586
      %v3588 = vpop.f32.mrb[0].mxu0
      %3589 = vmatprep.mubr.bf16.mxu0 0
      %3590 = vmatmul.mubr.bf16.gmra.mrb[0].mxu0 %v3441
      %v3591 = vpop.f32.mrb[0].mxu0
      %v3592 = vadd.f32 0.0, %v3591
      %v3593 = vpop.f32.mrb[0].mxu0
      %v3594 = vpop.f32.mrb[0].mxu0
      %v3595 = vadd.f32 0.0, %v3594
      %v3596 = vpop.f32.mrb[0].mxu0
      %3597 = vmatprep.mubr.bf16.mxu0 0
      %3598 = vmatmul.mubr.bf16.gmra.mrb[0].mxu0 %v3444
      %v3599 = vpop.f32.mrb[0].mxu0
      %v3600 = vadd.f32 0.0, %v3599
      %v3601 = vpop.f32.mrb[0].mxu0
      %v3602 = vpop.f32.mrb[0].mxu0
      %v3603 = vadd.f32 0.0, %v3602
      %v3604 = vpop.f32.mrb[0].mxu0
      %3605 = vmatprep.mubr.bf16.mxu0 0
      %3606 = vmatmul.mubr.bf16.gmra.mrb[0].mxu0 %v3447
      %v3607 = vpop.f32.mrb[0].mxu0
      %v3608 = vadd.f32 0.0, %v3607
      %v3609 = vpop.f32.mrb[0].mxu0
      %v3610 = vpop.f32.mrb[0].mxu0
      %v3611 = vadd.f32 0.0, %v3610
      %v3612 = vpop.f32.mrb[0].mxu0
      %3613 = vmatprep.mubr.bf16.mxu0 0
      %3614 = vmatmul.mubr.bf16.gmra.mrb[0].mxu0 %v3450
      %v3615 = vpop.f32.mrb[0].mxu0
      %v3616 = vadd.f32 0.0, %v3615
      %v3617 = vpop.f32.mrb[0].mxu0
      %v3618 = vpop.f32.mrb[0].mxu0
      %v3619 = vadd.f32 0.0, %v3618
      %v3620 = vpop.f32.mrb[0].mxu0
      %3621 = vmatprep.mubr.bf16.mxu0 0
      %3622 = vmatmul.mubr.bf16.gmra.mrb[0].mxu0 %v3453
      %v3623 = vpop.f32.mrb[0].mxu0
      %v3624 = vadd.f32 0.0, %v3623
      %v3625 = vpop.f32.mrb[0].mxu0
      %v3626 = vpop.f32.mrb[0].mxu0
      %v3627 = vadd.f32 0.0, %v3626
      %v3628 = vpop.f32.mrb[0].mxu0
      %3629 = vmatprep.mubr.bf16.mxu0 0
      %3630 = vmatmul.mubr.bf16.gmra.mrb[0].mxu0 %v3456
      %v3631 = vpop.f32.mrb[0].mxu0
      %v3632 = vadd.f32 0.0, %v3631
      %v3633 = vpop.f32.mrb[0].mxu0
      %v3634 = vpop.f32.mrb[0].mxu0
      %v3635 = vadd.f32 0.0, %v3634
      %v3636 = vpop.f32.mrb[0].mxu0
      %3637 = vdwg.mxu0
      %v3638 = vadd.f32 %v3324, %v3496
      %v3639 = vadd.f32 %v3325, %v3499
      %v3640 = vadd.f32 %v3326, %v3504
      %v3641 = vadd.f32 %v3327, %v3507
      %v3642 = vadd.f32 %v3328, %v3512
      %v3643 = vadd.f32 %v3329, %v3515
      %v3644 = vadd.f32 %v3330, %v3520
      %v3645 = vadd.f32 %v3331, %v3523
      %v3646 = vadd.f32 %v3332, %v3528
      %v3647 = vadd.f32 %v3333, %v3531
      %v3648 = vadd.f32 %v3334, %v3536
      %v3649 = vadd.f32 %v3335, %v3539
      %v3650 = vadd.f32 %v3336, %v3544
      %v3651 = vadd.f32 %v3337, %v3547
      %v3652 = vadd.f32 %v3338, %v3552
      %v3653 = vadd.f32 %v3339, %v3555
      %v3654 = vadd.f32 %v3340, %v3560
      %v3655 = vadd.f32 %v3341, %v3563
      %v3656 = vadd.f32 %v3342, %v3568
      %v3657 = vadd.f32 %v3343, %v3571
      %v3658 = vadd.f32 %v3344, %v3576
      %v3659 = vadd.f32 %v3345, %v3579
      %v3660 = vadd.f32 %v3346, %v3584
      %v3661 = vadd.f32 %v3347, %v3587
      %v3662 = vadd.f32 %v3348, %v3592
      %v3663 = vadd.f32 %v3349, %v3595
      %v3664 = vadd.f32 %v3350, %v3600
      %v3665 = vadd.f32 %v3351, %v3603
      %v3666 = vadd.f32 %v3352, %v3608
      %v3667 = vadd.f32 %v3353, %v3611
      %v3668 = vadd.f32 %v3354, %v3616
      %v3669 = vadd.f32 %v3355, %v3619
      %v3670 = vadd.f32 %v3356, %v3624
      %v3671 = vadd.f32 %v3357, %v3627
      %v3672 = vadd.f32 %v3358, %v3632
      %v3673 = vadd.f32 %v3359, %v3635
      %v3674 = vld [vmem:[%s213] sm:$0x1]
      %v3676 = vlaneseq
      %v3677 = vshrl.u32 %v3676, 7
      %v3678 = vsub.s32 0, %v3677
      %v3679 = vrot.slane %v3674, %v3678
      %v3681 = vadd.f32 %v3638, %v3679
      %v3682 = vadd.f32 %v3639, %v3679
      %v3683 = vadd.f32 %v3640, %v3679
      %v3684 = vadd.f32 %v3641, %v3679
      %v3685 = vadd.f32 %v3642, %v3679
      %v3686 = vadd.f32 %v3643, %v3679
      %v3687 = vadd.f32 %v3644, %v3679
      %v3688 = vadd.f32 %v3645, %v3679
      %v3689 = vadd.f32 %v3646, %v3679
      %v3690 = vadd.f32 %v3647, %v3679
      %v3691 = vadd.f32 %v3648, %v3679
      %v3692 = vadd.f32 %v3649, %v3679
      %v3693 = vadd.f32 %v3650, %v3679
      %v3694 = vadd.f32 %v3651, %v3679
      %v3695 = vadd.f32 %v3652, %v3679
      %v3696 = vadd.f32 %v3653, %v3679
      %v3697 = vadd.f32 %v3654, %v3679
      %v3698 = vadd.f32 %v3655, %v3679
      %v3699 = vadd.f32 %v3656, %v3679
      %v3700 = vadd.f32 %v3657, %v3679
      %v3701 = vadd.f32 %v3658, %v3679
      %v3702 = vadd.f32 %v3659, %v3679
      %v3703 = vadd.f32 %v3660, %v3679
      %v3704 = vadd.f32 %v3661, %v3679
      %v3705 = vadd.f32 %v3662, %v3679
      %v3706 = vadd.f32 %v3663, %v3679
      %v3707 = vadd.f32 %v3664, %v3679
      %v3708 = vadd.f32 %v3665, %v3679
      %v3709 = vadd.f32 %v3666, %v3679
      %v3710 = vadd.f32 %v3667, %v3679
      %v3711 = vadd.f32 %v3668, %v3679
      %v3712 = vadd.f32 %v3669, %v3679
      %v3713 = vadd.f32 %v3670, %v3679
      %v3714 = vadd.f32 %v3671, %v3679
      %v3715 = vadd.f32 %v3672, %v3679
      %v3716 = vadd.f32 %v3673, %v3679
      %v3717 = vpack.c.bf16 %v3682, %v3681
      %v3718 = vpack.c.bf16 %v3684, %v3683
      %v3719 = vpack.c.bf16 %v3686, %v3685
      %v3720 = vpack.c.bf16 %v3688, %v3687
      %v3721 = vpack.c.bf16 %v3690, %v3689
      %v3722 = vpack.c.bf16 %v3692, %v3691
      %v3723 = vpack.c.bf16 %v3694, %v3693
      %v3724 = vpack.c.bf16 %v3696, %v3695
      %v3725 = vpack.c.bf16 %v3698, %v3697
      %v3726 = vpack.c.bf16 %v3700, %v3699
      %v3727 = vpack.c.bf16 %v3702, %v3701
      %v3728 = vpack.c.bf16 %v3704, %v3703
      %v3729 = vpack.c.bf16 %v3706, %v3705
      %v3730 = vpack.c.bf16 %v3708, %v3707
      %v3731 = vpack.c.bf16 %v3710, %v3709
      %v3732 = vpack.c.bf16 %v3712, %v3711
      %v3733 = vpack.c.bf16 %v3714, %v3713
      %v3734 = vpack.c.bf16 %v3716, %v3715
      %v3753 = vunpack.c.l.b16 %v3717
      %v3754 = vunpack.c.h.b16 %v3717
      %v3755 = vunpack.c.l.b16 %v3718
      %v3756 = vunpack.c.h.b16 %v3718
      %v3757 = vunpack.c.l.b16 %v3719
      %v3758 = vunpack.c.h.b16 %v3719
      %v3759 = vunpack.c.l.b16 %v3720
      %v3760 = vunpack.c.h.b16 %v3720
      %v3761 = vunpack.c.l.b16 %v3721
      %v3762 = vunpack.c.h.b16 %v3721
      %v3763 = vunpack.c.l.b16 %v3722
      %v3764 = vunpack.c.h.b16 %v3722
      %v3765 = vunpack.c.l.b16 %v3723
      %v3766 = vunpack.c.h.b16 %v3723
      %v3767 = vunpack.c.l.b16 %v3724
      %v3768 = vunpack.c.h.b16 %v3724
      %v3769 = vunpack.c.l.b16 %v3725
      %v3770 = vunpack.c.h.b16 %v3725
      %v3771 = vunpack.c.l.b16 %v3726
      %v3772 = vunpack.c.h.b16 %v3726
      %v3773 = vunpack.c.l.b16 %v3727
      %v3774 = vunpack.c.h.b16 %v3727
      %v3775 = vunpack.c.l.b16 %v3728
      %v3776 = vunpack.c.h.b16 %v3728
      %v3777 = vunpack.c.l.b16 %v3729
      %v3778 = vunpack.c.h.b16 %v3729
      %v3779 = vunpack.c.l.b16 %v3730
      %v3780 = vunpack.c.h.b16 %v3730
      %v3781 = vunpack.c.l.b16 %v3731
      %v3782 = vunpack.c.h.b16 %v3731
      %v3783 = vunpack.c.l.b16 %v3732
      %v3784 = vunpack.c.h.b16 %v3732
      %v3785 = vunpack.c.l.b16 %v3733
      %v3786 = vunpack.c.h.b16 %v3733
      %v3787 = vunpack.c.l.b16 %v3734
      %v3788 = vunpack.c.h.b16 %v3734
      %v3789 = vpack.c.b16 %v3753, %v3753
      %v3790 = vpack.c.b16 %v3754, %v3754
      %v3791 = vpack.c.b16 %v3755, %v3755
      %v3792 = vpack.c.b16 %v3756, %v3756
      %v3793 = vpack.c.b16 %v3757, %v3757
      %v3794 = vpack.c.b16 %v3758, %v3758
      %v3795 = vpack.c.b16 %v3759, %v3759
      %v3796 = vpack.c.b16 %v3760, %v3760
      %v3797 = vpack.c.b16 %v3761, %v3761
      %v3798 = vpack.c.b16 %v3762, %v3762
      %v3799 = vpack.c.b16 %v3763, %v3763
      %v3800 = vpack.c.b16 %v3764, %v3764
      %v3801 = vpack.c.b16 %v3765, %v3765
      %v3802 = vpack.c.b16 %v3766, %v3766
      %v3803 = vpack.c.b16 %v3767, %v3767
      %v3804 = vpack.c.b16 %v3768, %v3768
      %v3805 = vpack.c.b16 %v3769, %v3769
      %v3806 = vpack.c.b16 %v3770, %v3770
      %v3807 = vpack.c.b16 %v3771, %v3771
      %v3808 = vpack.c.b16 %v3772, %v3772
      %v3809 = vpack.c.b16 %v3773, %v3773
      %v3810 = vpack.c.b16 %v3774, %v3774
      %v3811 = vpack.c.b16 %v3775, %v3775
      %v3812 = vpack.c.b16 %v3776, %v3776
      %v3813 = vpack.c.b16 %v3777, %v3777
      %v3814 = vpack.c.b16 %v3778, %v3778
      %v3815 = vpack.c.b16 %v3779, %v3779
      %v3816 = vpack.c.b16 %v3780, %v3780
      %v3817 = vpack.c.b16 %v3781, %v3781
      %v3818 = vpack.c.b16 %v3782, %v3782
      %v3819 = vpack.c.b16 %v3783, %v3783
      %v3820 = vpack.c.b16 %v3784, %v3784
      %v3821 = vpack.c.b16 %v3785, %v3785
      %v3822 = vpack.c.b16 %v3786, %v3786
      %v3823 = vpack.c.b16 %v3787, %v3787
      %v3824 = vpack.c.b16 %v3788, %v3788
      %3861 = vst [vmem:[%s221] sm:$0xf] %v3789
      %3862 = vst [vmem:[%s221 + $0x4] sm:$0xf] %v3790
      %3863 = vst [vmem:[%s221 + $0x8] sm:$0xf] %v3791
      %3864 = vst [vmem:[%s221 + $0xc] sm:$0xf] %v3792
      %3865 = vst [vmem:[%s221 + $0x10] sm:$0xf] %v3793
      %3866 = vst [vmem:[%s221 + $0x14] sm:$0xf] %v3794
      %3867 = vst [vmem:[%s221 + $0x18] sm:$0xf] %v3795
      %3868 = vst [vmem:[%s221 + $0x1c] sm:$0xf] %v3796
      %3869 = vst [vmem:[%s221 + $0x20] sm:$0xf] %v3797
      %3870 = vst [vmem:[%s221 + $0x24] sm:$0xf] %v3798
      %3871 = vst [vmem:[%s221 + $0x28] sm:$0xf] %v3799
      %3872 = vst [vmem:[%s221 + $0x2c] sm:$0xf] %v3800
      %3873 = vst [vmem:[%s221 + $0x30] sm:$0xf] %v3801
      %3874 = vst [vmem:[%s221 + $0x34] sm:$0xf] %v3802
      %3875 = vst [vmem:[%s221 + $0x38] sm:$0xf] %v3803
      %3876 = vst [vmem:[%s221 + $0x3c] sm:$0xf] %v3804
      %3877 = vst [vmem:[%s221 + $0x40] sm:$0xf] %v3805
      %3878 = vst [vmem:[%s221 + $0x44] sm:$0xf] %v3806
      %3879 = vst [vmem:[%s221 + $0x48] sm:$0xf] %v3807
      %3880 = vst [vmem:[%s221 + $0x4c] sm:$0xf] %v3808
      %3881 = vst [vmem:[%s221 + $0x50] sm:$0xf] %v3809
      %3882 = vst [vmem:[%s221 + $0x54] sm:$0xf] %v3810
      %3883 = vst [vmem:[%s221 + $0x58] sm:$0xf] %v3811
      %3884 = vst [vmem:[%s221 + $0x5c] sm:$0xf] %v3812
      %3885 = vst [vmem:[%s221 + $0x60] sm:$0xf] %v3813
      %3886 = vst [vmem:[%s221 + $0x64] sm:$0xf] %v3814
      %3887 = vst [vmem:[%s221 + $0x68] sm:$0xf] %v3815
      %3888 = vst [vmem:[%s221 + $0x6c] sm:$0xf] %v3816
      %3889 = vst [vmem:[%s221 + $0x70] sm:$0xf] %v3817
      %3890 = vst [vmem:[%s221 + $0x74] sm:$0xf] %v3818
      %3891 = vst [vmem:[%s221 + $0x78] sm:$0xf] %v3819
      %3892 = vst [vmem:[%s221 + $0x7c] sm:$0xf] %v3820
      %3893 = vst [vmem:[%s221 + $0x80] sm:$0xf] %v3821
      %3894 = vst [vmem:[%s221 + $0x84] sm:$0xf] %v3822
      %3895 = vst [vmem:[%s221 + $0x88] sm:$0xf] %v3823
      %3896 = vst [vmem:[%s221 + $0x8c] sm:$0xf] %v3824
      %p3897 = scmp.lt.s32.totalorder %s18, 1
      %s3898 = scalar_select %p3897, %s18, 1
      %p3899 = scmp.lt.s32.totalorder %s19, 0
      %s3900 = scalar_select %p3899, %s19, 0
      %s3901 = smul.addr %s3898, 36
      %s3902 = sadd.s32 %s3900, %s3901
      %s3903 = smul.addr %s3902, 4
      %s3904 = scalar_lea.vmem %s3, %s3903
      // Predicated region
      $region33: #{_conv3x3_call.1} parent=31 // pred_check
        %p3905 = pneg %p124
      $region34: #{_conv3x3_call.1} parent=31 // pred_check_branch
        %3907 = sbr.rel (%p3905) target = $region36
      $region35: #{_conv3x3_call.1} parent=31 // pred_region
        _
      $region36: #{_conv3x3_call.1} parent=31 // pred_fallthru
        _
    $region32: #{_conv3x3_call.1} parent=5 // pred_fallthru
      _
    %p3908 = scmp.le.s32.totalorder 2, %s9
    // Predicated region
    $region37: #{_conv3x3_call.1} parent=5 // pred_check
      %p3909 = pneg %p3908
    $region38: #{_conv3x3_call.1} parent=5 // pred_check_branch
      %3911 = sbr.rel (%p3909) target = $region40
    $region39: #{_conv3x3_call.1} parent=5 // pred_region
      %s3912 = ssub.s32 %s9, 2
      // Predicated region
      $region41: #{_conv3x3_call.1} parent=39 // pred_check
        %p3913 = pneg %p130
      $region42: #{_conv3x3_call.1} parent=39 // pred_check_branch
        %3915 = sbr.rel (%p3913) target = $region44
      $region43: #{_conv3x3_call.1} parent=39 // pred_region
        %p3916 = scmp.lt.s32.totalorder %s20, 1
        %s3917 = scalar_select %p3916, %s20, 1
        %p3918 = scmp.lt.s32.totalorder %s21, 0
        %s3919 = scalar_select %p3918, %s21, 0
        %s3920 = smul.addr %s3917, 36
        %s3921 = sadd.s32 %s3919, %s3920
        %s3922 = smul.addr %s3921, 4
        %s3923 = scalar_lea.vmem %s3, %s3922
      $region44: #{_conv3x3_call.1} parent=39 // pred_fallthru
        _
    $region40: #{_conv3x3_call.1} parent=5 // pred_fallthru
      _
  $region6: #{_conv3x3_call.1} parent=0 // loop_footer
    %s13 = sadd.s32 1, %s9
  $region7: #{_conv3x3_call.1} parent=0 // loop_footer_branch
    %8 = sbr.rel target = $region3
  $region8: #{_conv3x3_call.1} parent=0 // loop_exit
    _

</llo_original>
